<compile_context>
chip_gen: v7x
topology: tpu7x:2x2x1
jax: 0.10.0
libtpu: 0.0.40
codegen_flags: <defaults>
</compile_context>

<pallas_src>
import functools

import jax
import jax.numpy as jnp
from jax.experimental import pallas as pl
from jax.experimental.pallas import tpu as pltpu

_VMEM_LIMIT = 48 * 1024 * 1024  # conservative w.r.t. v7x's 64 MiB physical VMEM


def _round_up(x, m):
    return (x + m - 1) // m * m


# ---------------------------------------------------------------------------
# Host-side parameter preparation
# ---------------------------------------------------------------------------
def _fold_bn(p, eps=1e-5):
    """Fold inference BatchNorm into the conv weight / bias."""
    scale = p["gamma"] / jnp.sqrt(p["var"] + eps)
    w = p["w"] * scale[:, None, None, None, None]
    b = (p["b"] - p["mean"]) * scale + p["beta"]
    return w, b


def _pack_taps(w):
    """(O, I, 3, 3, 3) -> (O, 27*I); column = ((kd*3 + kh)*3 + kw)*I + i."""
    o, i = w.shape[0], w.shape[1]
    return jnp.transpose(w, (0, 2, 3, 4, 1)).reshape(o, 27 * i)


def _make_masks(d, h, w):
    """(27, S) f32 boundary masks: mask[t, s]=1 iff tap t of output voxel s is in-bounds."""
    dz, hy, wx = jnp.meshgrid(jnp.arange(d), jnp.arange(h), jnp.arange(w), indexing="ij")
    rows = []
    for kd in (-1, 0, 1):
        for kh in (-1, 0, 1):
            for kw in (-1, 0, 1):
                m = ((dz + kd >= 0) & (dz + kd < d) &
                     (hy + kh >= 0) & (hy + kh < h) &
                     (wx + kw >= 0) & (wx + kw < w))
                rows.append(m.reshape(-1))
    return jnp.stack(rows).astype(jnp.float32)


def _tap_offsets(h, w):
    """Flat (unpadded) lane offsets of the 27 taps, same ordering as _make_masks."""
    return tuple(kd * h * w + kh * w + kw
                 for kd in (-1, 0, 1) for kh in (-1, 0, 1) for kw in (-1, 0, 1))


# ---------------------------------------------------------------------------
# Fused kernel: conv1x1x1+BN+ReLU -> conv3x3x3+BN+ReLU -> conv3x3x3+BN+ReLU
# ---------------------------------------------------------------------------
def _fused_kernel(masks_ref, x_ref, w1_ref, b1_ref, w2_ref, b2_ref, w3_ref, b3_ref,
                  o_ref, buf1, buf2, colbuf, *, s, margin, offs):
    # masks_ref: (27, S)            boundary masks (shared by layers 2 and 3)
    # x_ref:     (1, C_in, S)       unpadded flattened input volume for one batch element
    # w1_ref:    (C, C_in)          b*_ref: (C, 1)
    # w2_ref/w3_ref: (C, 27*C)      packed 3x3x3 weights
    # o_ref:     (1, C, S)          buf1/buf2: (C, S + 2*margin) f32   colbuf: (27*C, S) f32
    c = buf1.shape[0]

    # Zero the halo margins of the activation buffers (margins absorb the shifted reads;
    # boundary masks below guarantee they never contribute to valid outputs).
    zeros_m = jnp.zeros((c, margin), jnp.float32)
    buf1[:, 0:margin] = zeros_m
    buf1[:, margin + s:2 * margin + s] = zeros_m
    buf2[:, 0:margin] = zeros_m
    buf2[:, margin + s:2 * margin + s] = zeros_m

    # ---- layer 1: 1x1x1 conv (+ folded BN) + ReLU --------------------------------
    y1 = jnp.dot(w1_ref[...], x_ref[0], preferred_element_type=jnp.float32)
    y1 = jnp.maximum(y1 + b1_ref[...], 0.0)
    buf1[:, margin:margin + s] = y1

    # ---- 3x3x3 conv via im2col-in-VMEM + single K=27*C MXU matmul ------------------
    def conv3(src_ref, wp, bias):
        for t, off in enumerate(offs):
            start = margin + off                       # static slice start
            sl = src_ref[:, start:start + s]           # (C, S) shifted view of the volume
            colbuf[t * c:(t + 1) * c, :] = sl * masks_ref[t:t + 1]
        y = jnp.dot(wp, colbuf[...], preferred_element_type=jnp.float32)
        return jnp.maximum(y + bias, 0.0)

    # ---- layer 2 -------------------------------------------------------------------
    buf2[:, margin:margin + s] = conv3(buf1, w2_ref[...], b2_ref[...])

    # ---- layer 3 -------------------------------------------------------------------
    o_ref[0] = conv3(buf2, w3_ref[...], b3_ref[...]).astype(o_ref.dtype)


def reduction3d_pallas(x, l1, l2, l3):
    """x: (B, C_in, D, H, W).  l1/l2/l3: dicts of conv+BN params (see make_layer)."""
    b, c_in, d, h, w = x.shape
    s = d * h * w

    w1, b1 = _fold_bn(l1)
    w2, b2 = _fold_bn(l2)
    w3, b3 = _fold_bn(l3)
    c_out = w1.shape[0]

    w1m = w1[:, :, 0, 0, 0]                  # (C_out, C_in)
    w2p = _pack_taps(w2)                     # (C_out, 27*C_out)
    w3p = _pack_taps(w3)
    masks = _make_masks(d, h, w)             # (27, S)

    margin = _round_up(h * w + w + 1, 128)   # covers max |tap offset|, lane-aligned
    p_buf = s + 2 * margin
    offs = _tap_offsets(h, w)

    xf = x.reshape(b, c_in, s)
    kern = functools.partial(_fused_kernel, s=s, margin=margin, offs=offs)

    out = pl.pallas_call(
        kern,
        out_shape=jax.ShapeDtypeStruct((b, c_out, s), x.dtype),
        grid=(b,),
        in_specs=[
            pl.BlockSpec((27, s), lambda i: (0, 0)),
            pl.BlockSpec((1, c_in, s), lambda i: (i, 0, 0)),
            pl.BlockSpec((c_out, c_in), lambda i: (0, 0)),
            pl.BlockSpec((c_out, 1), lambda i: (0, 0)),
            pl.BlockSpec((c_out, 27 * c_out), lambda i: (0, 0)),
            pl.BlockSpec((c_out, 1), lambda i: (0, 0)),
            pl.BlockSpec((c_out, 27 * c_out), lambda i: (0, 0)),
            pl.BlockSpec((c_out, 1), lambda i: (0, 0)),
        ],
        out_specs=pl.BlockSpec((1, c_out, s), lambda i: (i, 0, 0)),
        scratch_shapes=[
            pltpu.VMEM((c_out, p_buf), jnp.float32),       # layer-1 output (+ margins)
            pltpu.VMEM((c_out, p_buf), jnp.float32),       # layer-2 output (+ margins)
            pltpu.VMEM((27 * c_out, s), jnp.float32),      # im2col buffer (K = 27*C_out)
        ],
        compiler_params=pltpu.CompilerParams(
            dimension_semantics=("parallel",),
            vmem_limit_bytes=_VMEM_LIMIT,
        ),
    )(masks, xf, w1m, b1.reshape(c_out, 1), w2p, b2.reshape(c_out, 1),
      w3p, b3.reshape(c_out, 1))
    return out.reshape(b, c_out, d, h, w)


@jax.jit
def reduction3d_forward(x, l1, l2, l3):
    return reduction3d_pallas(x, l1, l2, l3)


# ---------------------------------------------------------------------------
# Pure-JAX reference
# ---------------------------------------------------------------------------
def reduction3d_reference(x, l1, l2, l3, eps=1e-5):
    def conv_bn_relu(x, p, pad):
        y = jax.lax.conv_general_dilated(
            x, p["w"], window_strides=(1, 1, 1), padding=pad,
            dimension_numbers=("NCDHW", "OIDHW", "NCDHW"),
            precision=jax.lax.Precision.HIGHEST)
        y = y + p["b"][None, :, None, None, None]
        scale = (p["gamma"] / jnp.sqrt(p["var"] + eps))[None, :, None, None, None]
        y = (y - p["mean"][None, :, None, None, None]) * scale \
            + p["beta"][None, :, None, None, None]
        return jnp.maximum(y, 0.0)

    y = conv_bn_relu(x, l1, [(0, 0)] * 3)
    y = conv_bn_relu(y, l2, [(1, 1)] * 3)
    y = conv_bn_relu(y, l3, [(1, 1)] * 3)
    return y


if __name__ == "__main__":
    key = jax.random.PRNGKey(0)
    keys = jax.random.split(key, 4)

    B, C_IN, C_OUT = 2, 4, 8
    D = H = W = 8

    x = jax.random.normal(keys[0], (B, C_IN, D, H, W), dtype=jnp.float32)

    def make_layer(k, ci, co, ksz):
        kw_, kb, kg, kbe, km, kv = jax.random.split(k, 6)
        fan_in = ci * ksz ** 3
        return dict(
            w=jax.random.normal(kw_, (co, ci, ksz, ksz, ksz), jnp.float32) / jnp.sqrt(fan_in),
            b=jax.random.normal(kb, (co,), jnp.float32) * 0.1,
            gamma=jax.random.uniform(kg, (co,), jnp.float32, 0.5, 1.5),
            beta=jax.random.normal(kbe, (co,), jnp.float32) * 0.1,
            mean=jax.random.normal(km, (co,), jnp.float32) * 0.1,
            var=jax.random.uniform(kv, (co,), jnp.float32, 0.5, 1.5),
        )

    l1 = make_layer(keys[1], C_IN, C_OUT, 1)
    l2 = make_layer(keys[2], C_OUT, C_OUT, 3)
    l3 = make_layer(keys[3], C_OUT, C_OUT, 3)

    out = reduction3d_forward(x, l1, l2, l3)
    out = jax.block_until_ready(out)

    ref = reduction3d_reference(x, l1, l2, l3)
    assert out.shape == ref.shape == (B, C_OUT, D, H, W)
    max_err = float(jnp.max(jnp.abs(out - ref)))
    assert jnp.allclose(out, ref, atol=2e-3, rtol=2e-3), f"mismatch vs reference, max_err={max_err}"

    print("KERNEL_OK")
</pallas_src>

<mosaic_0001>
module attributes {stable_mosaic.version = 11 : i64} {
  func.func @_fused_kernel(%arg0: i32, %arg1: memref<27x512xf32, #tpu.memory_space<vmem>>, %arg2: memref<1x4x512xf32, #tpu.memory_space<vmem>>, %arg3: memref<8x4xf32, #tpu.memory_space<vmem>>, %arg4: memref<8x1xf32, #tpu.memory_space<vmem>>, %arg5: memref<8x216xf32, #tpu.memory_space<vmem>>, %arg6: memref<8x1xf32, #tpu.memory_space<vmem>>, %arg7: memref<8x216xf32, #tpu.memory_space<vmem>>, %arg8: memref<8x1xf32, #tpu.memory_space<vmem>>, %arg9: memref<1x8x512xf32, #tpu.memory_space<vmem>>, %arg10: memref<8x768xf32, #tpu.memory_space<vmem>>, %arg11: memref<8x768xf32, #tpu.memory_space<vmem>>, %arg12: memref<216x512xf32, #tpu.memory_space<vmem>>) attributes {dimension_semantics = [#tpu.dimension_semantics<parallel>], iteration_bounds = array<i64: 2>, scalar_prefetch = 0 : i64, scratch_operands = 3 : i64, tpu.core_type = #tpu.core_type<tc>, window_params = [{pipeline_mode = #tpu.pipeline_mode<synchronous>, transform_indices = @transform_0, window_bounds = array<i64: 27, 512>}, {transform_indices = @transform_1, window_bounds = array<i64: 1, 4, 512>}, {pipeline_mode = #tpu.pipeline_mode<synchronous>, transform_indices = @transform_2, window_bounds = array<i64: 8, 4>}, {pipeline_mode = #tpu.pipeline_mode<synchronous>, transform_indices = @transform_3, window_bounds = array<i64: 8, 1>}, {pipeline_mode = #tpu.pipeline_mode<synchronous>, transform_indices = @transform_4, window_bounds = array<i64: 8, 216>}, {pipeline_mode = #tpu.pipeline_mode<synchronous>, transform_indices = @transform_5, window_bounds = array<i64: 8, 1>}, {pipeline_mode = #tpu.pipeline_mode<synchronous>, transform_indices = @transform_6, window_bounds = array<i64: 8, 216>}, {pipeline_mode = #tpu.pipeline_mode<synchronous>, transform_indices = @transform_7, window_bounds = array<i64: 8, 1>}, {transform_indices = @transform_8, window_bounds = array<i64: 1, 8, 512>}]} {
    %cst = arith.constant 0.000000e+00 : f32
    %0 = vector.broadcast %cst : f32 to vector<8x128xf32>
    %c0 = arith.constant 0 : index
    %c0_0 = arith.constant 0 : index
    %1 = vector.load %arg10[%c0, %c0_0] : memref<8x768xf32, #tpu.memory_space<vmem>>, vector<8x128xf32>
    tpu.vector_store %arg10[%c0, %c0_0], %0 {strides = array<i32>} : memref<8x768xf32, #tpu.memory_space<vmem>>, vector<8x128xf32>,
    %c0_1 = arith.constant 0 : index
    %c640 = arith.constant 640 : index
    %2 = vector.load %arg10[%c0_1, %c640] : memref<8x768xf32, #tpu.memory_space<vmem>>, vector<8x128xf32>
    tpu.vector_store %arg10[%c0_1, %c640], %0 {strides = array<i32>} : memref<8x768xf32, #tpu.memory_space<vmem>>, vector<8x128xf32>,
    %c0_2 = arith.constant 0 : index
    %c0_3 = arith.constant 0 : index
    %3 = vector.load %arg11[%c0_2, %c0_3] : memref<8x768xf32, #tpu.memory_space<vmem>>, vector<8x128xf32>
    tpu.vector_store %arg11[%c0_2, %c0_3], %0 {strides = array<i32>} : memref<8x768xf32, #tpu.memory_space<vmem>>, vector<8x128xf32>,
    %c0_4 = arith.constant 0 : index
    %c640_5 = arith.constant 640 : index
    %4 = vector.load %arg11[%c0_4, %c640_5] : memref<8x768xf32, #tpu.memory_space<vmem>>, vector<8x128xf32>
    tpu.vector_store %arg11[%c0_4, %c640_5], %0 {strides = array<i32>} : memref<8x768xf32, #tpu.memory_space<vmem>>, vector<8x128xf32>,
    %c0_6 = arith.constant 0 : index
    %c0_7 = arith.constant 0 : index
    %5 = vector.load %arg3[%c0_6, %c0_7] : memref<8x4xf32, #tpu.memory_space<vmem>>, vector<8x4xf32>
    %c0_8 = arith.constant 0 : index
    %c0_9 = arith.constant 0 : index
    %c0_10 = arith.constant 0 : index
    %6 = vector.load %arg2[%c0_8, %c0_9, %c0_10] : memref<1x4x512xf32, #tpu.memory_space<vmem>>, vector<1x4x512xf32>
    %7 = vector.shape_cast %6 : vector<1x4x512xf32> to vector<4x512xf32>
    %cst_11 = arith.constant dense<0.000000e+00> : vector<8x512xf32>
    %8 = tpu.matmul %5, %7, %cst_11 {dimension_numbers = #tpu.dot_dimension_numbers<[1], [0], [0], [1], [0, 0, 1, 1], [], []>} : vector<8x4xf32>, vector<4x512xf32>, vector<8x512xf32> -> vector<8x512xf32>
    %c0_12 = arith.constant 0 : index
    %c0_13 = arith.constant 0 : index
    %9 = vector.load %arg4[%c0_12, %c0_13] : memref<8x1xf32, #tpu.memory_space<vmem>>, vector<8x1xf32>
    %10 = vector.broadcast %9 : vector<8x1xf32> to vector<8x512xf32>
    %11 = arith.addf %8, %10 : vector<8x512xf32>
    %cst_14 = arith.constant 0.000000e+00 : f32
    %12 = vector.broadcast %cst_14 : f32 to vector<8x512xf32>
    %13 = arith.maximumf %11, %12 : vector<8x512xf32>
    %c0_15 = arith.constant 0 : index
    %c128 = arith.constant 128 : index
    %14 = vector.load %arg10[%c0_15, %c128] : memref<8x768xf32, #tpu.memory_space<vmem>>, vector<8x512xf32>
    tpu.vector_store %arg10[%c0_15, %c128], %13 {strides = array<i32>} : memref<8x768xf32, #tpu.memory_space<vmem>>, vector<8x512xf32>,
    %c0_16 = arith.constant 0 : index
    %c0_17 = arith.constant 0 : index
    %15 = vector.load %arg5[%c0_16, %c0_17] : memref<8x216xf32, #tpu.memory_space<vmem>>, vector<8x216xf32>
    %c0_18 = arith.constant 0 : index
    %c0_19 = arith.constant 0 : index
    %16 = vector.load %arg6[%c0_18, %c0_19] : memref<8x1xf32, #tpu.memory_space<vmem>>, vector<8x1xf32>
    %c0_20 = arith.constant 0 : index
    %c55 = arith.constant 55 : index
    %17 = vector.load %arg10[%c0_20, %c55] : memref<8x768xf32, #tpu.memory_space<vmem>>, vector<8x512xf32>
    %c0_21 = arith.constant 0 : index
    %c0_22 = arith.constant 0 : index
    %18 = vector.load %arg1[%c0_21, %c0_22] : memref<27x512xf32, #tpu.memory_space<vmem>>, vector<1x512xf32>
    %19 = vector.broadcast %18 : vector<1x512xf32> to vector<8x512xf32>
    %20 = arith.mulf %17, %19 : vector<8x512xf32>
    %c0_23 = arith.constant 0 : index
    %c0_24 = arith.constant 0 : index
    %21 = vector.load %arg12[%c0_23, %c0_24] : memref<216x512xf32, #tpu.memory_space<vmem>>, vector<8x512xf32>
    tpu.vector_store %arg12[%c0_23, %c0_24], %20 {strides = array<i32>} : memref<216x512xf32, #tpu.memory_space<vmem>>, vector<8x512xf32>,
    %c0_25 = arith.constant 0 : index
    %c56 = arith.constant 56 : index
    %22 = vector.load %arg10[%c0_25, %c56] : memref<8x768xf32, #tpu.memory_space<vmem>>, vector<8x512xf32>
    %c1 = arith.constant 1 : index
    %c0_26 = arith.constant 0 : index
    %23 = vector.load %arg1[%c1, %c0_26] : memref<27x512xf32, #tpu.memory_space<vmem>>, vector<1x512xf32>
    %24 = vector.broadcast %23 : vector<1x512xf32> to vector<8x512xf32>
    %25 = arith.mulf %22, %24 : vector<8x512xf32>
    %c8 = arith.constant 8 : index
    %c0_27 = arith.constant 0 : index
    %26 = vector.load %arg12[%c8, %c0_27] : memref<216x512xf32, #tpu.memory_space<vmem>>, vector<8x512xf32>
    tpu.vector_store %arg12[%c8, %c0_27], %25 {strides = array<i32>} : memref<216x512xf32, #tpu.memory_space<vmem>>, vector<8x512xf32>,
    %c0_28 = arith.constant 0 : index
    %c57 = arith.constant 57 : index
    %27 = vector.load %arg10[%c0_28, %c57] : memref<8x768xf32, #tpu.memory_space<vmem>>, vector<8x512xf32>
    %c2 = arith.constant 2 : index
    %c0_29 = arith.constant 0 : index
    %28 = vector.load %arg1[%c2, %c0_29] : memref<27x512xf32, #tpu.memory_space<vmem>>, vector<1x512xf32>
    %29 = vector.broadcast %28 : vector<1x512xf32> to vector<8x512xf32>
    %30 = arith.mulf %27, %29 : vector<8x512xf32>
    %c16 = arith.constant 16 : index
    %c0_30 = arith.constant 0 : index
    %31 = vector.load %arg12[%c16, %c0_30] : memref<216x512xf32, #tpu.memory_space<vmem>>, vector<8x512xf32>
    tpu.vector_store %arg12[%c16, %c0_30], %30 {strides = array<i32>} : memref<216x512xf32, #tpu.memory_space<vmem>>, vector<8x512xf32>,
    %c0_31 = arith.constant 0 : index
    %c63 = arith.constant 63 : index
    %32 = vector.load %arg10[%c0_31, %c63] : memref<8x768xf32, #tpu.memory_space<vmem>>, vector<8x512xf32>
    %c3 = arith.constant 3 : index
    %c0_32 = arith.constant 0 : index
    %33 = vector.load %arg1[%c3, %c0_32] : memref<27x512xf32, #tpu.memory_space<vmem>>, vector<1x512xf32>
    %34 = vector.broadcast %33 : vector<1x512xf32> to vector<8x512xf32>
    %35 = arith.mulf %32, %34 : vector<8x512xf32>
    %c24 = arith.constant 24 : index
    %c0_33 = arith.constant 0 : index
    %36 = vector.load %arg12[%c24, %c0_33] : memref<216x512xf32, #tpu.memory_space<vmem>>, vector<8x512xf32>
    tpu.vector_store %arg12[%c24, %c0_33], %35 {strides = array<i32>} : memref<216x512xf32, #tpu.memory_space<vmem>>, vector<8x512xf32>,
    %c0_34 = arith.constant 0 : index
    %c64 = arith.constant 64 : index
    %37 = vector.load %arg10[%c0_34, %c64] : memref<8x768xf32, #tpu.memory_space<vmem>>, vector<8x512xf32>
    %c4 = arith.constant 4 : index
    %c0_35 = arith.constant 0 : index
    %38 = vector.load %arg1[%c4, %c0_35] : memref<27x512xf32, #tpu.memory_space<vmem>>, vector<1x512xf32>
    %39 = vector.broadcast %38 : vector<1x512xf32> to vector<8x512xf32>
    %40 = arith.mulf %37, %39 : vector<8x512xf32>
    %c32 = arith.constant 32 : index
    %c0_36 = arith.constant 0 : index
    %41 = vector.load %arg12[%c32, %c0_36] : memref<216x512xf32, #tpu.memory_space<vmem>>, vector<8x512xf32>
    tpu.vector_store %arg12[%c32, %c0_36], %40 {strides = array<i32>} : memref<216x512xf32, #tpu.memory_space<vmem>>, vector<8x512xf32>,
    %c0_37 = arith.constant 0 : index
    %c65 = arith.constant 65 : index
    %42 = vector.load %arg10[%c0_37, %c65] : memref<8x768xf32, #tpu.memory_space<vmem>>, vector<8x512xf32>
    %c5 = arith.constant 5 : index
    %c0_38 = arith.constant 0 : index
    %43 = vector.load %arg1[%c5, %c0_38] : memref<27x512xf32, #tpu.memory_space<vmem>>, vector<1x512xf32>
    %44 = vector.broadcast %43 : vector<1x512xf32> to vector<8x512xf32>
    %45 = arith.mulf %42, %44 : vector<8x512xf32>
    %c40 = arith.constant 40 : index
    %c0_39 = arith.constant 0 : index
    %46 = vector.load %arg12[%c40, %c0_39] : memref<216x512xf32, #tpu.memory_space<vmem>>, vector<8x512xf32>
    tpu.vector_store %arg12[%c40, %c0_39], %45 {strides = array<i32>} : memref<216x512xf32, #tpu.memory_space<vmem>>, vector<8x512xf32>,
    %c0_40 = arith.constant 0 : index
    %c71 = arith.constant 71 : index
    %47 = vector.load %arg10[%c0_40, %c71] : memref<8x768xf32, #tpu.memory_space<vmem>>, vector<8x512xf32>
    %c6 = arith.constant 6 : index
    %c0_41 = arith.constant 0 : index
    %48 = vector.load %arg1[%c6, %c0_41] : memref<27x512xf32, #tpu.memory_space<vmem>>, vector<1x512xf32>
    %49 = vector.broadcast %48 : vector<1x512xf32> to vector<8x512xf32>
    %50 = arith.mulf %47, %49 : vector<8x512xf32>
    %c48 = arith.constant 48 : index
    %c0_42 = arith.constant 0 : index
    %51 = vector.load %arg12[%c48, %c0_42] : memref<216x512xf32, #tpu.memory_space<vmem>>, vector<8x512xf32>
    tpu.vector_store %arg12[%c48, %c0_42], %50 {strides = array<i32>} : memref<216x512xf32, #tpu.memory_space<vmem>>, vector<8x512xf32>,
    %c0_43 = arith.constant 0 : index
    %c72 = arith.constant 72 : index
    %52 = vector.load %arg10[%c0_43, %c72] : memref<8x768xf32, #tpu.memory_space<vmem>>, vector<8x512xf32>
    %c7 = arith.constant 7 : index
    %c0_44 = arith.constant 0 : index
    %53 = vector.load %arg1[%c7, %c0_44] : memref<27x512xf32, #tpu.memory_space<vmem>>, vector<1x512xf32>
    %54 = vector.broadcast %53 : vector<1x512xf32> to vector<8x512xf32>
    %55 = arith.mulf %52, %54 : vector<8x512xf32>
    %c56_45 = arith.constant 56 : index
    %c0_46 = arith.constant 0 : index
    %56 = vector.load %arg12[%c56_45, %c0_46] : memref<216x512xf32, #tpu.memory_space<vmem>>, vector<8x512xf32>
    tpu.vector_store %arg12[%c56_45, %c0_46], %55 {strides = array<i32>} : memref<216x512xf32, #tpu.memory_space<vmem>>, vector<8x512xf32>,
    %c0_47 = arith.constant 0 : index
    %c73 = arith.constant 73 : index
    %57 = vector.load %arg10[%c0_47, %c73] : memref<8x768xf32, #tpu.memory_space<vmem>>, vector<8x512xf32>
    %c8_48 = arith.constant 8 : index
    %c0_49 = arith.constant 0 : index
    %58 = vector.load %arg1[%c8_48, %c0_49] : memref<27x512xf32, #tpu.memory_space<vmem>>, vector<1x512xf32>
    %59 = vector.broadcast %58 : vector<1x512xf32> to vector<8x512xf32>
    %60 = arith.mulf %57, %59 : vector<8x512xf32>
    %c64_50 = arith.constant 64 : index
    %c0_51 = arith.constant 0 : index
    %61 = vector.load %arg12[%c64_50, %c0_51] : memref<216x512xf32, #tpu.memory_space<vmem>>, vector<8x512xf32>
    tpu.vector_store %arg12[%c64_50, %c0_51], %60 {strides = array<i32>} : memref<216x512xf32, #tpu.memory_space<vmem>>, vector<8x512xf32>,
    %c0_52 = arith.constant 0 : index
    %c119 = arith.constant 119 : index
    %62 = vector.load %arg10[%c0_52, %c119] : memref<8x768xf32, #tpu.memory_space<vmem>>, vector<8x512xf32>
    %c9 = arith.constant 9 : index
    %c0_53 = arith.constant 0 : index
    %63 = vector.load %arg1[%c9, %c0_53] : memref<27x512xf32, #tpu.memory_space<vmem>>, vector<1x512xf32>
    %64 = vector.broadcast %63 : vector<1x512xf32> to vector<8x512xf32>
    %65 = arith.mulf %62, %64 : vector<8x512xf32>
    %c72_54 = arith.constant 72 : index
    %c0_55 = arith.constant 0 : index
    %66 = vector.load %arg12[%c72_54, %c0_55] : memref<216x512xf32, #tpu.memory_space<vmem>>, vector<8x512xf32>
    tpu.vector_store %arg12[%c72_54, %c0_55], %65 {strides = array<i32>} : memref<216x512xf32, #tpu.memory_space<vmem>>, vector<8x512xf32>,
    %c0_56 = arith.constant 0 : index
    %c120 = arith.constant 120 : index
    %67 = vector.load %arg10[%c0_56, %c120] : memref<8x768xf32, #tpu.memory_space<vmem>>, vector<8x512xf32>
    %c10 = arith.constant 10 : index
    %c0_57 = arith.constant 0 : index
    %68 = vector.load %arg1[%c10, %c0_57] : memref<27x512xf32, #tpu.memory_space<vmem>>, vector<1x512xf32>
    %69 = vector.broadcast %68 : vector<1x512xf32> to vector<8x512xf32>
    %70 = arith.mulf %67, %69 : vector<8x512xf32>
    %c80 = arith.constant 80 : index
    %c0_58 = arith.constant 0 : index
    %71 = vector.load %arg12[%c80, %c0_58] : memref<216x512xf32, #tpu.memory_space<vmem>>, vector<8x512xf32>
    tpu.vector_store %arg12[%c80, %c0_58], %70 {strides = array<i32>} : memref<216x512xf32, #tpu.memory_space<vmem>>, vector<8x512xf32>,
    %c0_59 = arith.constant 0 : index
    %c121 = arith.constant 121 : index
    %72 = vector.load %arg10[%c0_59, %c121] : memref<8x768xf32, #tpu.memory_space<vmem>>, vector<8x512xf32>
    %c11 = arith.constant 11 : index
    %c0_60 = arith.constant 0 : index
    %73 = vector.load %arg1[%c11, %c0_60] : memref<27x512xf32, #tpu.memory_space<vmem>>, vector<1x512xf32>
    %74 = vector.broadcast %73 : vector<1x512xf32> to vector<8x512xf32>
    %75 = arith.mulf %72, %74 : vector<8x512xf32>
    %c88 = arith.constant 88 : index
    %c0_61 = arith.constant 0 : index
    %76 = vector.load %arg12[%c88, %c0_61] : memref<216x512xf32, #tpu.memory_space<vmem>>, vector<8x512xf32>
    tpu.vector_store %arg12[%c88, %c0_61], %75 {strides = array<i32>} : memref<216x512xf32, #tpu.memory_space<vmem>>, vector<8x512xf32>,
    %c0_62 = arith.constant 0 : index
    %c127 = arith.constant 127 : index
    %77 = vector.load %arg10[%c0_62, %c127] : memref<8x768xf32, #tpu.memory_space<vmem>>, vector<8x512xf32>
    %c12 = arith.constant 12 : index
    %c0_63 = arith.constant 0 : index
    %78 = vector.load %arg1[%c12, %c0_63] : memref<27x512xf32, #tpu.memory_space<vmem>>, vector<1x512xf32>
    %79 = vector.broadcast %78 : vector<1x512xf32> to vector<8x512xf32>
    %80 = arith.mulf %77, %79 : vector<8x512xf32>
    %c96 = arith.constant 96 : index
    %c0_64 = arith.constant 0 : index
    %81 = vector.load %arg12[%c96, %c0_64] : memref<216x512xf32, #tpu.memory_space<vmem>>, vector<8x512xf32>
    tpu.vector_store %arg12[%c96, %c0_64], %80 {strides = array<i32>} : memref<216x512xf32, #tpu.memory_space<vmem>>, vector<8x512xf32>,
    %c0_65 = arith.constant 0 : index
    %c128_66 = arith.constant 128 : index
    %82 = vector.load %arg10[%c0_65, %c128_66] : memref<8x768xf32, #tpu.memory_space<vmem>>, vector<8x512xf32>
    %c13 = arith.constant 13 : index
    %c0_67 = arith.constant 0 : index
    %83 = vector.load %arg1[%c13, %c0_67] : memref<27x512xf32, #tpu.memory_space<vmem>>, vector<1x512xf32>
    %84 = vector.broadcast %83 : vector<1x512xf32> to vector<8x512xf32>
    %85 = arith.mulf %82, %84 : vector<8x512xf32>
    %c104 = arith.constant 104 : index
    %c0_68 = arith.constant 0 : index
    %86 = vector.load %arg12[%c104, %c0_68] : memref<216x512xf32, #tpu.memory_space<vmem>>, vector<8x512xf32>
    tpu.vector_store %arg12[%c104, %c0_68], %85 {strides = array<i32>} : memref<216x512xf32, #tpu.memory_space<vmem>>, vector<8x512xf32>,
    %c0_69 = arith.constant 0 : index
    %c129 = arith.constant 129 : index
    %87 = vector.load %arg10[%c0_69, %c129] : memref<8x768xf32, #tpu.memory_space<vmem>>, vector<8x512xf32>
    %c14 = arith.constant 14 : index
    %c0_70 = arith.constant 0 : index
    %88 = vector.load %arg1[%c14, %c0_70] : memref<27x512xf32, #tpu.memory_space<vmem>>, vector<1x512xf32>
    %89 = vector.broadcast %88 : vector<1x512xf32> to vector<8x512xf32>
    %90 = arith.mulf %87, %89 : vector<8x512xf32>
    %c112 = arith.constant 112 : index
    %c0_71 = arith.constant 0 : index
    %91 = vector.load %arg12[%c112, %c0_71] : memref<216x512xf32, #tpu.memory_space<vmem>>, vector<8x512xf32>
    tpu.vector_store %arg12[%c112, %c0_71], %90 {strides = array<i32>} : memref<216x512xf32, #tpu.memory_space<vmem>>, vector<8x512xf32>,
    %c0_72 = arith.constant 0 : index
    %c135 = arith.constant 135 : index
    %92 = vector.load %arg10[%c0_72, %c135] : memref<8x768xf32, #tpu.memory_space<vmem>>, vector<8x512xf32>
    %c15 = arith.constant 15 : index
    %c0_73 = arith.constant 0 : index
    %93 = vector.load %arg1[%c15, %c0_73] : memref<27x512xf32, #tpu.memory_space<vmem>>, vector<1x512xf32>
    %94 = vector.broadcast %93 : vector<1x512xf32> to vector<8x512xf32>
    %95 = arith.mulf %92, %94 : vector<8x512xf32>
    %c120_74 = arith.constant 120 : index
    %c0_75 = arith.constant 0 : index
    %96 = vector.load %arg12[%c120_74, %c0_75] : memref<216x512xf32, #tpu.memory_space<vmem>>, vector<8x512xf32>
    tpu.vector_store %arg12[%c120_74, %c0_75], %95 {strides = array<i32>} : memref<216x512xf32, #tpu.memory_space<vmem>>, vector<8x512xf32>,
    %c0_76 = arith.constant 0 : index
    %c136 = arith.constant 136 : index
    %97 = vector.load %arg10[%c0_76, %c136] : memref<8x768xf32, #tpu.memory_space<vmem>>, vector<8x512xf32>
    %c16_77 = arith.constant 16 : index
    %c0_78 = arith.constant 0 : index
    %98 = vector.load %arg1[%c16_77, %c0_78] : memref<27x512xf32, #tpu.memory_space<vmem>>, vector<1x512xf32>
    %99 = vector.broadcast %98 : vector<1x512xf32> to vector<8x512xf32>
    %100 = arith.mulf %97, %99 : vector<8x512xf32>
    %c128_79 = arith.constant 128 : index
    %c0_80 = arith.constant 0 : index
    %101 = vector.load %arg12[%c128_79, %c0_80] : memref<216x512xf32, #tpu.memory_space<vmem>>, vector<8x512xf32>
    tpu.vector_store %arg12[%c128_79, %c0_80], %100 {strides = array<i32>} : memref<216x512xf32, #tpu.memory_space<vmem>>, vector<8x512xf32>,
    %c0_81 = arith.constant 0 : index
    %c137 = arith.constant 137 : index
    %102 = vector.load %arg10[%c0_81, %c137] : memref<8x768xf32, #tpu.memory_space<vmem>>, vector<8x512xf32>
    %c17 = arith.constant 17 : index
    %c0_82 = arith.constant 0 : index
    %103 = vector.load %arg1[%c17, %c0_82] : memref<27x512xf32, #tpu.memory_space<vmem>>, vector<1x512xf32>
    %104 = vector.broadcast %103 : vector<1x512xf32> to vector<8x512xf32>
    %105 = arith.mulf %102, %104 : vector<8x512xf32>
    %c136_83 = arith.constant 136 : index
    %c0_84 = arith.constant 0 : index
    %106 = vector.load %arg12[%c136_83, %c0_84] : memref<216x512xf32, #tpu.memory_space<vmem>>, vector<8x512xf32>
    tpu.vector_store %arg12[%c136_83, %c0_84], %105 {strides = array<i32>} : memref<216x512xf32, #tpu.memory_space<vmem>>, vector<8x512xf32>,
    %c0_85 = arith.constant 0 : index
    %c183 = arith.constant 183 : index
    %107 = vector.load %arg10[%c0_85, %c183] : memref<8x768xf32, #tpu.memory_space<vmem>>, vector<8x512xf32>
    %c18 = arith.constant 18 : index
    %c0_86 = arith.constant 0 : index
    %108 = vector.load %arg1[%c18, %c0_86] : memref<27x512xf32, #tpu.memory_space<vmem>>, vector<1x512xf32>
    %109 = vector.broadcast %108 : vector<1x512xf32> to vector<8x512xf32>
    %110 = arith.mulf %107, %109 : vector<8x512xf32>
    %c144 = arith.constant 144 : index
    %c0_87 = arith.constant 0 : index
    %111 = vector.load %arg12[%c144, %c0_87] : memref<216x512xf32, #tpu.memory_space<vmem>>, vector<8x512xf32>
    tpu.vector_store %arg12[%c144, %c0_87], %110 {strides = array<i32>} : memref<216x512xf32, #tpu.memory_space<vmem>>, vector<8x512xf32>,
    %c0_88 = arith.constant 0 : index
    %c184 = arith.constant 184 : index
    %112 = vector.load %arg10[%c0_88, %c184] : memref<8x768xf32, #tpu.memory_space<vmem>>, vector<8x512xf32>
    %c19 = arith.constant 19 : index
    %c0_89 = arith.constant 0 : index
    %113 = vector.load %arg1[%c19, %c0_89] : memref<27x512xf32, #tpu.memory_space<vmem>>, vector<1x512xf32>
    %114 = vector.broadcast %113 : vector<1x512xf32> to vector<8x512xf32>
    %115 = arith.mulf %112, %114 : vector<8x512xf32>
    %c152 = arith.constant 152 : index
    %c0_90 = arith.constant 0 : index
    %116 = vector.load %arg12[%c152, %c0_90] : memref<216x512xf32, #tpu.memory_space<vmem>>, vector<8x512xf32>
    tpu.vector_store %arg12[%c152, %c0_90], %115 {strides = array<i32>} : memref<216x512xf32, #tpu.memory_space<vmem>>, vector<8x512xf32>,
    %c0_91 = arith.constant 0 : index
    %c185 = arith.constant 185 : index
    %117 = vector.load %arg10[%c0_91, %c185] : memref<8x768xf32, #tpu.memory_space<vmem>>, vector<8x512xf32>
    %c20 = arith.constant 20 : index
    %c0_92 = arith.constant 0 : index
    %118 = vector.load %arg1[%c20, %c0_92] : memref<27x512xf32, #tpu.memory_space<vmem>>, vector<1x512xf32>
    %119 = vector.broadcast %118 : vector<1x512xf32> to vector<8x512xf32>
    %120 = arith.mulf %117, %119 : vector<8x512xf32>
    %c160 = arith.constant 160 : index
    %c0_93 = arith.constant 0 : index
    %121 = vector.load %arg12[%c160, %c0_93] : memref<216x512xf32, #tpu.memory_space<vmem>>, vector<8x512xf32>
    tpu.vector_store %arg12[%c160, %c0_93], %120 {strides = array<i32>} : memref<216x512xf32, #tpu.memory_space<vmem>>, vector<8x512xf32>,
    %c0_94 = arith.constant 0 : index
    %c191 = arith.constant 191 : index
    %122 = vector.load %arg10[%c0_94, %c191] : memref<8x768xf32, #tpu.memory_space<vmem>>, vector<8x512xf32>
    %c21 = arith.constant 21 : index
    %c0_95 = arith.constant 0 : index
    %123 = vector.load %arg1[%c21, %c0_95] : memref<27x512xf32, #tpu.memory_space<vmem>>, vector<1x512xf32>
    %124 = vector.broadcast %123 : vector<1x512xf32> to vector<8x512xf32>
    %125 = arith.mulf %122, %124 : vector<8x512xf32>
    %c168 = arith.constant 168 : index
    %c0_96 = arith.constant 0 : index
    %126 = vector.load %arg12[%c168, %c0_96] : memref<216x512xf32, #tpu.memory_space<vmem>>, vector<8x512xf32>
    tpu.vector_store %arg12[%c168, %c0_96], %125 {strides = array<i32>} : memref<216x512xf32, #tpu.memory_space<vmem>>, vector<8x512xf32>,
    %c0_97 = arith.constant 0 : index
    %c192 = arith.constant 192 : index
    %127 = vector.load %arg10[%c0_97, %c192] : memref<8x768xf32, #tpu.memory_space<vmem>>, vector<8x512xf32>
    %c22 = arith.constant 22 : index
    %c0_98 = arith.constant 0 : index
    %128 = vector.load %arg1[%c22, %c0_98] : memref<27x512xf32, #tpu.memory_space<vmem>>, vector<1x512xf32>
    %129 = vector.broadcast %128 : vector<1x512xf32> to vector<8x512xf32>
    %130 = arith.mulf %127, %129 : vector<8x512xf32>
    %c176 = arith.constant 176 : index
    %c0_99 = arith.constant 0 : index
    %131 = vector.load %arg12[%c176, %c0_99] : memref<216x512xf32, #tpu.memory_space<vmem>>, vector<8x512xf32>
    tpu.vector_store %arg12[%c176, %c0_99], %130 {strides = array<i32>} : memref<216x512xf32, #tpu.memory_space<vmem>>, vector<8x512xf32>,
    %c0_100 = arith.constant 0 : index
    %c193 = arith.constant 193 : index
    %132 = vector.load %arg10[%c0_100, %c193] : memref<8x768xf32, #tpu.memory_space<vmem>>, vector<8x512xf32>
    %c23 = arith.constant 23 : index
    %c0_101 = arith.constant 0 : index
    %133 = vector.load %arg1[%c23, %c0_101] : memref<27x512xf32, #tpu.memory_space<vmem>>, vector<1x512xf32>
    %134 = vector.broadcast %133 : vector<1x512xf32> to vector<8x512xf32>
    %135 = arith.mulf %132, %134 : vector<8x512xf32>
    %c184_102 = arith.constant 184 : index
    %c0_103 = arith.constant 0 : index
    %136 = vector.load %arg12[%c184_102, %c0_103] : memref<216x512xf32, #tpu.memory_space<vmem>>, vector<8x512xf32>
    tpu.vector_store %arg12[%c184_102, %c0_103], %135 {strides = array<i32>} : memref<216x512xf32, #tpu.memory_space<vmem>>, vector<8x512xf32>,
    %c0_104 = arith.constant 0 : index
    %c199 = arith.constant 199 : index
    %137 = vector.load %arg10[%c0_104, %c199] : memref<8x768xf32, #tpu.memory_space<vmem>>, vector<8x512xf32>
    %c24_105 = arith.constant 24 : index
    %c0_106 = arith.constant 0 : index
    %138 = vector.load %arg1[%c24_105, %c0_106] : memref<27x512xf32, #tpu.memory_space<vmem>>, vector<1x512xf32>
    %139 = vector.broadcast %138 : vector<1x512xf32> to vector<8x512xf32>
    %140 = arith.mulf %137, %139 : vector<8x512xf32>
    %c192_107 = arith.constant 192 : index
    %c0_108 = arith.constant 0 : index
    %141 = vector.load %arg12[%c192_107, %c0_108] : memref<216x512xf32, #tpu.memory_space<vmem>>, vector<8x512xf32>
    tpu.vector_store %arg12[%c192_107, %c0_108], %140 {strides = array<i32>} : memref<216x512xf32, #tpu.memory_space<vmem>>, vector<8x512xf32>,
    %c0_109 = arith.constant 0 : index
    %c200 = arith.constant 200 : index
    %142 = vector.load %arg10[%c0_109, %c200] : memref<8x768xf32, #tpu.memory_space<vmem>>, vector<8x512xf32>
    %c25 = arith.constant 25 : index
    %c0_110 = arith.constant 0 : index
    %143 = vector.load %arg1[%c25, %c0_110] : memref<27x512xf32, #tpu.memory_space<vmem>>, vector<1x512xf32>
    %144 = vector.broadcast %143 : vector<1x512xf32> to vector<8x512xf32>
    %145 = arith.mulf %142, %144 : vector<8x512xf32>
    %c200_111 = arith.constant 200 : index
    %c0_112 = arith.constant 0 : index
    %146 = vector.load %arg12[%c200_111, %c0_112] : memref<216x512xf32, #tpu.memory_space<vmem>>, vector<8x512xf32>
    tpu.vector_store %arg12[%c200_111, %c0_112], %145 {strides = array<i32>} : memref<216x512xf32, #tpu.memory_space<vmem>>, vector<8x512xf32>,
    %c0_113 = arith.constant 0 : index
    %c201 = arith.constant 201 : index
    %147 = vector.load %arg10[%c0_113, %c201] : memref<8x768xf32, #tpu.memory_space<vmem>>, vector<8x512xf32>
    %c26 = arith.constant 26 : index
    %c0_114 = arith.constant 0 : index
    %148 = vector.load %arg1[%c26, %c0_114] : memref<27x512xf32, #tpu.memory_space<vmem>>, vector<1x512xf32>
    %149 = vector.broadcast %148 : vector<1x512xf32> to vector<8x512xf32>
    %150 = arith.mulf %147, %149 : vector<8x512xf32>
    %c208 = arith.constant 208 : index
    %c0_115 = arith.constant 0 : index
    %151 = vector.load %arg12[%c208, %c0_115] : memref<216x512xf32, #tpu.memory_space<vmem>>, vector<8x512xf32>
    tpu.vector_store %arg12[%c208, %c0_115], %150 {strides = array<i32>} : memref<216x512xf32, #tpu.memory_space<vmem>>, vector<8x512xf32>,
    %c0_116 = arith.constant 0 : index
    %c0_117 = arith.constant 0 : index
    %152 = vector.load %arg12[%c0_116, %c0_117] : memref<216x512xf32, #tpu.memory_space<vmem>>, vector<216x512xf32>
    %cst_118 = arith.constant dense<0.000000e+00> : vector<8x512xf32>
    %153 = tpu.matmul %15, %152, %cst_118 {dimension_numbers = #tpu.dot_dimension_numbers<[1], [0], [0], [1], [0, 0, 1, 1], [], []>} : vector<8x216xf32>, vector<216x512xf32>, vector<8x512xf32> -> vector<8x512xf32>
    %154 = vector.broadcast %16 : vector<8x1xf32> to vector<8x512xf32>
    %155 = arith.addf %153, %154 : vector<8x512xf32>
    %cst_119 = arith.constant 0.000000e+00 : f32
    %156 = vector.broadcast %cst_119 : f32 to vector<8x512xf32>
    %157 = arith.maximumf %155, %156 : vector<8x512xf32>
    %c0_120 = arith.constant 0 : index
    %c128_121 = arith.constant 128 : index
    %158 = vector.load %arg11[%c0_120, %c128_121] : memref<8x768xf32, #tpu.memory_space<vmem>>, vector<8x512xf32>
    tpu.vector_store %arg11[%c0_120, %c128_121], %157 {strides = array<i32>} : memref<8x768xf32, #tpu.memory_space<vmem>>, vector<8x512xf32>,
    %c0_122 = arith.constant 0 : index
    %c0_123 = arith.constant 0 : index
    %159 = vector.load %arg7[%c0_122, %c0_123] : memref<8x216xf32, #tpu.memory_space<vmem>>, vector<8x216xf32>
    %c0_124 = arith.constant 0 : index
    %c0_125 = arith.constant 0 : index
    %160 = vector.load %arg8[%c0_124, %c0_125] : memref<8x1xf32, #tpu.memory_space<vmem>>, vector<8x1xf32>
    %c0_126 = arith.constant 0 : index
    %c55_127 = arith.constant 55 : index
    %161 = vector.load %arg11[%c0_126, %c55_127] : memref<8x768xf32, #tpu.memory_space<vmem>>, vector<8x512xf32>
    %c0_128 = arith.constant 0 : index
    %c0_129 = arith.constant 0 : index
    %162 = vector.load %arg1[%c0_128, %c0_129] : memref<27x512xf32, #tpu.memory_space<vmem>>, vector<1x512xf32>
    %163 = vector.broadcast %162 : vector<1x512xf32> to vector<8x512xf32>
    %164 = arith.mulf %161, %163 : vector<8x512xf32>
    %c0_130 = arith.constant 0 : index
    %c0_131 = arith.constant 0 : index
    %165 = vector.load %arg12[%c0_130, %c0_131] : memref<216x512xf32, #tpu.memory_space<vmem>>, vector<8x512xf32>
    tpu.vector_store %arg12[%c0_130, %c0_131], %164 {strides = array<i32>} : memref<216x512xf32, #tpu.memory_space<vmem>>, vector<8x512xf32>,
    %c0_132 = arith.constant 0 : index
    %c56_133 = arith.constant 56 : index
    %166 = vector.load %arg11[%c0_132, %c56_133] : memref<8x768xf32, #tpu.memory_space<vmem>>, vector<8x512xf32>
    %c1_134 = arith.constant 1 : index
    %c0_135 = arith.constant 0 : index
    %167 = vector.load %arg1[%c1_134, %c0_135] : memref<27x512xf32, #tpu.memory_space<vmem>>, vector<1x512xf32>
    %168 = vector.broadcast %167 : vector<1x512xf32> to vector<8x512xf32>
    %169 = arith.mulf %166, %168 : vector<8x512xf32>
    %c8_136 = arith.constant 8 : index
    %c0_137 = arith.constant 0 : index
    %170 = vector.load %arg12[%c8_136, %c0_137] : memref<216x512xf32, #tpu.memory_space<vmem>>, vector<8x512xf32>
    tpu.vector_store %arg12[%c8_136, %c0_137], %169 {strides = array<i32>} : memref<216x512xf32, #tpu.memory_space<vmem>>, vector<8x512xf32>,
    %c0_138 = arith.constant 0 : index
    %c57_139 = arith.constant 57 : index
    %171 = vector.load %arg11[%c0_138, %c57_139] : memref<8x768xf32, #tpu.memory_space<vmem>>, vector<8x512xf32>
    %c2_140 = arith.constant 2 : index
    %c0_141 = arith.constant 0 : index
    %172 = vector.load %arg1[%c2_140, %c0_141] : memref<27x512xf32, #tpu.memory_space<vmem>>, vector<1x512xf32>
    %173 = vector.broadcast %172 : vector<1x512xf32> to vector<8x512xf32>
    %174 = arith.mulf %171, %173 : vector<8x512xf32>
    %c16_142 = arith.constant 16 : index
    %c0_143 = arith.constant 0 : index
    %175 = vector.load %arg12[%c16_142, %c0_143] : memref<216x512xf32, #tpu.memory_space<vmem>>, vector<8x512xf32>
    tpu.vector_store %arg12[%c16_142, %c0_143], %174 {strides = array<i32>} : memref<216x512xf32, #tpu.memory_space<vmem>>, vector<8x512xf32>,
    %c0_144 = arith.constant 0 : index
    %c63_145 = arith.constant 63 : index
    %176 = vector.load %arg11[%c0_144, %c63_145] : memref<8x768xf32, #tpu.memory_space<vmem>>, vector<8x512xf32>
    %c3_146 = arith.constant 3 : index
    %c0_147 = arith.constant 0 : index
    %177 = vector.load %arg1[%c3_146, %c0_147] : memref<27x512xf32, #tpu.memory_space<vmem>>, vector<1x512xf32>
    %178 = vector.broadcast %177 : vector<1x512xf32> to vector<8x512xf32>
    %179 = arith.mulf %176, %178 : vector<8x512xf32>
    %c24_148 = arith.constant 24 : index
    %c0_149 = arith.constant 0 : index
    %180 = vector.load %arg12[%c24_148, %c0_149] : memref<216x512xf32, #tpu.memory_space<vmem>>, vector<8x512xf32>
    tpu.vector_store %arg12[%c24_148, %c0_149], %179 {strides = array<i32>} : memref<216x512xf32, #tpu.memory_space<vmem>>, vector<8x512xf32>,
    %c0_150 = arith.constant 0 : index
    %c64_151 = arith.constant 64 : index
    %181 = vector.load %arg11[%c0_150, %c64_151] : memref<8x768xf32, #tpu.memory_space<vmem>>, vector<8x512xf32>
    %c4_152 = arith.constant 4 : index
    %c0_153 = arith.constant 0 : index
    %182 = vector.load %arg1[%c4_152, %c0_153] : memref<27x512xf32, #tpu.memory_space<vmem>>, vector<1x512xf32>
    %183 = vector.broadcast %182 : vector<1x512xf32> to vector<8x512xf32>
    %184 = arith.mulf %181, %183 : vector<8x512xf32>
    %c32_154 = arith.constant 32 : index
    %c0_155 = arith.constant 0 : index
    %185 = vector.load %arg12[%c32_154, %c0_155] : memref<216x512xf32, #tpu.memory_space<vmem>>, vector<8x512xf32>
    tpu.vector_store %arg12[%c32_154, %c0_155], %184 {strides = array<i32>} : memref<216x512xf32, #tpu.memory_space<vmem>>, vector<8x512xf32>,
    %c0_156 = arith.constant 0 : index
    %c65_157 = arith.constant 65 : index
    %186 = vector.load %arg11[%c0_156, %c65_157] : memref<8x768xf32, #tpu.memory_space<vmem>>, vector<8x512xf32>
    %c5_158 = arith.constant 5 : index
    %c0_159 = arith.constant 0 : index
    %187 = vector.load %arg1[%c5_158, %c0_159] : memref<27x512xf32, #tpu.memory_space<vmem>>, vector<1x512xf32>
    %188 = vector.broadcast %187 : vector<1x512xf32> to vector<8x512xf32>
    %189 = arith.mulf %186, %188 : vector<8x512xf32>
    %c40_160 = arith.constant 40 : index
    %c0_161 = arith.constant 0 : index
    %190 = vector.load %arg12[%c40_160, %c0_161] : memref<216x512xf32, #tpu.memory_space<vmem>>, vector<8x512xf32>
    tpu.vector_store %arg12[%c40_160, %c0_161], %189 {strides = array<i32>} : memref<216x512xf32, #tpu.memory_space<vmem>>, vector<8x512xf32>,
    %c0_162 = arith.constant 0 : index
    %c71_163 = arith.constant 71 : index
    %191 = vector.load %arg11[%c0_162, %c71_163] : memref<8x768xf32, #tpu.memory_space<vmem>>, vector<8x512xf32>
    %c6_164 = arith.constant 6 : index
    %c0_165 = arith.constant 0 : index
    %192 = vector.load %arg1[%c6_164, %c0_165] : memref<27x512xf32, #tpu.memory_space<vmem>>, vector<1x512xf32>
    %193 = vector.broadcast %192 : vector<1x512xf32> to vector<8x512xf32>
    %194 = arith.mulf %191, %193 : vector<8x512xf32>
    %c48_166 = arith.constant 48 : index
    %c0_167 = arith.constant 0 : index
    %195 = vector.load %arg12[%c48_166, %c0_167] : memref<216x512xf32, #tpu.memory_space<vmem>>, vector<8x512xf32>
    tpu.vector_store %arg12[%c48_166, %c0_167], %194 {strides = array<i32>} : memref<216x512xf32, #tpu.memory_space<vmem>>, vector<8x512xf32>,
    %c0_168 = arith.constant 0 : index
    %c72_169 = arith.constant 72 : index
    %196 = vector.load %arg11[%c0_168, %c72_169] : memref<8x768xf32, #tpu.memory_space<vmem>>, vector<8x512xf32>
    %c7_170 = arith.constant 7 : index
    %c0_171 = arith.constant 0 : index
    %197 = vector.load %arg1[%c7_170, %c0_171] : memref<27x512xf32, #tpu.memory_space<vmem>>, vector<1x512xf32>
    %198 = vector.broadcast %197 : vector<1x512xf32> to vector<8x512xf32>
    %199 = arith.mulf %196, %198 : vector<8x512xf32>
    %c56_172 = arith.constant 56 : index
    %c0_173 = arith.constant 0 : index
    %200 = vector.load %arg12[%c56_172, %c0_173] : memref<216x512xf32, #tpu.memory_space<vmem>>, vector<8x512xf32>
    tpu.vector_store %arg12[%c56_172, %c0_173], %199 {strides = array<i32>} : memref<216x512xf32, #tpu.memory_space<vmem>>, vector<8x512xf32>,
    %c0_174 = arith.constant 0 : index
    %c73_175 = arith.constant 73 : index
    %201 = vector.load %arg11[%c0_174, %c73_175] : memref<8x768xf32, #tpu.memory_space<vmem>>, vector<8x512xf32>
    %c8_176 = arith.constant 8 : index
    %c0_177 = arith.constant 0 : index
    %202 = vector.load %arg1[%c8_176, %c0_177] : memref<27x512xf32, #tpu.memory_space<vmem>>, vector<1x512xf32>
    %203 = vector.broadcast %202 : vector<1x512xf32> to vector<8x512xf32>
    %204 = arith.mulf %201, %203 : vector<8x512xf32>
    %c64_178 = arith.constant 64 : index
    %c0_179 = arith.constant 0 : index
    %205 = vector.load %arg12[%c64_178, %c0_179] : memref<216x512xf32, #tpu.memory_space<vmem>>, vector<8x512xf32>
    tpu.vector_store %arg12[%c64_178, %c0_179], %204 {strides = array<i32>} : memref<216x512xf32, #tpu.memory_space<vmem>>, vector<8x512xf32>,
    %c0_180 = arith.constant 0 : index
    %c119_181 = arith.constant 119 : index
    %206 = vector.load %arg11[%c0_180, %c119_181] : memref<8x768xf32, #tpu.memory_space<vmem>>, vector<8x512xf32>
    %c9_182 = arith.constant 9 : index
    %c0_183 = arith.constant 0 : index
    %207 = vector.load %arg1[%c9_182, %c0_183] : memref<27x512xf32, #tpu.memory_space<vmem>>, vector<1x512xf32>
    %208 = vector.broadcast %207 : vector<1x512xf32> to vector<8x512xf32>
    %209 = arith.mulf %206, %208 : vector<8x512xf32>
    %c72_184 = arith.constant 72 : index
    %c0_185 = arith.constant 0 : index
    %210 = vector.load %arg12[%c72_184, %c0_185] : memref<216x512xf32, #tpu.memory_space<vmem>>, vector<8x512xf32>
    tpu.vector_store %arg12[%c72_184, %c0_185], %209 {strides = array<i32>} : memref<216x512xf32, #tpu.memory_space<vmem>>, vector<8x512xf32>,
    %c0_186 = arith.constant 0 : index
    %c120_187 = arith.constant 120 : index
    %211 = vector.load %arg11[%c0_186, %c120_187] : memref<8x768xf32, #tpu.memory_space<vmem>>, vector<8x512xf32>
    %c10_188 = arith.constant 10 : index
    %c0_189 = arith.constant 0 : index
    %212 = vector.load %arg1[%c10_188, %c0_189] : memref<27x512xf32, #tpu.memory_space<vmem>>, vector<1x512xf32>
    %213 = vector.broadcast %212 : vector<1x512xf32> to vector<8x512xf32>
    %214 = arith.mulf %211, %213 : vector<8x512xf32>
    %c80_190 = arith.constant 80 : index
    %c0_191 = arith.constant 0 : index
    %215 = vector.load %arg12[%c80_190, %c0_191] : memref<216x512xf32, #tpu.memory_space<vmem>>, vector<8x512xf32>
    tpu.vector_store %arg12[%c80_190, %c0_191], %214 {strides = array<i32>} : memref<216x512xf32, #tpu.memory_space<vmem>>, vector<8x512xf32>,
    %c0_192 = arith.constant 0 : index
    %c121_193 = arith.constant 121 : index
    %216 = vector.load %arg11[%c0_192, %c121_193] : memref<8x768xf32, #tpu.memory_space<vmem>>, vector<8x512xf32>
    %c11_194 = arith.constant 11 : index
    %c0_195 = arith.constant 0 : index
    %217 = vector.load %arg1[%c11_194, %c0_195] : memref<27x512xf32, #tpu.memory_space<vmem>>, vector<1x512xf32>
    %218 = vector.broadcast %217 : vector<1x512xf32> to vector<8x512xf32>
    %219 = arith.mulf %216, %218 : vector<8x512xf32>
    %c88_196 = arith.constant 88 : index
    %c0_197 = arith.constant 0 : index
    %220 = vector.load %arg12[%c88_196, %c0_197] : memref<216x512xf32, #tpu.memory_space<vmem>>, vector<8x512xf32>
    tpu.vector_store %arg12[%c88_196, %c0_197], %219 {strides = array<i32>} : memref<216x512xf32, #tpu.memory_space<vmem>>, vector<8x512xf32>,
    %c0_198 = arith.constant 0 : index
    %c127_199 = arith.constant 127 : index
    %221 = vector.load %arg11[%c0_198, %c127_199] : memref<8x768xf32, #tpu.memory_space<vmem>>, vector<8x512xf32>
    %c12_200 = arith.constant 12 : index
    %c0_201 = arith.constant 0 : index
    %222 = vector.load %arg1[%c12_200, %c0_201] : memref<27x512xf32, #tpu.memory_space<vmem>>, vector<1x512xf32>
    %223 = vector.broadcast %222 : vector<1x512xf32> to vector<8x512xf32>
    %224 = arith.mulf %221, %223 : vector<8x512xf32>
    %c96_202 = arith.constant 96 : index
    %c0_203 = arith.constant 0 : index
    %225 = vector.load %arg12[%c96_202, %c0_203] : memref<216x512xf32, #tpu.memory_space<vmem>>, vector<8x512xf32>
    tpu.vector_store %arg12[%c96_202, %c0_203], %224 {strides = array<i32>} : memref<216x512xf32, #tpu.memory_space<vmem>>, vector<8x512xf32>,
    %c0_204 = arith.constant 0 : index
    %c128_205 = arith.constant 128 : index
    %226 = vector.load %arg11[%c0_204, %c128_205] : memref<8x768xf32, #tpu.memory_space<vmem>>, vector<8x512xf32>
    %c13_206 = arith.constant 13 : index
    %c0_207 = arith.constant 0 : index
    %227 = vector.load %arg1[%c13_206, %c0_207] : memref<27x512xf32, #tpu.memory_space<vmem>>, vector<1x512xf32>
    %228 = vector.broadcast %227 : vector<1x512xf32> to vector<8x512xf32>
    %229 = arith.mulf %226, %228 : vector<8x512xf32>
    %c104_208 = arith.constant 104 : index
    %c0_209 = arith.constant 0 : index
    %230 = vector.load %arg12[%c104_208, %c0_209] : memref<216x512xf32, #tpu.memory_space<vmem>>, vector<8x512xf32>
    tpu.vector_store %arg12[%c104_208, %c0_209], %229 {strides = array<i32>} : memref<216x512xf32, #tpu.memory_space<vmem>>, vector<8x512xf32>,
    %c0_210 = arith.constant 0 : index
    %c129_211 = arith.constant 129 : index
    %231 = vector.load %arg11[%c0_210, %c129_211] : memref<8x768xf32, #tpu.memory_space<vmem>>, vector<8x512xf32>
    %c14_212 = arith.constant 14 : index
    %c0_213 = arith.constant 0 : index
    %232 = vector.load %arg1[%c14_212, %c0_213] : memref<27x512xf32, #tpu.memory_space<vmem>>, vector<1x512xf32>
    %233 = vector.broadcast %232 : vector<1x512xf32> to vector<8x512xf32>
    %234 = arith.mulf %231, %233 : vector<8x512xf32>
    %c112_214 = arith.constant 112 : index
    %c0_215 = arith.constant 0 : index
    %235 = vector.load %arg12[%c112_214, %c0_215] : memref<216x512xf32, #tpu.memory_space<vmem>>, vector<8x512xf32>
    tpu.vector_store %arg12[%c112_214, %c0_215], %234 {strides = array<i32>} : memref<216x512xf32, #tpu.memory_space<vmem>>, vector<8x512xf32>,
    %c0_216 = arith.constant 0 : index
    %c135_217 = arith.constant 135 : index
    %236 = vector.load %arg11[%c0_216, %c135_217] : memref<8x768xf32, #tpu.memory_space<vmem>>, vector<8x512xf32>
    %c15_218 = arith.constant 15 : index
    %c0_219 = arith.constant 0 : index
    %237 = vector.load %arg1[%c15_218, %c0_219] : memref<27x512xf32, #tpu.memory_space<vmem>>, vector<1x512xf32>
    %238 = vector.broadcast %237 : vector<1x512xf32> to vector<8x512xf32>
    %239 = arith.mulf %236, %238 : vector<8x512xf32>
    %c120_220 = arith.constant 120 : index
    %c0_221 = arith.constant 0 : index
    %240 = vector.load %arg12[%c120_220, %c0_221] : memref<216x512xf32, #tpu.memory_space<vmem>>, vector<8x512xf32>
    tpu.vector_store %arg12[%c120_220, %c0_221], %239 {strides = array<i32>} : memref<216x512xf32, #tpu.memory_space<vmem>>, vector<8x512xf32>,
    %c0_222 = arith.constant 0 : index
    %c136_223 = arith.constant 136 : index
    %241 = vector.load %arg11[%c0_222, %c136_223] : memref<8x768xf32, #tpu.memory_space<vmem>>, vector<8x512xf32>
    %c16_224 = arith.constant 16 : index
    %c0_225 = arith.constant 0 : index
    %242 = vector.load %arg1[%c16_224, %c0_225] : memref<27x512xf32, #tpu.memory_space<vmem>>, vector<1x512xf32>
    %243 = vector.broadcast %242 : vector<1x512xf32> to vector<8x512xf32>
    %244 = arith.mulf %241, %243 : vector<8x512xf32>
    %c128_226 = arith.constant 128 : index
    %c0_227 = arith.constant 0 : index
    %245 = vector.load %arg12[%c128_226, %c0_227] : memref<216x512xf32, #tpu.memory_space<vmem>>, vector<8x512xf32>
    tpu.vector_store %arg12[%c128_226, %c0_227], %244 {strides = array<i32>} : memref<216x512xf32, #tpu.memory_space<vmem>>, vector<8x512xf32>,
    %c0_228 = arith.constant 0 : index
    %c137_229 = arith.constant 137 : index
    %246 = vector.load %arg11[%c0_228, %c137_229] : memref<8x768xf32, #tpu.memory_space<vmem>>, vector<8x512xf32>
    %c17_230 = arith.constant 17 : index
    %c0_231 = arith.constant 0 : index
    %247 = vector.load %arg1[%c17_230, %c0_231] : memref<27x512xf32, #tpu.memory_space<vmem>>, vector<1x512xf32>
    %248 = vector.broadcast %247 : vector<1x512xf32> to vector<8x512xf32>
    %249 = arith.mulf %246, %248 : vector<8x512xf32>
    %c136_232 = arith.constant 136 : index
    %c0_233 = arith.constant 0 : index
    %250 = vector.load %arg12[%c136_232, %c0_233] : memref<216x512xf32, #tpu.memory_space<vmem>>, vector<8x512xf32>
    tpu.vector_store %arg12[%c136_232, %c0_233], %249 {strides = array<i32>} : memref<216x512xf32, #tpu.memory_space<vmem>>, vector<8x512xf32>,
    %c0_234 = arith.constant 0 : index
    %c183_235 = arith.constant 183 : index
    %251 = vector.load %arg11[%c0_234, %c183_235] : memref<8x768xf32, #tpu.memory_space<vmem>>, vector<8x512xf32>
    %c18_236 = arith.constant 18 : index
    %c0_237 = arith.constant 0 : index
    %252 = vector.load %arg1[%c18_236, %c0_237] : memref<27x512xf32, #tpu.memory_space<vmem>>, vector<1x512xf32>
    %253 = vector.broadcast %252 : vector<1x512xf32> to vector<8x512xf32>
    %254 = arith.mulf %251, %253 : vector<8x512xf32>
    %c144_238 = arith.constant 144 : index
    %c0_239 = arith.constant 0 : index
    %255 = vector.load %arg12[%c144_238, %c0_239] : memref<216x512xf32, #tpu.memory_space<vmem>>, vector<8x512xf32>
    tpu.vector_store %arg12[%c144_238, %c0_239], %254 {strides = array<i32>} : memref<216x512xf32, #tpu.memory_space<vmem>>, vector<8x512xf32>,
    %c0_240 = arith.constant 0 : index
    %c184_241 = arith.constant 184 : index
    %256 = vector.load %arg11[%c0_240, %c184_241] : memref<8x768xf32, #tpu.memory_space<vmem>>, vector<8x512xf32>
    %c19_242 = arith.constant 19 : index
    %c0_243 = arith.constant 0 : index
    %257 = vector.load %arg1[%c19_242, %c0_243] : memref<27x512xf32, #tpu.memory_space<vmem>>, vector<1x512xf32>
    %258 = vector.broadcast %257 : vector<1x512xf32> to vector<8x512xf32>
    %259 = arith.mulf %256, %258 : vector<8x512xf32>
    %c152_244 = arith.constant 152 : index
    %c0_245 = arith.constant 0 : index
    %260 = vector.load %arg12[%c152_244, %c0_245] : memref<216x512xf32, #tpu.memory_space<vmem>>, vector<8x512xf32>
    tpu.vector_store %arg12[%c152_244, %c0_245], %259 {strides = array<i32>} : memref<216x512xf32, #tpu.memory_space<vmem>>, vector<8x512xf32>,
    %c0_246 = arith.constant 0 : index
    %c185_247 = arith.constant 185 : index
    %261 = vector.load %arg11[%c0_246, %c185_247] : memref<8x768xf32, #tpu.memory_space<vmem>>, vector<8x512xf32>
    %c20_248 = arith.constant 20 : index
    %c0_249 = arith.constant 0 : index
    %262 = vector.load %arg1[%c20_248, %c0_249] : memref<27x512xf32, #tpu.memory_space<vmem>>, vector<1x512xf32>
    %263 = vector.broadcast %262 : vector<1x512xf32> to vector<8x512xf32>
    %264 = arith.mulf %261, %263 : vector<8x512xf32>
    %c160_250 = arith.constant 160 : index
    %c0_251 = arith.constant 0 : index
    %265 = vector.load %arg12[%c160_250, %c0_251] : memref<216x512xf32, #tpu.memory_space<vmem>>, vector<8x512xf32>
    tpu.vector_store %arg12[%c160_250, %c0_251], %264 {strides = array<i32>} : memref<216x512xf32, #tpu.memory_space<vmem>>, vector<8x512xf32>,
    %c0_252 = arith.constant 0 : index
    %c191_253 = arith.constant 191 : index
    %266 = vector.load %arg11[%c0_252, %c191_253] : memref<8x768xf32, #tpu.memory_space<vmem>>, vector<8x512xf32>
    %c21_254 = arith.constant 21 : index
    %c0_255 = arith.constant 0 : index
    %267 = vector.load %arg1[%c21_254, %c0_255] : memref<27x512xf32, #tpu.memory_space<vmem>>, vector<1x512xf32>
    %268 = vector.broadcast %267 : vector<1x512xf32> to vector<8x512xf32>
    %269 = arith.mulf %266, %268 : vector<8x512xf32>
    %c168_256 = arith.constant 168 : index
    %c0_257 = arith.constant 0 : index
    %270 = vector.load %arg12[%c168_256, %c0_257] : memref<216x512xf32, #tpu.memory_space<vmem>>, vector<8x512xf32>
    tpu.vector_store %arg12[%c168_256, %c0_257], %269 {strides = array<i32>} : memref<216x512xf32, #tpu.memory_space<vmem>>, vector<8x512xf32>,
    %c0_258 = arith.constant 0 : index
    %c192_259 = arith.constant 192 : index
    %271 = vector.load %arg11[%c0_258, %c192_259] : memref<8x768xf32, #tpu.memory_space<vmem>>, vector<8x512xf32>
    %c22_260 = arith.constant 22 : index
    %c0_261 = arith.constant 0 : index
    %272 = vector.load %arg1[%c22_260, %c0_261] : memref<27x512xf32, #tpu.memory_space<vmem>>, vector<1x512xf32>
    %273 = vector.broadcast %272 : vector<1x512xf32> to vector<8x512xf32>
    %274 = arith.mulf %271, %273 : vector<8x512xf32>
    %c176_262 = arith.constant 176 : index
    %c0_263 = arith.constant 0 : index
    %275 = vector.load %arg12[%c176_262, %c0_263] : memref<216x512xf32, #tpu.memory_space<vmem>>, vector<8x512xf32>
    tpu.vector_store %arg12[%c176_262, %c0_263], %274 {strides = array<i32>} : memref<216x512xf32, #tpu.memory_space<vmem>>, vector<8x512xf32>,
    %c0_264 = arith.constant 0 : index
    %c193_265 = arith.constant 193 : index
    %276 = vector.load %arg11[%c0_264, %c193_265] : memref<8x768xf32, #tpu.memory_space<vmem>>, vector<8x512xf32>
    %c23_266 = arith.constant 23 : index
    %c0_267 = arith.constant 0 : index
    %277 = vector.load %arg1[%c23_266, %c0_267] : memref<27x512xf32, #tpu.memory_space<vmem>>, vector<1x512xf32>
    %278 = vector.broadcast %277 : vector<1x512xf32> to vector<8x512xf32>
    %279 = arith.mulf %276, %278 : vector<8x512xf32>
    %c184_268 = arith.constant 184 : index
    %c0_269 = arith.constant 0 : index
    %280 = vector.load %arg12[%c184_268, %c0_269] : memref<216x512xf32, #tpu.memory_space<vmem>>, vector<8x512xf32>
    tpu.vector_store %arg12[%c184_268, %c0_269], %279 {strides = array<i32>} : memref<216x512xf32, #tpu.memory_space<vmem>>, vector<8x512xf32>,
    %c0_270 = arith.constant 0 : index
    %c199_271 = arith.constant 199 : index
    %281 = vector.load %arg11[%c0_270, %c199_271] : memref<8x768xf32, #tpu.memory_space<vmem>>, vector<8x512xf32>
    %c24_272 = arith.constant 24 : index
    %c0_273 = arith.constant 0 : index
    %282 = vector.load %arg1[%c24_272, %c0_273] : memref<27x512xf32, #tpu.memory_space<vmem>>, vector<1x512xf32>
    %283 = vector.broadcast %282 : vector<1x512xf32> to vector<8x512xf32>
    %284 = arith.mulf %281, %283 : vector<8x512xf32>
    %c192_274 = arith.constant 192 : index
    %c0_275 = arith.constant 0 : index
    %285 = vector.load %arg12[%c192_274, %c0_275] : memref<216x512xf32, #tpu.memory_space<vmem>>, vector<8x512xf32>
    tpu.vector_store %arg12[%c192_274, %c0_275], %284 {strides = array<i32>} : memref<216x512xf32, #tpu.memory_space<vmem>>, vector<8x512xf32>,
    %c0_276 = arith.constant 0 : index
    %c200_277 = arith.constant 200 : index
    %286 = vector.load %arg11[%c0_276, %c200_277] : memref<8x768xf32, #tpu.memory_space<vmem>>, vector<8x512xf32>
    %c25_278 = arith.constant 25 : index
    %c0_279 = arith.constant 0 : index
    %287 = vector.load %arg1[%c25_278, %c0_279] : memref<27x512xf32, #tpu.memory_space<vmem>>, vector<1x512xf32>
    %288 = vector.broadcast %287 : vector<1x512xf32> to vector<8x512xf32>
    %289 = arith.mulf %286, %288 : vector<8x512xf32>
    %c200_280 = arith.constant 200 : index
    %c0_281 = arith.constant 0 : index
    %290 = vector.load %arg12[%c200_280, %c0_281] : memref<216x512xf32, #tpu.memory_space<vmem>>, vector<8x512xf32>
    tpu.vector_store %arg12[%c200_280, %c0_281], %289 {strides = array<i32>} : memref<216x512xf32, #tpu.memory_space<vmem>>, vector<8x512xf32>,
    %c0_282 = arith.constant 0 : index
    %c201_283 = arith.constant 201 : index
    %291 = vector.load %arg11[%c0_282, %c201_283] : memref<8x768xf32, #tpu.memory_space<vmem>>, vector<8x512xf32>
    %c26_284 = arith.constant 26 : index
    %c0_285 = arith.constant 0 : index
    %292 = vector.load %arg1[%c26_284, %c0_285] : memref<27x512xf32, #tpu.memory_space<vmem>>, vector<1x512xf32>
    %293 = vector.broadcast %292 : vector<1x512xf32> to vector<8x512xf32>
    %294 = arith.mulf %291, %293 : vector<8x512xf32>
    %c208_286 = arith.constant 208 : index
    %c0_287 = arith.constant 0 : index
    %295 = vector.load %arg12[%c208_286, %c0_287] : memref<216x512xf32, #tpu.memory_space<vmem>>, vector<8x512xf32>
    tpu.vector_store %arg12[%c208_286, %c0_287], %294 {strides = array<i32>} : memref<216x512xf32, #tpu.memory_space<vmem>>, vector<8x512xf32>,
    %c0_288 = arith.constant 0 : index
    %c0_289 = arith.constant 0 : index
    %296 = vector.load %arg12[%c0_288, %c0_289] : memref<216x512xf32, #tpu.memory_space<vmem>>, vector<216x512xf32>
    %cst_290 = arith.constant dense<0.000000e+00> : vector<8x512xf32>
    %297 = tpu.matmul %159, %296, %cst_290 {dimension_numbers = #tpu.dot_dimension_numbers<[1], [0], [0], [1], [0, 0, 1, 1], [], []>} : vector<8x216xf32>, vector<216x512xf32>, vector<8x512xf32> -> vector<8x512xf32>
    %298 = vector.broadcast %160 : vector<8x1xf32> to vector<8x512xf32>
    %299 = arith.addf %297, %298 : vector<8x512xf32>
    %cst_291 = arith.constant 0.000000e+00 : f32
    %300 = vector.broadcast %cst_291 : f32 to vector<8x512xf32>
    %301 = arith.maximumf %299, %300 : vector<8x512xf32>
    %c0_292 = arith.constant 0 : index
    %c0_293 = arith.constant 0 : index
    %c0_294 = arith.constant 0 : index
    %302 = vector.load %arg9[%c0_292, %c0_293, %c0_294] : memref<1x8x512xf32, #tpu.memory_space<vmem>>, vector<1x8x512xf32>
    %303 = vector.shape_cast %302 : vector<1x8x512xf32> to vector<8x512xf32>
    %304 = vector.shape_cast %301 : vector<8x512xf32> to vector<1x8x512xf32>
    tpu.vector_store %arg9[%c0_292, %c0_293, %c0_294], %304 {strides = array<i32>} : memref<1x8x512xf32, #tpu.memory_space<vmem>>, vector<1x8x512xf32>,
    return
  }
  func.func @transform_0(%arg0: i32) -> (i32, i32) {
    %c0_i32 = arith.constant 0 : i32
    %c0_i32_0 = arith.constant 0 : i32
    %c0_i32_1 = arith.constant 0 : i32
    return %c0_i32, %c0_i32_0 : i32, i32
  }
  func.func @transform_1(%arg0: i32) -> (i32, i32, i32) {
    %c0_i32 = arith.constant 0 : i32
    %c0_i32_0 = arith.constant 0 : i32
    %c0_i32_1 = arith.constant 0 : i32
    return %arg0, %c0_i32, %c0_i32_0 : i32, i32, i32
  }
  func.func @transform_2(%arg0: i32) -> (i32, i32) {
    %c0_i32 = arith.constant 0 : i32
    %c0_i32_0 = arith.constant 0 : i32
    %c0_i32_1 = arith.constant 0 : i32
    return %c0_i32, %c0_i32_0 : i32, i32
  }
  func.func @transform_3(%arg0: i32) -> (i32, i32) {
    %c0_i32 = arith.constant 0 : i32
    %c0_i32_0 = arith.constant 0 : i32
    %c0_i32_1 = arith.constant 0 : i32
    return %c0_i32, %c0_i32_0 : i32, i32
  }
  func.func @transform_4(%arg0: i32) -> (i32, i32) {
    %c0_i32 = arith.constant 0 : i32
    %c0_i32_0 = arith.constant 0 : i32
    %c0_i32_1 = arith.constant 0 : i32
    return %c0_i32, %c0_i32_0 : i32, i32
  }
  func.func @transform_5(%arg0: i32) -> (i32, i32) {
    %c0_i32 = arith.constant 0 : i32
    %c0_i32_0 = arith.constant 0 : i32
    %c0_i32_1 = arith.constant 0 : i32
    return %c0_i32, %c0_i32_0 : i32, i32
  }
  func.func @transform_6(%arg0: i32) -> (i32, i32) {
    %c0_i32 = arith.constant 0 : i32
    %c0_i32_0 = arith.constant 0 : i32
    %c0_i32_1 = arith.constant 0 : i32
    return %c0_i32, %c0_i32_0 : i32, i32
  }
  func.func @transform_7(%arg0: i32) -> (i32, i32) {
    %c0_i32 = arith.constant 0 : i32
    %c0_i32_0 = arith.constant 0 : i32
    %c0_i32_1 = arith.constant 0 : i32
    return %c0_i32, %c0_i32_0 : i32, i32
  }
  func.func @transform_8(%arg0: i32) -> (i32, i32, i32) {
    %c0_i32 = arith.constant 0 : i32
    %c0_i32_0 = arith.constant 0 : i32
    %c0_i32_1 = arith.constant 0 : i32
    return %arg0, %c0_i32, %c0_i32_0 : i32, i32, i32
  }
}

</mosaic_0001>

<llo_original>
// kernel: reduction3d_forward.1
$region0: #{reduction3d_forward.1}
  #allocation0 [shape = 'u32[]', space=smem, size = 0x4, offset = 0x4, fixed_abs, tag = 'smem constant byte address 0x4 - core index']
  #allocation1 [shape = 'u32[144,128]{1,0:T(1,128)}', space=vmem, size = 0x12000, scoped, tag = 'internal scratch']
  #allocation2 [shape = 'f32[8,768]{1,0:T(8,128)}', space=vmem, size = 0x6000, scoped, tag = 'scratch operand']
  #allocation3 [shape = 'f32[8,768]{1,0:T(8,128)}', space=vmem, size = 0x6000, scoped, tag = 'scratch operand']
  #allocation4 [shape = 'f32[216,512]{1,0:T(8,128)}', space=vmem, size = 0x6c000, scoped, tag = 'scratch operand']
  %s0 = inlined_call_operand.vmem [shape: f32[27,512], index: 0, kind: input, shape index: {}]
  %s1 = inlined_call_operand.vmem [shape: f32[2,4,512], index: 1, kind: input, shape index: {}]
  %s2 = inlined_call_operand.vmem [shape: f32[8,4], index: 2, kind: input, shape index: {}]
  %s3 = inlined_call_operand.vmem [shape: f32[8,1], index: 3, kind: input, shape index: {}]
  %s4 = inlined_call_operand.vmem [shape: f32[8,216], index: 4, kind: input, shape index: {}]
  %s5 = inlined_call_operand.vmem [shape: f32[8,1], index: 5, kind: input, shape index: {}]
  %s6 = inlined_call_operand.vmem [shape: f32[8,216], index: 6, kind: input, shape index: {}]
  %s7 = inlined_call_operand.vmem [shape: f32[8,1], index: 7, kind: input, shape index: {}]
  %s8 = inlined_call_operand.vmem [shape: f32[2,8,512], index: 8, kind: output, shape index: {}]
  %s9 = sld [smem:[#allocation0]]
  $region65: #{reduction3d_forward.1} parent=0
    _
  %s11 = ssub.s32 1, %s9
  %s12 = scalar_select 0, %s11, %s9
  loop: start=0, step=1, limit=4
  $region2: #{reduction3d_forward.1} parent=0 // loop_pre_header
    _
  $region3: #{reduction3d_forward.1} parent=0 // loop_header
    %s14 = sphi 0, %s18
    %p15 = scmp.ge.s32.totalorder %s14, 4
    %s22 = sphi 0, %s22
    %s24 = sphi 0, %s22
    %s25 = sphi 0, %s24
    %s39 = sphi 0, %s25
    %s45 = sphi 0, %s47
    %s48 = sphi 0, %s45
    %s49 = sphi 0, %s48
    %s65 = sphi 0, %s49
    %s69 = sphi 0, %s69
    %s71 = sphi 0, %s69
    %s72 = sphi 0, %s71
    %s86 = sphi 0, %s72
    %s90 = sphi 0, %s90
    %s92 = sphi 0, %s90
    %s93 = sphi 0, %s92
    %s107 = sphi 0, %s93
    %s111 = sphi 0, %s111
    %s113 = sphi 0, %s111
    %s114 = sphi 0, %s113
    %s128 = sphi 0, %s114
    %s132 = sphi 0, %s132
    %s134 = sphi 0, %s132
    %s135 = sphi 0, %s134
    %s149 = sphi 0, %s135
    %s153 = sphi 0, %s153
    %s155 = sphi 0, %s153
    %s156 = sphi 0, %s155
    %s170 = sphi 0, %s156
    %s174 = sphi 0, %s174
    %s176 = sphi 0, %s174
    %s177 = sphi 0, %s176
    %s191 = sphi 0, %s177
    %s197 = sphi 0, %s199
    %s200 = sphi 0, %s197
    %s201 = sphi 0, %s200
    %s217 = sphi 0, %s201
  $region4: #{reduction3d_forward.1} parent=0 // loop_header_branch
    %17 = sbr.rel (%p15) target = $region8
  $region5: #{reduction3d_forward.1} parent=0 // loop_body
    %s19 = ssub.s32 %s14, 1
    %s20 = ssub.s32 %s14, 2
    %s21 = sadd.s32 %s14, 1
    %s23 = sadd.s32 %s22, 1
    %p26 = scmp.eq.s32.totalorder %s14, 1
    %p27 = scmp.ne.s32.totalorder %s22, %s24
    %p28 = scmp.eq.s32.totalorder %s14, 0
    %p29 = por %p27, %p28
    %p30 = scmp.ne.s32.totalorder %s22, %s24
    %p31 = scmp.eq.s32.totalorder %s19, 1
    %p32 = por %p30, %p31
    %p33 = scmp.ne.s32.totalorder %s24, %s25
    %p34 = scmp.eq.s32.totalorder %s19, 0
    %p35 = por %p33, %p34
    %p36 = scmp.ne.s32.totalorder %s24, %s25
    %p37 = scmp.eq.s32.totalorder %s20, 1
    %p38 = por %p36, %p37
    %p40 = scmp.ne.s32.totalorder %s25, %s39
    %p41 = scmp.eq.s32.totalorder %s20, 0
    %p42 = por %p40, %p41
    %s43 = ssub.s32 %s14, %s21
    %p44 = scmp.eq.s32.totalorder %s43, 0
    %s46 = sadd.s32 %s45, 1
    %s47 = scalar_select %p44, %s45, %s46
    %p50 = pneg %p44
    %p51 = scmp.eq.s32.totalorder %s14, 1
    %p52 = por %p50, %p51
    %p53 = scmp.ne.s32.totalorder %s45, %s48
    %p54 = scmp.eq.s32.totalorder %s14, 0
    %p55 = por %p53, %p54
    %p56 = scmp.ne.s32.totalorder %s45, %s48
    %p57 = scmp.eq.s32.totalorder %s19, 1
    %p58 = por %p56, %p57
    %p59 = scmp.ne.s32.totalorder %s48, %s49
    %p60 = scmp.eq.s32.totalorder %s19, 0
    %p61 = por %p59, %p60
    %p62 = scmp.ne.s32.totalorder %s48, %s49
    %p63 = scmp.eq.s32.totalorder %s20, 1
    %p64 = por %p62, %p63
    %p66 = scmp.ne.s32.totalorder %s49, %s65
    %p67 = scmp.eq.s32.totalorder %s20, 0
    %p68 = por %p66, %p67
    %s70 = sadd.s32 %s69, 1
    %p73 = scmp.eq.s32.totalorder %s14, 1
    %p74 = scmp.ne.s32.totalorder %s69, %s71
    %p75 = scmp.eq.s32.totalorder %s14, 0
    %p76 = por %p74, %p75
    %p77 = scmp.ne.s32.totalorder %s69, %s71
    %p78 = scmp.eq.s32.totalorder %s19, 1
    %p79 = por %p77, %p78
    %p80 = scmp.ne.s32.totalorder %s71, %s72
    %p81 = scmp.eq.s32.totalorder %s19, 0
    %p82 = por %p80, %p81
    %p83 = scmp.ne.s32.totalorder %s71, %s72
    %p84 = scmp.eq.s32.totalorder %s20, 1
    %p85 = por %p83, %p84
    %p87 = scmp.ne.s32.totalorder %s72, %s86
    %p88 = scmp.eq.s32.totalorder %s20, 0
    %p89 = por %p87, %p88
    %s91 = sadd.s32 %s90, 1
    %p94 = scmp.eq.s32.totalorder %s14, 1
    %p95 = scmp.ne.s32.totalorder %s90, %s92
    %p96 = scmp.eq.s32.totalorder %s14, 0
    %p97 = por %p95, %p96
    %p98 = scmp.ne.s32.totalorder %s90, %s92
    %p99 = scmp.eq.s32.totalorder %s19, 1
    %p100 = por %p98, %p99
    %p101 = scmp.ne.s32.totalorder %s92, %s93
    %p102 = scmp.eq.s32.totalorder %s19, 0
    %p103 = por %p101, %p102
    %p104 = scmp.ne.s32.totalorder %s92, %s93
    %p105 = scmp.eq.s32.totalorder %s20, 1
    %p106 = por %p104, %p105
    %p108 = scmp.ne.s32.totalorder %s93, %s107
    %p109 = scmp.eq.s32.totalorder %s20, 0
    %p110 = por %p108, %p109
    %s112 = sadd.s32 %s111, 1
    %p115 = scmp.eq.s32.totalorder %s14, 1
    %p116 = scmp.ne.s32.totalorder %s111, %s113
    %p117 = scmp.eq.s32.totalorder %s14, 0
    %p118 = por %p116, %p117
    %p119 = scmp.ne.s32.totalorder %s111, %s113
    %p120 = scmp.eq.s32.totalorder %s19, 1
    %p121 = por %p119, %p120
    %p122 = scmp.ne.s32.totalorder %s113, %s114
    %p123 = scmp.eq.s32.totalorder %s19, 0
    %p124 = por %p122, %p123
    %p125 = scmp.ne.s32.totalorder %s113, %s114
    %p126 = scmp.eq.s32.totalorder %s20, 1
    %p127 = por %p125, %p126
    %p129 = scmp.ne.s32.totalorder %s114, %s128
    %p130 = scmp.eq.s32.totalorder %s20, 0
    %p131 = por %p129, %p130
    %s133 = sadd.s32 %s132, 1
    %p136 = scmp.eq.s32.totalorder %s14, 1
    %p137 = scmp.ne.s32.totalorder %s132, %s134
    %p138 = scmp.eq.s32.totalorder %s14, 0
    %p139 = por %p137, %p138
    %p140 = scmp.ne.s32.totalorder %s132, %s134
    %p141 = scmp.eq.s32.totalorder %s19, 1
    %p142 = por %p140, %p141
    %p143 = scmp.ne.s32.totalorder %s134, %s135
    %p144 = scmp.eq.s32.totalorder %s19, 0
    %p145 = por %p143, %p144
    %p146 = scmp.ne.s32.totalorder %s134, %s135
    %p147 = scmp.eq.s32.totalorder %s20, 1
    %p148 = por %p146, %p147
    %p150 = scmp.ne.s32.totalorder %s135, %s149
    %p151 = scmp.eq.s32.totalorder %s20, 0
    %p152 = por %p150, %p151
    %s154 = sadd.s32 %s153, 1
    %p157 = scmp.eq.s32.totalorder %s14, 1
    %p158 = scmp.ne.s32.totalorder %s153, %s155
    %p159 = scmp.eq.s32.totalorder %s14, 0
    %p160 = por %p158, %p159
    %p161 = scmp.ne.s32.totalorder %s153, %s155
    %p162 = scmp.eq.s32.totalorder %s19, 1
    %p163 = por %p161, %p162
    %p164 = scmp.ne.s32.totalorder %s155, %s156
    %p165 = scmp.eq.s32.totalorder %s19, 0
    %p166 = por %p164, %p165
    %p167 = scmp.ne.s32.totalorder %s155, %s156
    %p168 = scmp.eq.s32.totalorder %s20, 1
    %p169 = por %p167, %p168
    %p171 = scmp.ne.s32.totalorder %s156, %s170
    %p172 = scmp.eq.s32.totalorder %s20, 0
    %p173 = por %p171, %p172
    %s175 = sadd.s32 %s174, 1
    %p178 = scmp.eq.s32.totalorder %s14, 1
    %p179 = scmp.ne.s32.totalorder %s174, %s176
    %p180 = scmp.eq.s32.totalorder %s14, 0
    %p181 = por %p179, %p180
    %p182 = scmp.ne.s32.totalorder %s174, %s176
    %p183 = scmp.eq.s32.totalorder %s19, 1
    %p184 = por %p182, %p183
    %p185 = scmp.ne.s32.totalorder %s176, %s177
    %p186 = scmp.eq.s32.totalorder %s19, 0
    %p187 = por %p185, %p186
    %p188 = scmp.ne.s32.totalorder %s176, %s177
    %p189 = scmp.eq.s32.totalorder %s20, 1
    %p190 = por %p188, %p189
    %p192 = scmp.ne.s32.totalorder %s177, %s191
    %p193 = scmp.eq.s32.totalorder %s20, 0
    %p194 = por %p192, %p193
    %s195 = ssub.s32 %s14, %s21
    %p196 = scmp.eq.s32.totalorder %s195, 0
    %s198 = sadd.s32 %s197, 1
    %s199 = scalar_select %p196, %s197, %s198
    %p202 = pneg %p196
    %p203 = scmp.eq.s32.totalorder %s14, 1
    %p204 = por %p202, %p203
    %p205 = scmp.ne.s32.totalorder %s197, %s200
    %p206 = scmp.eq.s32.totalorder %s14, 0
    %p207 = por %p205, %p206
    %p208 = scmp.ne.s32.totalorder %s197, %s200
    %p209 = scmp.eq.s32.totalorder %s19, 1
    %p210 = por %p208, %p209
    %p211 = scmp.ne.s32.totalorder %s200, %s201
    %p212 = scmp.eq.s32.totalorder %s19, 0
    %p213 = por %p211, %p212
    %p214 = scmp.ne.s32.totalorder %s200, %s201
    %p215 = scmp.eq.s32.totalorder %s20, 1
    %p216 = por %p214, %p215
    %p218 = scmp.ne.s32.totalorder %s201, %s217
    %p219 = scmp.eq.s32.totalorder %s20, 0
    %p220 = por %p218, %p219
    %p221 = scmp.le.s32.totalorder 1, %s14
    %p222 = scmp.lt.s32.totalorder %s14, 3
    %p223 = pnand %p221, %p222
    %p224 = pneg %p223
    // Predicated region
    $region9: #{reduction3d_forward.1} parent=5 // pred_check
      _
    $region10: #{reduction3d_forward.1} parent=5 // pred_check_branch
      %226 = sbr.rel (%p223) target = $region12
    $region11: #{reduction3d_forward.1} parent=5 // pred_region
      %s227 = ssub.s32 %s14, 1
      // Predicated region
      $region13: #{reduction3d_forward.1} parent=11 // pred_check
        %p228 = pneg %p35
      $region14: #{reduction3d_forward.1} parent=11 // pred_check_branch
        %230 = sbr.rel (%p228) target = $region16
      $region15: #{reduction3d_forward.1} parent=11 // pred_region
        _
      $region16: #{reduction3d_forward.1} parent=11 // pred_fallthru
        _
      // Predicated region
      $region17: #{reduction3d_forward.1} parent=11 // pred_check
        %p231 = pneg %p82
      $region18: #{reduction3d_forward.1} parent=11 // pred_check_branch
        %233 = sbr.rel (%p231) target = $region20
      $region19: #{reduction3d_forward.1} parent=11 // pred_region
        _
      $region20: #{reduction3d_forward.1} parent=11 // pred_fallthru
        _
      // Predicated region
      $region21: #{reduction3d_forward.1} parent=11 // pred_check
        %p234 = pneg %p103
      $region22: #{reduction3d_forward.1} parent=11 // pred_check_branch
        %236 = sbr.rel (%p234) target = $region24
      $region23: #{reduction3d_forward.1} parent=11 // pred_region
        _
      $region24: #{reduction3d_forward.1} parent=11 // pred_fallthru
        _
      // Predicated region
      $region25: #{reduction3d_forward.1} parent=11 // pred_check
        %p237 = pneg %p124
      $region26: #{reduction3d_forward.1} parent=11 // pred_check_branch
        %239 = sbr.rel (%p237) target = $region28
      $region27: #{reduction3d_forward.1} parent=11 // pred_region
        _
      $region28: #{reduction3d_forward.1} parent=11 // pred_fallthru
        _
      // Predicated region
      $region29: #{reduction3d_forward.1} parent=11 // pred_check
        %p240 = pneg %p145
      $region30: #{reduction3d_forward.1} parent=11 // pred_check_branch
        %242 = sbr.rel (%p240) target = $region32
      $region31: #{reduction3d_forward.1} parent=11 // pred_region
        _
      $region32: #{reduction3d_forward.1} parent=11 // pred_fallthru
        _
      // Predicated region
      $region33: #{reduction3d_forward.1} parent=11 // pred_check
        %p243 = pneg %p166
      $region34: #{reduction3d_forward.1} parent=11 // pred_check_branch
        %245 = sbr.rel (%p243) target = $region36
      $region35: #{reduction3d_forward.1} parent=11 // pred_region
        _
      $region36: #{reduction3d_forward.1} parent=11 // pred_fallthru
        _
      // Predicated region
      $region37: #{reduction3d_forward.1} parent=11 // pred_check
        %p246 = pneg %p187
      $region38: #{reduction3d_forward.1} parent=11 // pred_check_branch
        %248 = sbr.rel (%p246) target = $region40
      $region39: #{reduction3d_forward.1} parent=11 // pred_region
        _
      $region40: #{reduction3d_forward.1} parent=11 // pred_fallthru
        _
    $region12: #{reduction3d_forward.1} parent=5 // pred_fallthru
      _
    %p249 = scmp.lt.s32.totalorder %s14, 2
    // Predicated region
    $region41: #{reduction3d_forward.1} parent=5 // pred_check
      %p250 = pneg %p249
    $region42: #{reduction3d_forward.1} parent=5 // pred_check_branch
      %252 = sbr.rel (%p250) target = $region44
    $region43: #{reduction3d_forward.1} parent=5 // pred_region
      // Predicated region
      $region45: #{reduction3d_forward.1} parent=43 // pred_check
        %p253 = pneg %p55
      $region46: #{reduction3d_forward.1} parent=43 // pred_check_branch
        %255 = sbr.rel (%p253) target = $region48
      $region47: #{reduction3d_forward.1} parent=43 // pred_region
        %p256 = scmp.lt.s32.totalorder %s14, 1
        %s257 = scalar_select %p256, %s14, 1
        %s258 = smul.addr %s257, 4
        %s259 = smul.addr %s258, 4
        %s260 = scalar_lea.vmem %s1, %s259
      $region48: #{reduction3d_forward.1} parent=43 // pred_fallthru
        _
    $region44: #{reduction3d_forward.1} parent=5 // pred_fallthru
      _
    %p261 = scmp.le.s32.totalorder 1, %s14
    %p262 = scmp.lt.s32.totalorder %s14, 3
    %p263 = pnand %p261, %p262
    %p264 = pneg %p263
    // Predicated region
    $region49: #{reduction3d_forward.1} parent=5 // pred_check
      _
    $region50: #{reduction3d_forward.1} parent=5 // pred_check_branch
      %266 = sbr.rel (%p263) target = $region52
    $region51: #{reduction3d_forward.1} parent=5 // pred_region
      %s267 = ssub.s32 %s14, 1
      %p268 = pneg %p35
      %p269 = pneg %p32
      %p270 = scmp.lt.s32.totalorder %s19, 1
      %s271 = scalar_select %p270, %s19, 1
      %s272 = smul.addr %s271, 4
      %s273 = smul.addr %s272, 4
      %s274 = scalar_lea.vmem %s1, %s273
      %p275 = pneg %p61
      %p276 = pneg %p58
      %p277 = pneg %p82
      %p278 = pneg %p79
      %p279 = pneg %p103
      %p280 = pneg %p100
      %p281 = pneg %p124
      %p282 = pneg %p121
      %p283 = pneg %p145
      %p284 = pneg %p142
      %p285 = pneg %p166
      %p286 = pneg %p163
      %p287 = pneg %p187
      %p288 = pneg %p184
      %p289 = pneg %p213
      %p290 = pneg %p210
      %p291 = scmp.lt.s32.totalorder %s19, 1
      %s292 = scalar_select %p291, %s19, 1
      %s293 = smul.addr %s292, 4
      %s294 = smul.addr %s293, 8
      %s295 = scalar_lea.vmem %s8, %s294
      %p296 = scmp.lt.s32.totalorder %s19, 1
      %s297 = scalar_select %p296, %s19, 1
      %s298 = smul.addr %s297, 4
      %s299 = smul.addr %s298, 4
      %s300 = scalar_lea.vmem %s1, %s299
      %p301 = scmp.lt.s32.totalorder %s19, 1
      %s302 = scalar_select %p301, %s19, 1
      %s303 = smul.addr %s302, 4
      %s304 = smul.addr %s303, 8
      %s305 = scalar_lea.vmem %s8, %s304
      %306 = vst [vmem:[#allocation2] sm:$0xff] 0.0
      %307 = vst [vmem:[#allocation2 + $0x28] sm:$0xff] 0.0
      %308 = vst [vmem:[#allocation3] sm:$0xff] 0.0
      %309 = vst [vmem:[#allocation3 + $0x28] sm:$0xff] 0.0
      %v310 = vld [vmem:[%s2] sm:$0xff]
      %v311 = vld [vmem:[%s300] sm:$0xff]
      %v312 = vld [vmem:[%s300 + $0x8] sm:$0xff]
      %v313 = vld [vmem:[%s3] sm:$0xff]
      %315 = vset.pattern.permute.xlu0 0
      %316 = vperm.xlu0 %315, %v313
      %v317 = vpop.permute.xlu0 %316
      %v321 = vcombine.high %v311, %v311
      %v322 = vcombine.high %v312, %v312
      %vm323 = vcmask 31744
      %v325 = vsel %vm323, %v310, 0
      %vm327 = vcmask 1043456
      %v328 = vsel %vm327, %v311, 0
      %v330 = vsel %vm327, %v321, 0
      %v332 = vsel %vm327, %v312, 0
      %v334 = vsel %vm327, %v322, 0
      %336 = vmatprep.subr.mxu0 %v330
      %337 = vmatpush1.msra.mxu0 %v328
      %338 = vmatprep.subr.mxu0 0.0
      %339 = vmatpush1.msra.mxu0 0.0
      %340 = vmatprep.subr.mxu0 0.0
      %341 = vmatpush1.msra.mxu0 0.0
      %342 = vmatprep.subr.mxu0 0.0
      %343 = vmatpush1.msra.mxu0 0.0
      %344 = vmatprep.subr.mxu0 0.0
      %345 = vmatpush1.msra.mxu0 0.0
      %346 = vmatprep.subr.mxu0 0.0
      %347 = vmatpush1.msra.mxu0 0.0
      %348 = vmatprep.subr.mxu0 0.0
      %349 = vmatpush1.msra.mxu0 0.0
      %350 = vmatprep.subr.mxu0 0.0
      %351 = vmatpush1.msra.mxu0 0.0
      %352 = vmatprep.subr.mxu0 0.0
      %353 = vmatpush1.msra.mxu0 0.0
      %354 = vmatprep.subr.mxu0 0.0
      %355 = vmatpush1.msra.mxu0 0.0
      %356 = vmatprep.subr.mxu0 0.0
      %357 = vmatpush1.msra.mxu0 0.0
      %358 = vmatprep.subr.mxu0 0.0
      %359 = vmatpush1.msra.mxu0 0.0
      %360 = vmatprep.subr.mxu0 0.0
      %361 = vmatpush1.msra.mxu0 0.0
      %362 = vmatprep.subr.mxu0 0.0
      %363 = vmatpush1.msra.mxu0 0.0
      %364 = vmatprep.subr.mxu0 0.0
      %365 = vmatpush1.msra.mxu0 0.0
      %366 = vmatprep.subr.mxu0 0.0
      %367 = vmatpush1.msra.mxu0 0.0
      %368 = vmatprep.subr.mxu0 0.0
      %369 = vmatpush1.msra.mxu0 0.0
      %370 = vmatprep.subr.mxu0 0.0
      %371 = vmatpush1.msra.mxu0 0.0
      %372 = vmatprep.subr.mxu0 0.0
      %373 = vmatpush1.msra.mxu0 0.0
      %374 = vmatprep.subr.mxu0 0.0
      %375 = vmatpush1.msra.mxu0 0.0
      %376 = vmatprep.subr.mxu0 0.0
      %377 = vmatpush1.msra.mxu0 0.0
      %378 = vmatprep.subr.mxu0 0.0
      %379 = vmatpush1.msra.mxu0 0.0
      %380 = vmatprep.subr.mxu0 0.0
      %381 = vmatpush1.msra.mxu0 0.0
      %382 = vmatprep.subr.mxu0 0.0
      %383 = vmatpush1.msra.mxu0 0.0
      %384 = vmatprep.subr.mxu0 0.0
      %385 = vmatpush1.msra.mxu0 0.0
      %386 = vmatprep.subr.mxu0 0.0
      %387 = vmatpush1.msra.mxu0 0.0
      %388 = vmatprep.subr.mxu0 0.0
      %389 = vmatpush1.msra.mxu0 0.0
      %390 = vmatprep.subr.mxu0 0.0
      %391 = vmatpush1.msra.mxu0 0.0
      %392 = vmatprep.subr.mxu0 0.0
      %393 = vmatpush1.msra.mxu0 0.0
      %394 = vmatprep.subr.mxu0 0.0
      %395 = vmatpush1.msra.mxu0 0.0
      %396 = vmatprep.subr.mxu0 0.0
      %397 = vmatpush1.msra.mxu0 0.0
      %398 = vmatprep.subr.mxu0 0.0
      %399 = vmatpush1.msra.mxu0 0.0
      %400 = vmatprep.mubr.f32.mxu0 0.0
      %401 = vmatmul.mubr.f32.gmra.mrb[0].mxu0 %v325
      %v402 = vpop.f32.mrb[0].mxu0
      %v403 = vadd.f32 %v317, %v402
      %v404 = vpop.f32.mrb[0].mxu0
      %v405 = vadd.f32 %v317, %v404
      %406 = vdwg.mxu0
      %407 = vmatprep.subr.mxu0 %v334
      %408 = vmatpush1.msra.mxu0 %v332
      %409 = vmatprep.subr.mxu0 0.0
      %410 = vmatpush1.msra.mxu0 0.0
      %411 = vmatprep.subr.mxu0 0.0
      %412 = vmatpush1.msra.mxu0 0.0
      %413 = vmatprep.subr.mxu0 0.0
      %414 = vmatpush1.msra.mxu0 0.0
      %415 = vmatprep.subr.mxu0 0.0
      %416 = vmatpush1.msra.mxu0 0.0
      %417 = vmatprep.subr.mxu0 0.0
      %418 = vmatpush1.msra.mxu0 0.0
      %419 = vmatprep.subr.mxu0 0.0
      %420 = vmatpush1.msra.mxu0 0.0
      %421 = vmatprep.subr.mxu0 0.0
      %422 = vmatpush1.msra.mxu0 0.0
      %423 = vmatprep.subr.mxu0 0.0
      %424 = vmatpush1.msra.mxu0 0.0
      %425 = vmatprep.subr.mxu0 0.0
      %426 = vmatpush1.msra.mxu0 0.0
      %427 = vmatprep.subr.mxu0 0.0
      %428 = vmatpush1.msra.mxu0 0.0
      %429 = vmatprep.subr.mxu0 0.0
      %430 = vmatpush1.msra.mxu0 0.0
      %431 = vmatprep.subr.mxu0 0.0
      %432 = vmatpush1.msra.mxu0 0.0
      %433 = vmatprep.subr.mxu0 0.0
      %434 = vmatpush1.msra.mxu0 0.0
      %435 = vmatprep.subr.mxu0 0.0
      %436 = vmatpush1.msra.mxu0 0.0
      %437 = vmatprep.subr.mxu0 0.0
      %438 = vmatpush1.msra.mxu0 0.0
      %439 = vmatprep.subr.mxu0 0.0
      %440 = vmatpush1.msra.mxu0 0.0
      %441 = vmatprep.subr.mxu0 0.0
      %442 = vmatpush1.msra.mxu0 0.0
      %443 = vmatprep.subr.mxu0 0.0
      %444 = vmatpush1.msra.mxu0 0.0
      %445 = vmatprep.subr.mxu0 0.0
      %446 = vmatpush1.msra.mxu0 0.0
      %447 = vmatprep.subr.mxu0 0.0
      %448 = vmatpush1.msra.mxu0 0.0
      %449 = vmatprep.subr.mxu0 0.0
      %450 = vmatpush1.msra.mxu0 0.0
      %451 = vmatprep.subr.mxu0 0.0
      %452 = vmatpush1.msra.mxu0 0.0
      %453 = vmatprep.subr.mxu0 0.0
      %454 = vmatpush1.msra.mxu0 0.0
      %455 = vmatprep.subr.mxu0 0.0
      %456 = vmatpush1.msra.mxu0 0.0
      %457 = vmatprep.subr.mxu0 0.0
      %458 = vmatpush1.msra.mxu0 0.0
      %459 = vmatprep.subr.mxu0 0.0
      %460 = vmatpush1.msra.mxu0 0.0
      %461 = vmatprep.subr.mxu0 0.0
      %462 = vmatpush1.msra.mxu0 0.0
      %463 = vmatprep.subr.mxu0 0.0
      %464 = vmatpush1.msra.mxu0 0.0
      %465 = vmatprep.subr.mxu0 0.0
      %466 = vmatpush1.msra.mxu0 0.0
      %467 = vmatprep.subr.mxu0 0.0
      %468 = vmatpush1.msra.mxu0 0.0
      %469 = vmatprep.subr.mxu0 0.0
      %470 = vmatpush1.msra.mxu0 0.0
      %471 = vmatprep.mubr.f32.mxu0 0.0
      %472 = vmatmul.mubr.f32.gmra.mrb[0].mxu0 %v325
      %v473 = vpop.f32.mrb[0].mxu0
      %v474 = vadd.f32 %v317, %v473
      %v475 = vpop.f32.mrb[0].mxu0
      %v476 = vadd.f32 %v317, %v475
      %477 = vdwg.mxu0
      %v478 = vmax.f32 %v403, 0.0
      %v479 = vmax.f32 %v405, 0.0
      %v480 = vmax.f32 %v474, 0.0
      %v481 = vmax.f32 %v476, 0.0
      %482 = vst [vmem:[#allocation2 + $0x8] sm:$0xff] %v478
      %483 = vst [vmem:[#allocation2 + $0x10] sm:$0xff] %v479
      %484 = vst [vmem:[#allocation2 + $0x18] sm:$0xff] %v480
      %485 = vst [vmem:[#allocation2 + $0x20] sm:$0xff] %v481
      %v486 = vld [vmem:[%s4] sm:$0xff]
      %v487 = vld [vmem:[%s4 + $0x8] sm:$0xff]
      %v488 = vld [vmem:[%s5] sm:$0xff]
      %v489 = vld [vmem:[#allocation2] sm:$0xff]
      %v490 = vld [vmem:[#allocation2 + $0x8] sm:$0xff]
      %v491 = vld [vmem:[#allocation2 + $0x10] sm:$0xff]
      %v492 = vld [vmem:[#allocation2 + $0x18] sm:$0xff]
      %v493 = vld [vmem:[#allocation2 + $0x20] sm:$0xff]
      %v494 = vld [vmem:[%s0] ss:$8 sm:$0xf]
      %v496 = vlaneseq
      %v497 = vshrl.u32 %v496, 7
      %v498 = vsub.s32 0, %v497
      %v499 = vrot.slane %v494, %v498
      %v500 = vlaneseq
      %v501 = vshrl.u32 %v500, 7
      %v502 = vsub.s32 1, %v501
      %v503 = vrot.slane %v494, %v502
      %v504 = vlaneseq
      %v505 = vshrl.u32 %v504, 7
      %v506 = vsub.s32 2, %v505
      %v507 = vrot.slane %v494, %v506
      %v508 = vlaneseq
      %v509 = vshrl.u32 %v508, 7
      %v510 = vsub.s32 3, %v509
      %v511 = vrot.slane %v494, %v510
      %512 = vrot.lane.b32.xlu0 %v499, 55
      %v513 = vpop.permute.xlu0 %512
      %514 = vrot.lane.b32.xlu0 %v503, 55
      %v515 = vpop.permute.xlu0 %514
      %516 = vrot.lane.b32.xlu0 %v507, 55
      %v517 = vpop.permute.xlu0 %516
      %518 = vrot.lane.b32.xlu0 %v511, 55
      %v519 = vpop.permute.xlu0 %518
      %vm520 = vcmask 449536
      %v521 = vsel %vm520, %v513, %v515
      %v522 = vsel %vm520, %v515, %v517
      %v523 = vsel %vm520, %v517, %v519
      %v529 = vmul.f32 %v489, %v513
      %v530 = vmul.f32 %v490, %v521
      %v531 = vmul.f32 %v491, %v522
      %v532 = vmul.f32 %v492, %v523
      %v533 = vmul.f32 %v493, %v519
      %539 = vrot.lane.b32.xlu0 %v529, 73
      %v540 = vpop.permute.xlu0 %539
      %541 = vrot.lane.b32.xlu0 %v530, 73
      %v542 = vpop.permute.xlu0 %541
      %543 = vrot.lane.b32.xlu0 %v531, 73
      %v544 = vpop.permute.xlu0 %543
      %545 = vrot.lane.b32.xlu0 %v532, 73
      %v546 = vpop.permute.xlu0 %545
      %547 = vrot.lane.b32.xlu0 %v533, 73
      %v548 = vpop.permute.xlu0 %547
      %vm549 = vcmask 596992
      %v550 = vsel %vm549, %v540, %v542
      %v551 = vsel %vm549, %v542, %v544
      %v552 = vsel %vm549, %v544, %v546
      %v553 = vsel %vm549, %v546, %v548
      %558 = vst [vmem:[#allocation4] sm:$0xff] %v550
      %559 = vst [vmem:[#allocation4 + $0x8] sm:$0xff] %v551
      %560 = vst [vmem:[#allocation4 + $0x10] sm:$0xff] %v552
      %561 = vst [vmem:[#allocation4 + $0x18] sm:$0xff] %v553
      %v562 = vld [vmem:[#allocation2] sm:$0xff]
      %v563 = vld [vmem:[#allocation2 + $0x8] sm:$0xff]
      %v564 = vld [vmem:[#allocation2 + $0x10] sm:$0xff]
      %v565 = vld [vmem:[#allocation2 + $0x18] sm:$0xff]
      %v566 = vld [vmem:[#allocation2 + $0x20] sm:$0xff]
      %s567 = scalar_lea.vmem %s0, 1
      %v568 = vld [vmem:[%s567] ss:$8 sm:$0xf]
      %v570 = vlaneseq
      %v571 = vshrl.u32 %v570, 7
      %v572 = vsub.s32 0, %v571
      %v573 = vrot.slane %v568, %v572
      %v574 = vlaneseq
      %v575 = vshrl.u32 %v574, 7
      %v576 = vsub.s32 1, %v575
      %v577 = vrot.slane %v568, %v576
      %v578 = vlaneseq
      %v579 = vshrl.u32 %v578, 7
      %v580 = vsub.s32 2, %v579
      %v581 = vrot.slane %v568, %v580
      %v582 = vlaneseq
      %v583 = vshrl.u32 %v582, 7
      %v584 = vsub.s32 3, %v583
      %v585 = vrot.slane %v568, %v584
      %586 = vrot.lane.b32.xlu0 %v573, 56
      %v587 = vpop.permute.xlu0 %586
      %588 = vrot.lane.b32.xlu0 %v577, 56
      %v589 = vpop.permute.xlu0 %588
      %590 = vrot.lane.b32.xlu0 %v581, 56
      %v591 = vpop.permute.xlu0 %590
      %592 = vrot.lane.b32.xlu0 %v585, 56
      %v593 = vpop.permute.xlu0 %592
      %vm594 = vcmask 457728
      %v595 = vsel %vm594, %v587, %v589
      %v596 = vsel %vm594, %v589, %v591
      %v597 = vsel %vm594, %v591, %v593
      %v603 = vmul.f32 %v562, %v587
      %v604 = vmul.f32 %v563, %v595
      %v605 = vmul.f32 %v564, %v596
      %v606 = vmul.f32 %v565, %v597
      %v607 = vmul.f32 %v566, %v593
      %613 = vrot.lane.b32.xlu0 %v603, 72
      %v614 = vpop.permute.xlu0 %613
      %615 = vrot.lane.b32.xlu0 %v604, 72
      %v616 = vpop.permute.xlu0 %615
      %617 = vrot.lane.b32.xlu0 %v605, 72
      %v618 = vpop.permute.xlu0 %617
      %619 = vrot.lane.b32.xlu0 %v606, 72
      %v620 = vpop.permute.xlu0 %619
      %621 = vrot.lane.b32.xlu0 %v607, 72
      %v622 = vpop.permute.xlu0 %621
      %vm623 = vcmask 588800
      %v624 = vsel %vm623, %v614, %v616
      %v625 = vsel %vm623, %v616, %v618
      %v626 = vsel %vm623, %v618, %v620
      %v627 = vsel %vm623, %v620, %v622
      %632 = vst [vmem:[#allocation4 + $0x20] sm:$0xff] %v624
      %633 = vst [vmem:[#allocation4 + $0x28] sm:$0xff] %v625
      %634 = vst [vmem:[#allocation4 + $0x30] sm:$0xff] %v626
      %635 = vst [vmem:[#allocation4 + $0x38] sm:$0xff] %v627
      %v636 = vld [vmem:[#allocation2] sm:$0xff]
      %v637 = vld [vmem:[#allocation2 + $0x8] sm:$0xff]
      %v638 = vld [vmem:[#allocation2 + $0x10] sm:$0xff]
      %v639 = vld [vmem:[#allocation2 + $0x18] sm:$0xff]
      %v640 = vld [vmem:[#allocation2 + $0x20] sm:$0xff]
      %s641 = scalar_lea.vmem %s0, 2
      %v642 = vld [vmem:[%s641] ss:$8 sm:$0xf]
      %v644 = vlaneseq
      %v645 = vshrl.u32 %v644, 7
      %v646 = vsub.s32 0, %v645
      %v647 = vrot.slane %v642, %v646
      %v648 = vlaneseq
      %v649 = vshrl.u32 %v648, 7
      %v650 = vsub.s32 1, %v649
      %v651 = vrot.slane %v642, %v650
      %v652 = vlaneseq
      %v653 = vshrl.u32 %v652, 7
      %v654 = vsub.s32 2, %v653
      %v655 = vrot.slane %v642, %v654
      %v656 = vlaneseq
      %v657 = vshrl.u32 %v656, 7
      %v658 = vsub.s32 3, %v657
      %v659 = vrot.slane %v642, %v658
      %660 = vrot.lane.b32.xlu0 %v647, 57
      %v661 = vpop.permute.xlu0 %660
      %662 = vrot.lane.b32.xlu0 %v651, 57
      %v663 = vpop.permute.xlu0 %662
      %664 = vrot.lane.b32.xlu0 %v655, 57
      %v665 = vpop.permute.xlu0 %664
      %666 = vrot.lane.b32.xlu0 %v659, 57
      %v667 = vpop.permute.xlu0 %666
      %vm668 = vcmask 465920
      %v669 = vsel %vm668, %v661, %v663
      %v670 = vsel %vm668, %v663, %v665
      %v671 = vsel %vm668, %v665, %v667
      %v677 = vmul.f32 %v636, %v661
      %v678 = vmul.f32 %v637, %v669
      %v679 = vmul.f32 %v638, %v670
      %v680 = vmul.f32 %v639, %v671
      %v681 = vmul.f32 %v640, %v667
      %687 = vrot.lane.b32.xlu0 %v677, 71
      %v688 = vpop.permute.xlu0 %687
      %689 = vrot.lane.b32.xlu0 %v678, 71
      %v690 = vpop.permute.xlu0 %689
      %691 = vrot.lane.b32.xlu0 %v679, 71
      %v692 = vpop.permute.xlu0 %691
      %693 = vrot.lane.b32.xlu0 %v680, 71
      %v694 = vpop.permute.xlu0 %693
      %695 = vrot.lane.b32.xlu0 %v681, 71
      %v696 = vpop.permute.xlu0 %695
      %vm697 = vcmask 580608
      %v698 = vsel %vm697, %v688, %v690
      %v699 = vsel %vm697, %v690, %v692
      %v700 = vsel %vm697, %v692, %v694
      %v701 = vsel %vm697, %v694, %v696
      %706 = vst [vmem:[#allocation4 + $0x40] sm:$0xff] %v698
      %707 = vst [vmem:[#allocation4 + $0x48] sm:$0xff] %v699
      %708 = vst [vmem:[#allocation4 + $0x50] sm:$0xff] %v700
      %709 = vst [vmem:[#allocation4 + $0x58] sm:$0xff] %v701
      %v710 = vld [vmem:[#allocation2] sm:$0xff]
      %v711 = vld [vmem:[#allocation2 + $0x8] sm:$0xff]
      %v712 = vld [vmem:[#allocation2 + $0x10] sm:$0xff]
      %v713 = vld [vmem:[#allocation2 + $0x18] sm:$0xff]
      %v714 = vld [vmem:[#allocation2 + $0x20] sm:$0xff]
      %s715 = scalar_lea.vmem %s0, 3
      %v716 = vld [vmem:[%s715] ss:$8 sm:$0xf]
      %v718 = vlaneseq
      %v719 = vshrl.u32 %v718, 7
      %v720 = vsub.s32 0, %v719
      %v721 = vrot.slane %v716, %v720
      %v722 = vlaneseq
      %v723 = vshrl.u32 %v722, 7
      %v724 = vsub.s32 1, %v723
      %v725 = vrot.slane %v716, %v724
      %v726 = vlaneseq
      %v727 = vshrl.u32 %v726, 7
      %v728 = vsub.s32 2, %v727
      %v729 = vrot.slane %v716, %v728
      %v730 = vlaneseq
      %v731 = vshrl.u32 %v730, 7
      %v732 = vsub.s32 3, %v731
      %v733 = vrot.slane %v716, %v732
      %734 = vrot.lane.b32.xlu0 %v721, 63
      %v735 = vpop.permute.xlu0 %734
      %736 = vrot.lane.b32.xlu0 %v725, 63
      %v737 = vpop.permute.xlu0 %736
      %738 = vrot.lane.b32.xlu0 %v729, 63
      %v739 = vpop.permute.xlu0 %738
      %740 = vrot.lane.b32.xlu0 %v733, 63
      %v741 = vpop.permute.xlu0 %740
      %vm742 = vcmask 515072
      %v743 = vsel %vm742, %v735, %v737
      %v744 = vsel %vm742, %v737, %v739
      %v745 = vsel %vm742, %v739, %v741
      %v751 = vmul.f32 %v710, %v735
      %v752 = vmul.f32 %v711, %v743
      %v753 = vmul.f32 %v712, %v744
      %v754 = vmul.f32 %v713, %v745
      %v755 = vmul.f32 %v714, %v741
      %761 = vrot.lane.b32.xlu0 %v751, 65
      %v762 = vpop.permute.xlu0 %761
      %763 = vrot.lane.b32.xlu0 %v752, 65
      %v764 = vpop.permute.xlu0 %763
      %765 = vrot.lane.b32.xlu0 %v753, 65
      %v766 = vpop.permute.xlu0 %765
      %767 = vrot.lane.b32.xlu0 %v754, 65
      %v768 = vpop.permute.xlu0 %767
      %769 = vrot.lane.b32.xlu0 %v755, 65
      %v770 = vpop.permute.xlu0 %769
      %vm771 = vcmask 531456
      %v772 = vsel %vm771, %v762, %v764
      %v773 = vsel %vm771, %v764, %v766
      %v774 = vsel %vm771, %v766, %v768
      %v775 = vsel %vm771, %v768, %v770
      %780 = vst [vmem:[#allocation4 + $0x60] sm:$0xff] %v772
      %781 = vst [vmem:[#allocation4 + $0x68] sm:$0xff] %v773
      %782 = vst [vmem:[#allocation4 + $0x70] sm:$0xff] %v774
      %783 = vst [vmem:[#allocation4 + $0x78] sm:$0xff] %v775
      %v784 = vld [vmem:[#allocation2] sm:$0xff]
      %v785 = vld [vmem:[#allocation2 + $0x8] sm:$0xff]
      %v786 = vld [vmem:[#allocation2 + $0x10] sm:$0xff]
      %v787 = vld [vmem:[#allocation2 + $0x18] sm:$0xff]
      %v788 = vld [vmem:[#allocation2 + $0x20] sm:$0xff]
      %s789 = scalar_lea.vmem %s0, 4
      %v790 = vld [vmem:[%s789] ss:$8 sm:$0xf]
      %v792 = vlaneseq
      %v793 = vshrl.u32 %v792, 7
      %v794 = vsub.s32 0, %v793
      %v795 = vrot.slane %v790, %v794
      %v796 = vlaneseq
      %v797 = vshrl.u32 %v796, 7
      %v798 = vsub.s32 1, %v797
      %v799 = vrot.slane %v790, %v798
      %v800 = vlaneseq
      %v801 = vshrl.u32 %v800, 7
      %v802 = vsub.s32 2, %v801
      %v803 = vrot.slane %v790, %v802
      %v804 = vlaneseq
      %v805 = vshrl.u32 %v804, 7
      %v806 = vsub.s32 3, %v805
      %v807 = vrot.slane %v790, %v806
      %808 = vrot.lane.b32.xlu0 %v795, 64
      %v809 = vpop.permute.xlu0 %808
      %810 = vrot.lane.b32.xlu0 %v799, 64
      %v811 = vpop.permute.xlu0 %810
      %812 = vrot.lane.b32.xlu0 %v803, 64
      %v813 = vpop.permute.xlu0 %812
      %814 = vrot.lane.b32.xlu0 %v807, 64
      %v815 = vpop.permute.xlu0 %814
      %vm816 = vcmask 523264
      %v817 = vsel %vm816, %v809, %v811
      %v818 = vsel %vm816, %v811, %v813
      %v819 = vsel %vm816, %v813, %v815
      %v825 = vmul.f32 %v784, %v809
      %v826 = vmul.f32 %v785, %v817
      %v827 = vmul.f32 %v786, %v818
      %v828 = vmul.f32 %v787, %v819
      %v829 = vmul.f32 %v788, %v815
      %835 = vrot.lane.b32.xlu0 %v825, 64
      %v836 = vpop.permute.xlu0 %835
      %837 = vrot.lane.b32.xlu0 %v826, 64
      %v838 = vpop.permute.xlu0 %837
      %839 = vrot.lane.b32.xlu0 %v827, 64
      %v840 = vpop.permute.xlu0 %839
      %841 = vrot.lane.b32.xlu0 %v828, 64
      %v842 = vpop.permute.xlu0 %841
      %843 = vrot.lane.b32.xlu0 %v829, 64
      %v844 = vpop.permute.xlu0 %843
      %v845 = vsel %vm816, %v836, %v838
      %v846 = vsel %vm816, %v838, %v840
      %v847 = vsel %vm816, %v840, %v842
      %v848 = vsel %vm816, %v842, %v844
      %853 = vst [vmem:[#allocation4 + $0x80] sm:$0xff] %v845
      %854 = vst [vmem:[#allocation4 + $0x88] sm:$0xff] %v846
      %855 = vst [vmem:[#allocation4 + $0x90] sm:$0xff] %v847
      %856 = vst [vmem:[#allocation4 + $0x98] sm:$0xff] %v848
      %v857 = vld [vmem:[#allocation2] sm:$0xff]
      %v858 = vld [vmem:[#allocation2 + $0x8] sm:$0xff]
      %v859 = vld [vmem:[#allocation2 + $0x10] sm:$0xff]
      %v860 = vld [vmem:[#allocation2 + $0x18] sm:$0xff]
      %v861 = vld [vmem:[#allocation2 + $0x20] sm:$0xff]
      %s862 = scalar_lea.vmem %s0, 5
      %v863 = vld [vmem:[%s862] ss:$8 sm:$0xf]
      %v865 = vlaneseq
      %v866 = vshrl.u32 %v865, 7
      %v867 = vsub.s32 0, %v866
      %v868 = vrot.slane %v863, %v867
      %v869 = vlaneseq
      %v870 = vshrl.u32 %v869, 7
      %v871 = vsub.s32 1, %v870
      %v872 = vrot.slane %v863, %v871
      %v873 = vlaneseq
      %v874 = vshrl.u32 %v873, 7
      %v875 = vsub.s32 2, %v874
      %v876 = vrot.slane %v863, %v875
      %v877 = vlaneseq
      %v878 = vshrl.u32 %v877, 7
      %v879 = vsub.s32 3, %v878
      %v880 = vrot.slane %v863, %v879
      %881 = vrot.lane.b32.xlu0 %v868, 65
      %v882 = vpop.permute.xlu0 %881
      %883 = vrot.lane.b32.xlu0 %v872, 65
      %v884 = vpop.permute.xlu0 %883
      %885 = vrot.lane.b32.xlu0 %v876, 65
      %v886 = vpop.permute.xlu0 %885
      %887 = vrot.lane.b32.xlu0 %v880, 65
      %v888 = vpop.permute.xlu0 %887
      %v889 = vsel %vm771, %v882, %v884
      %v890 = vsel %vm771, %v884, %v886
      %v891 = vsel %vm771, %v886, %v888
      %v897 = vmul.f32 %v857, %v882
      %v898 = vmul.f32 %v858, %v889
      %v899 = vmul.f32 %v859, %v890
      %v900 = vmul.f32 %v860, %v891
      %v901 = vmul.f32 %v861, %v888
      %907 = vrot.lane.b32.xlu0 %v897, 63
      %v908 = vpop.permute.xlu0 %907
      %909 = vrot.lane.b32.xlu0 %v898, 63
      %v910 = vpop.permute.xlu0 %909
      %911 = vrot.lane.b32.xlu0 %v899, 63
      %v912 = vpop.permute.xlu0 %911
      %913 = vrot.lane.b32.xlu0 %v900, 63
      %v914 = vpop.permute.xlu0 %913
      %915 = vrot.lane.b32.xlu0 %v901, 63
      %v916 = vpop.permute.xlu0 %915
      %v917 = vsel %vm742, %v908, %v910
      %v918 = vsel %vm742, %v910, %v912
      %v919 = vsel %vm742, %v912, %v914
      %v920 = vsel %vm742, %v914, %v916
      %925 = vst [vmem:[#allocation4 + $0xa0] sm:$0xff] %v917
      %926 = vst [vmem:[#allocation4 + $0xa8] sm:$0xff] %v918
      %927 = vst [vmem:[#allocation4 + $0xb0] sm:$0xff] %v919
      %928 = vst [vmem:[#allocation4 + $0xb8] sm:$0xff] %v920
      %v929 = vld [vmem:[#allocation2] sm:$0xff]
      %v930 = vld [vmem:[#allocation2 + $0x8] sm:$0xff]
      %v931 = vld [vmem:[#allocation2 + $0x10] sm:$0xff]
      %v932 = vld [vmem:[#allocation2 + $0x18] sm:$0xff]
      %v933 = vld [vmem:[#allocation2 + $0x20] sm:$0xff]
      %s934 = scalar_lea.vmem %s0, 6
      %v935 = vld [vmem:[%s934] ss:$8 sm:$0xf]
      %v937 = vlaneseq
      %v938 = vshrl.u32 %v937, 7
      %v939 = vsub.s32 0, %v938
      %v940 = vrot.slane %v935, %v939
      %v941 = vlaneseq
      %v942 = vshrl.u32 %v941, 7
      %v943 = vsub.s32 1, %v942
      %v944 = vrot.slane %v935, %v943
      %v945 = vlaneseq
      %v946 = vshrl.u32 %v945, 7
      %v947 = vsub.s32 2, %v946
      %v948 = vrot.slane %v935, %v947
      %v949 = vlaneseq
      %v950 = vshrl.u32 %v949, 7
      %v951 = vsub.s32 3, %v950
      %v952 = vrot.slane %v935, %v951
      %953 = vrot.lane.b32.xlu0 %v940, 71
      %v954 = vpop.permute.xlu0 %953
      %955 = vrot.lane.b32.xlu0 %v944, 71
      %v956 = vpop.permute.xlu0 %955
      %957 = vrot.lane.b32.xlu0 %v948, 71
      %v958 = vpop.permute.xlu0 %957
      %959 = vrot.lane.b32.xlu0 %v952, 71
      %v960 = vpop.permute.xlu0 %959
      %v961 = vsel %vm697, %v954, %v956
      %v962 = vsel %vm697, %v956, %v958
      %v963 = vsel %vm697, %v958, %v960
      %v969 = vmul.f32 %v929, %v954
      %v970 = vmul.f32 %v930, %v961
      %v971 = vmul.f32 %v931, %v962
      %v972 = vmul.f32 %v932, %v963
      %v973 = vmul.f32 %v933, %v960
      %979 = vrot.lane.b32.xlu0 %v969, 57
      %v980 = vpop.permute.xlu0 %979
      %981 = vrot.lane.b32.xlu0 %v970, 57
      %v982 = vpop.permute.xlu0 %981
      %983 = vrot.lane.b32.xlu0 %v971, 57
      %v984 = vpop.permute.xlu0 %983
      %985 = vrot.lane.b32.xlu0 %v972, 57
      %v986 = vpop.permute.xlu0 %985
      %987 = vrot.lane.b32.xlu0 %v973, 57
      %v988 = vpop.permute.xlu0 %987
      %v989 = vsel %vm668, %v980, %v982
      %v990 = vsel %vm668, %v982, %v984
      %v991 = vsel %vm668, %v984, %v986
      %v992 = vsel %vm668, %v986, %v988
      %997 = vst [vmem:[#allocation4 + $0xc0] sm:$0xff] %v989
      %998 = vst [vmem:[#allocation4 + $0xc8] sm:$0xff] %v990
      %999 = vst [vmem:[#allocation4 + $0xd0] sm:$0xff] %v991
      %1000 = vst [vmem:[#allocation4 + $0xd8] sm:$0xff] %v992
      %v1001 = vld [vmem:[#allocation2] sm:$0xff]
      %v1002 = vld [vmem:[#allocation2 + $0x8] sm:$0xff]
      %v1003 = vld [vmem:[#allocation2 + $0x10] sm:$0xff]
      %v1004 = vld [vmem:[#allocation2 + $0x18] sm:$0xff]
      %v1005 = vld [vmem:[#allocation2 + $0x20] sm:$0xff]
      %s1006 = scalar_lea.vmem %s0, 7
      %v1007 = vld [vmem:[%s1006] ss:$8 sm:$0xf]
      %v1009 = vlaneseq
      %v1010 = vshrl.u32 %v1009, 7
      %v1011 = vsub.s32 0, %v1010
      %v1012 = vrot.slane %v1007, %v1011
      %v1013 = vlaneseq
      %v1014 = vshrl.u32 %v1013, 7
      %v1015 = vsub.s32 1, %v1014
      %v1016 = vrot.slane %v1007, %v1015
      %v1017 = vlaneseq
      %v1018 = vshrl.u32 %v1017, 7
      %v1019 = vsub.s32 2, %v1018
      %v1020 = vrot.slane %v1007, %v1019
      %v1021 = vlaneseq
      %v1022 = vshrl.u32 %v1021, 7
      %v1023 = vsub.s32 3, %v1022
      %v1024 = vrot.slane %v1007, %v1023
      %1025 = vrot.lane.b32.xlu0 %v1012, 72
      %v1026 = vpop.permute.xlu0 %1025
      %1027 = vrot.lane.b32.xlu0 %v1016, 72
      %v1028 = vpop.permute.xlu0 %1027
      %1029 = vrot.lane.b32.xlu0 %v1020, 72
      %v1030 = vpop.permute.xlu0 %1029
      %1031 = vrot.lane.b32.xlu0 %v1024, 72
      %v1032 = vpop.permute.xlu0 %1031
      %v1033 = vsel %vm623, %v1026, %v1028
      %v1034 = vsel %vm623, %v1028, %v1030
      %v1035 = vsel %vm623, %v1030, %v1032
      %v1041 = vmul.f32 %v1001, %v1026
      %v1042 = vmul.f32 %v1002, %v1033
      %v1043 = vmul.f32 %v1003, %v1034
      %v1044 = vmul.f32 %v1004, %v1035
      %v1045 = vmul.f32 %v1005, %v1032
      %1051 = vrot.lane.b32.xlu0 %v1041, 56
      %v1052 = vpop.permute.xlu0 %1051
      %1053 = vrot.lane.b32.xlu0 %v1042, 56
      %v1054 = vpop.permute.xlu0 %1053
      %1055 = vrot.lane.b32.xlu0 %v1043, 56
      %v1056 = vpop.permute.xlu0 %1055
      %1057 = vrot.lane.b32.xlu0 %v1044, 56
      %v1058 = vpop.permute.xlu0 %1057
      %1059 = vrot.lane.b32.xlu0 %v1045, 56
      %v1060 = vpop.permute.xlu0 %1059
      %v1061 = vsel %vm594, %v1052, %v1054
      %v1062 = vsel %vm594, %v1054, %v1056
      %v1063 = vsel %vm594, %v1056, %v1058
      %v1064 = vsel %vm594, %v1058, %v1060
      %1069 = vst [vmem:[#allocation4 + $0xe0] sm:$0xff] %v1061
      %1070 = vst [vmem:[#allocation4 + $0xe8] sm:$0xff] %v1062
      %1071 = vst [vmem:[#allocation4 + $0xf0] sm:$0xff] %v1063
      %1072 = vst [vmem:[#allocation4 + $0xf8] sm:$0xff] %v1064
      %v1073 = vld [vmem:[#allocation2] sm:$0xff]
      %v1074 = vld [vmem:[#allocation2 + $0x8] sm:$0xff]
      %v1075 = vld [vmem:[#allocation2 + $0x10] sm:$0xff]
      %v1076 = vld [vmem:[#allocation2 + $0x18] sm:$0xff]
      %v1077 = vld [vmem:[#allocation2 + $0x20] sm:$0xff]
      %s1078 = scalar_lea.vmem %s0, 32
      %v1079 = vld [vmem:[%s1078] ss:$8 sm:$0xf]
      %v1081 = vlaneseq
      %v1082 = vshrl.u32 %v1081, 7
      %v1083 = vsub.s32 0, %v1082
      %v1084 = vrot.slane %v1079, %v1083
      %v1085 = vlaneseq
      %v1086 = vshrl.u32 %v1085, 7
      %v1087 = vsub.s32 1, %v1086
      %v1088 = vrot.slane %v1079, %v1087
      %v1089 = vlaneseq
      %v1090 = vshrl.u32 %v1089, 7
      %v1091 = vsub.s32 2, %v1090
      %v1092 = vrot.slane %v1079, %v1091
      %v1093 = vlaneseq
      %v1094 = vshrl.u32 %v1093, 7
      %v1095 = vsub.s32 3, %v1094
      %v1096 = vrot.slane %v1079, %v1095
      %1097 = vrot.lane.b32.xlu0 %v1084, 73
      %v1098 = vpop.permute.xlu0 %1097
      %1099 = vrot.lane.b32.xlu0 %v1088, 73
      %v1100 = vpop.permute.xlu0 %1099
      %1101 = vrot.lane.b32.xlu0 %v1092, 73
      %v1102 = vpop.permute.xlu0 %1101
      %1103 = vrot.lane.b32.xlu0 %v1096, 73
      %v1104 = vpop.permute.xlu0 %1103
      %v1105 = vsel %vm549, %v1098, %v1100
      %v1106 = vsel %vm549, %v1100, %v1102
      %v1107 = vsel %vm549, %v1102, %v1104
      %v1113 = vmul.f32 %v1073, %v1098
      %v1114 = vmul.f32 %v1074, %v1105
      %v1115 = vmul.f32 %v1075, %v1106
      %v1116 = vmul.f32 %v1076, %v1107
      %v1117 = vmul.f32 %v1077, %v1104
      %1123 = vrot.lane.b32.xlu0 %v1113, 55
      %v1124 = vpop.permute.xlu0 %1123
      %1125 = vrot.lane.b32.xlu0 %v1114, 55
      %v1126 = vpop.permute.xlu0 %1125
      %1127 = vrot.lane.b32.xlu0 %v1115, 55
      %v1128 = vpop.permute.xlu0 %1127
      %1129 = vrot.lane.b32.xlu0 %v1116, 55
      %v1130 = vpop.permute.xlu0 %1129
      %1131 = vrot.lane.b32.xlu0 %v1117, 55
      %v1132 = vpop.permute.xlu0 %1131
      %v1133 = vsel %vm520, %v1124, %v1126
      %v1134 = vsel %vm520, %v1126, %v1128
      %v1135 = vsel %vm520, %v1128, %v1130
      %v1136 = vsel %vm520, %v1130, %v1132
      %1141 = vst [vmem:[#allocation4 + $0x100] sm:$0xff] %v1133
      %1142 = vst [vmem:[#allocation4 + $0x108] sm:$0xff] %v1134
      %1143 = vst [vmem:[#allocation4 + $0x110] sm:$0xff] %v1135
      %1144 = vst [vmem:[#allocation4 + $0x118] sm:$0xff] %v1136
      %v1145 = vld [vmem:[#allocation2] sm:$0xff]
      %v1146 = vld [vmem:[#allocation2 + $0x8] sm:$0xff]
      %v1147 = vld [vmem:[#allocation2 + $0x10] sm:$0xff]
      %v1148 = vld [vmem:[#allocation2 + $0x18] sm:$0xff]
      %v1149 = vld [vmem:[#allocation2 + $0x20] sm:$0xff]
      %s1150 = scalar_lea.vmem %s0, 33
      %v1151 = vld [vmem:[%s1150] ss:$8 sm:$0xf]
      %v1153 = vlaneseq
      %v1154 = vshrl.u32 %v1153, 7
      %v1155 = vsub.s32 0, %v1154
      %v1156 = vrot.slane %v1151, %v1155
      %v1157 = vlaneseq
      %v1158 = vshrl.u32 %v1157, 7
      %v1159 = vsub.s32 1, %v1158
      %v1160 = vrot.slane %v1151, %v1159
      %v1161 = vlaneseq
      %v1162 = vshrl.u32 %v1161, 7
      %v1163 = vsub.s32 2, %v1162
      %v1164 = vrot.slane %v1151, %v1163
      %v1165 = vlaneseq
      %v1166 = vshrl.u32 %v1165, 7
      %v1167 = vsub.s32 3, %v1166
      %v1168 = vrot.slane %v1151, %v1167
      %1169 = vrot.lane.b32.xlu0 %v1156, 119
      %v1170 = vpop.permute.xlu0 %1169
      %1171 = vrot.lane.b32.xlu0 %v1160, 119
      %v1172 = vpop.permute.xlu0 %1171
      %1173 = vrot.lane.b32.xlu0 %v1164, 119
      %v1174 = vpop.permute.xlu0 %1173
      %1175 = vrot.lane.b32.xlu0 %v1168, 119
      %v1176 = vpop.permute.xlu0 %1175
      %vm1177 = vcmask 973824
      %v1178 = vsel %vm1177, %v1170, %v1172
      %v1179 = vsel %vm1177, %v1172, %v1174
      %v1180 = vsel %vm1177, %v1174, %v1176
      %v1186 = vmul.f32 %v1145, %v1170
      %v1187 = vmul.f32 %v1146, %v1178
      %v1188 = vmul.f32 %v1147, %v1179
      %v1189 = vmul.f32 %v1148, %v1180
      %v1190 = vmul.f32 %v1149, %v1176
      %1196 = vrot.lane.b32.xlu0 %v1186, 9
      %v1197 = vpop.permute.xlu0 %1196
      %1198 = vrot.lane.b32.xlu0 %v1187, 9
      %v1199 = vpop.permute.xlu0 %1198
      %1200 = vrot.lane.b32.xlu0 %v1188, 9
      %v1201 = vpop.permute.xlu0 %1200
      %1202 = vrot.lane.b32.xlu0 %v1189, 9
      %v1203 = vpop.permute.xlu0 %1202
      %1204 = vrot.lane.b32.xlu0 %v1190, 9
      %v1205 = vpop.permute.xlu0 %1204
      %vm1206 = vcmask 72704
      %v1207 = vsel %vm1206, %v1197, %v1199
      %v1208 = vsel %vm1206, %v1199, %v1201
      %v1209 = vsel %vm1206, %v1201, %v1203
      %v1210 = vsel %vm1206, %v1203, %v1205
      %1215 = vst [vmem:[#allocation4 + $0x120] sm:$0xff] %v1207
      %1216 = vst [vmem:[#allocation4 + $0x128] sm:$0xff] %v1208
      %1217 = vst [vmem:[#allocation4 + $0x130] sm:$0xff] %v1209
      %1218 = vst [vmem:[#allocation4 + $0x138] sm:$0xff] %v1210
      %v1219 = vld [vmem:[#allocation2] sm:$0xff]
      %v1220 = vld [vmem:[#allocation2 + $0x8] sm:$0xff]
      %v1221 = vld [vmem:[#allocation2 + $0x10] sm:$0xff]
      %v1222 = vld [vmem:[#allocation2 + $0x18] sm:$0xff]
      %v1223 = vld [vmem:[#allocation2 + $0x20] sm:$0xff]
      %s1224 = scalar_lea.vmem %s0, 34
      %v1225 = vld [vmem:[%s1224] ss:$8 sm:$0xf]
      %v1227 = vlaneseq
      %v1228 = vshrl.u32 %v1227, 7
      %v1229 = vsub.s32 0, %v1228
      %v1230 = vrot.slane %v1225, %v1229
      %v1231 = vlaneseq
      %v1232 = vshrl.u32 %v1231, 7
      %v1233 = vsub.s32 1, %v1232
      %v1234 = vrot.slane %v1225, %v1233
      %v1235 = vlaneseq
      %v1236 = vshrl.u32 %v1235, 7
      %v1237 = vsub.s32 2, %v1236
      %v1238 = vrot.slane %v1225, %v1237
      %v1239 = vlaneseq
      %v1240 = vshrl.u32 %v1239, 7
      %v1241 = vsub.s32 3, %v1240
      %v1242 = vrot.slane %v1225, %v1241
      %1243 = vrot.lane.b32.xlu0 %v1230, 120
      %v1244 = vpop.permute.xlu0 %1243
      %1245 = vrot.lane.b32.xlu0 %v1234, 120
      %v1246 = vpop.permute.xlu0 %1245
      %1247 = vrot.lane.b32.xlu0 %v1238, 120
      %v1248 = vpop.permute.xlu0 %1247
      %1249 = vrot.lane.b32.xlu0 %v1242, 120
      %v1250 = vpop.permute.xlu0 %1249
      %vm1251 = vcmask 982016
      %v1252 = vsel %vm1251, %v1244, %v1246
      %v1253 = vsel %vm1251, %v1246, %v1248
      %v1254 = vsel %vm1251, %v1248, %v1250
      %v1260 = vmul.f32 %v1219, %v1244
      %v1261 = vmul.f32 %v1220, %v1252
      %v1262 = vmul.f32 %v1221, %v1253
      %v1263 = vmul.f32 %v1222, %v1254
      %v1264 = vmul.f32 %v1223, %v1250
      %1270 = vrot.lane.b32.xlu0 %v1260, 8
      %v1271 = vpop.permute.xlu0 %1270
      %1272 = vrot.lane.b32.xlu0 %v1261, 8
      %v1273 = vpop.permute.xlu0 %1272
      %1274 = vrot.lane.b32.xlu0 %v1262, 8
      %v1275 = vpop.permute.xlu0 %1274
      %1276 = vrot.lane.b32.xlu0 %v1263, 8
      %v1277 = vpop.permute.xlu0 %1276
      %1278 = vrot.lane.b32.xlu0 %v1264, 8
      %v1279 = vpop.permute.xlu0 %1278
      %vm1280 = vcmask 64512
      %v1281 = vsel %vm1280, %v1271, %v1273
      %v1282 = vsel %vm1280, %v1273, %v1275
      %v1283 = vsel %vm1280, %v1275, %v1277
      %v1284 = vsel %vm1280, %v1277, %v1279
      %1289 = vst [vmem:[#allocation4 + $0x140] sm:$0xff] %v1281
      %1290 = vst [vmem:[#allocation4 + $0x148] sm:$0xff] %v1282
      %1291 = vst [vmem:[#allocation4 + $0x150] sm:$0xff] %v1283
      %1292 = vst [vmem:[#allocation4 + $0x158] sm:$0xff] %v1284
      %v1293 = vld [vmem:[#allocation2] sm:$0xff]
      %v1294 = vld [vmem:[#allocation2 + $0x8] sm:$0xff]
      %v1295 = vld [vmem:[#allocation2 + $0x10] sm:$0xff]
      %v1296 = vld [vmem:[#allocation2 + $0x18] sm:$0xff]
      %v1297 = vld [vmem:[#allocation2 + $0x20] sm:$0xff]
      %s1298 = scalar_lea.vmem %s0, 35
      %v1299 = vld [vmem:[%s1298] ss:$8 sm:$0xf]
      %v1301 = vlaneseq
      %v1302 = vshrl.u32 %v1301, 7
      %v1303 = vsub.s32 0, %v1302
      %v1304 = vrot.slane %v1299, %v1303
      %v1305 = vlaneseq
      %v1306 = vshrl.u32 %v1305, 7
      %v1307 = vsub.s32 1, %v1306
      %v1308 = vrot.slane %v1299, %v1307
      %v1309 = vlaneseq
      %v1310 = vshrl.u32 %v1309, 7
      %v1311 = vsub.s32 2, %v1310
      %v1312 = vrot.slane %v1299, %v1311
      %v1313 = vlaneseq
      %v1314 = vshrl.u32 %v1313, 7
      %v1315 = vsub.s32 3, %v1314
      %v1316 = vrot.slane %v1299, %v1315
      %1317 = vrot.lane.b32.xlu0 %v1304, 121
      %v1318 = vpop.permute.xlu0 %1317
      %1319 = vrot.lane.b32.xlu0 %v1308, 121
      %v1320 = vpop.permute.xlu0 %1319
      %1321 = vrot.lane.b32.xlu0 %v1312, 121
      %v1322 = vpop.permute.xlu0 %1321
      %1323 = vrot.lane.b32.xlu0 %v1316, 121
      %v1324 = vpop.permute.xlu0 %1323
      %vm1325 = vcmask 990208
      %v1326 = vsel %vm1325, %v1318, %v1320
      %v1327 = vsel %vm1325, %v1320, %v1322
      %v1328 = vsel %vm1325, %v1322, %v1324
      %v1334 = vmul.f32 %v1293, %v1318
      %v1335 = vmul.f32 %v1294, %v1326
      %v1336 = vmul.f32 %v1295, %v1327
      %v1337 = vmul.f32 %v1296, %v1328
      %v1338 = vmul.f32 %v1297, %v1324
      %1344 = vrot.lane.b32.xlu0 %v1334, 7
      %v1345 = vpop.permute.xlu0 %1344
      %1346 = vrot.lane.b32.xlu0 %v1335, 7
      %v1347 = vpop.permute.xlu0 %1346
      %1348 = vrot.lane.b32.xlu0 %v1336, 7
      %v1349 = vpop.permute.xlu0 %1348
      %1350 = vrot.lane.b32.xlu0 %v1337, 7
      %v1351 = vpop.permute.xlu0 %1350
      %1352 = vrot.lane.b32.xlu0 %v1338, 7
      %v1353 = vpop.permute.xlu0 %1352
      %vm1354 = vcmask 56320
      %v1355 = vsel %vm1354, %v1345, %v1347
      %v1356 = vsel %vm1354, %v1347, %v1349
      %v1357 = vsel %vm1354, %v1349, %v1351
      %v1358 = vsel %vm1354, %v1351, %v1353
      %1363 = vst [vmem:[#allocation4 + $0x160] sm:$0xff] %v1355
      %1364 = vst [vmem:[#allocation4 + $0x168] sm:$0xff] %v1356
      %1365 = vst [vmem:[#allocation4 + $0x170] sm:$0xff] %v1357
      %1366 = vst [vmem:[#allocation4 + $0x178] sm:$0xff] %v1358
      %v1367 = vld [vmem:[#allocation2] sm:$0xff]
      %v1368 = vld [vmem:[#allocation2 + $0x8] sm:$0xff]
      %v1369 = vld [vmem:[#allocation2 + $0x10] sm:$0xff]
      %v1370 = vld [vmem:[#allocation2 + $0x18] sm:$0xff]
      %v1371 = vld [vmem:[#allocation2 + $0x20] sm:$0xff]
      %s1372 = scalar_lea.vmem %s0, 36
      %v1373 = vld [vmem:[%s1372] ss:$8 sm:$0xf]
      %v1375 = vlaneseq
      %v1376 = vshrl.u32 %v1375, 7
      %v1377 = vsub.s32 0, %v1376
      %v1378 = vrot.slane %v1373, %v1377
      %v1379 = vlaneseq
      %v1380 = vshrl.u32 %v1379, 7
      %v1381 = vsub.s32 1, %v1380
      %v1382 = vrot.slane %v1373, %v1381
      %v1383 = vlaneseq
      %v1384 = vshrl.u32 %v1383, 7
      %v1385 = vsub.s32 2, %v1384
      %v1386 = vrot.slane %v1373, %v1385
      %v1387 = vlaneseq
      %v1388 = vshrl.u32 %v1387, 7
      %v1389 = vsub.s32 3, %v1388
      %v1390 = vrot.slane %v1373, %v1389
      %1391 = vrot.lane.b32.xlu0 %v1378, 127
      %v1392 = vpop.permute.xlu0 %1391
      %1393 = vrot.lane.b32.xlu0 %v1382, 127
      %v1394 = vpop.permute.xlu0 %1393
      %1395 = vrot.lane.b32.xlu0 %v1386, 127
      %v1396 = vpop.permute.xlu0 %1395
      %1397 = vrot.lane.b32.xlu0 %v1390, 127
      %v1398 = vpop.permute.xlu0 %1397
      %vm1399 = vcmask 1039360
      %v1400 = vsel %vm1399, %v1392, %v1394
      %v1401 = vsel %vm1399, %v1394, %v1396
      %v1402 = vsel %vm1399, %v1396, %v1398
      %v1408 = vmul.f32 %v1367, %v1392
      %v1409 = vmul.f32 %v1368, %v1400
      %v1410 = vmul.f32 %v1369, %v1401
      %v1411 = vmul.f32 %v1370, %v1402
      %v1412 = vmul.f32 %v1371, %v1398
      %1418 = vrot.lane.b32.xlu0 %v1408, 1
      %v1419 = vpop.permute.xlu0 %1418
      %1420 = vrot.lane.b32.xlu0 %v1409, 1
      %v1421 = vpop.permute.xlu0 %1420
      %1422 = vrot.lane.b32.xlu0 %v1410, 1
      %v1423 = vpop.permute.xlu0 %1422
      %1424 = vrot.lane.b32.xlu0 %v1411, 1
      %v1425 = vpop.permute.xlu0 %1424
      %1426 = vrot.lane.b32.xlu0 %v1412, 1
      %v1427 = vpop.permute.xlu0 %1426
      %vm1428 = vcmask 7168
      %v1429 = vsel %vm1428, %v1419, %v1421
      %v1430 = vsel %vm1428, %v1421, %v1423
      %v1431 = vsel %vm1428, %v1423, %v1425
      %v1432 = vsel %vm1428, %v1425, %v1427
      %1437 = vst [vmem:[#allocation4 + $0x180] sm:$0xff] %v1429
      %1438 = vst [vmem:[#allocation4 + $0x188] sm:$0xff] %v1430
      %1439 = vst [vmem:[#allocation4 + $0x190] sm:$0xff] %v1431
      %1440 = vst [vmem:[#allocation4 + $0x198] sm:$0xff] %v1432
      %v1441 = vld [vmem:[#allocation2 + $0x8] sm:$0xff]
      %v1442 = vld [vmem:[#allocation2 + $0x10] sm:$0xff]
      %v1443 = vld [vmem:[#allocation2 + $0x18] sm:$0xff]
      %v1444 = vld [vmem:[#allocation2 + $0x20] sm:$0xff]
      %s1445 = scalar_lea.vmem %s0, 37
      %v1446 = vld [vmem:[%s1445] ss:$8 sm:$0xf]
      %v1448 = vlaneseq
      %v1449 = vshrl.u32 %v1448, 7
      %v1450 = vsub.s32 0, %v1449
      %v1451 = vrot.slane %v1446, %v1450
      %v1452 = vlaneseq
      %v1453 = vshrl.u32 %v1452, 7
      %v1454 = vsub.s32 1, %v1453
      %v1455 = vrot.slane %v1446, %v1454
      %v1456 = vlaneseq
      %v1457 = vshrl.u32 %v1456, 7
      %v1458 = vsub.s32 2, %v1457
      %v1459 = vrot.slane %v1446, %v1458
      %v1460 = vlaneseq
      %v1461 = vshrl.u32 %v1460, 7
      %v1462 = vsub.s32 3, %v1461
      %v1463 = vrot.slane %v1446, %v1462
      %v1468 = vmul.f32 %v1441, %v1451
      %v1469 = vmul.f32 %v1442, %v1455
      %v1470 = vmul.f32 %v1443, %v1459
      %v1471 = vmul.f32 %v1444, %v1463
      %1472 = vst [vmem:[#allocation4 + $0x1a0] sm:$0xff] %v1468
      %1473 = vst [vmem:[#allocation4 + $0x1a8] sm:$0xff] %v1469
      %1474 = vst [vmem:[#allocation4 + $0x1b0] sm:$0xff] %v1470
      %1475 = vst [vmem:[#allocation4 + $0x1b8] sm:$0xff] %v1471
      %v1476 = vld [vmem:[#allocation2 + $0x8] sm:$0xff]
      %v1477 = vld [vmem:[#allocation2 + $0x10] sm:$0xff]
      %v1478 = vld [vmem:[#allocation2 + $0x18] sm:$0xff]
      %v1479 = vld [vmem:[#allocation2 + $0x20] sm:$0xff]
      %v1480 = vld [vmem:[#allocation2 + $0x28] sm:$0xff]
      %s1481 = scalar_lea.vmem %s0, 38
      %v1482 = vld [vmem:[%s1481] ss:$8 sm:$0xf]
      %v1484 = vlaneseq
      %v1485 = vshrl.u32 %v1484, 7
      %v1486 = vsub.s32 0, %v1485
      %v1487 = vrot.slane %v1482, %v1486
      %v1488 = vlaneseq
      %v1489 = vshrl.u32 %v1488, 7
      %v1490 = vsub.s32 1, %v1489
      %v1491 = vrot.slane %v1482, %v1490
      %v1492 = vlaneseq
      %v1493 = vshrl.u32 %v1492, 7
      %v1494 = vsub.s32 2, %v1493
      %v1495 = vrot.slane %v1482, %v1494
      %v1496 = vlaneseq
      %v1497 = vshrl.u32 %v1496, 7
      %v1498 = vsub.s32 3, %v1497
      %v1499 = vrot.slane %v1482, %v1498
      %1500 = vrot.lane.b32.xlu0 %v1487, 1
      %v1501 = vpop.permute.xlu0 %1500
      %1502 = vrot.lane.b32.xlu0 %v1491, 1
      %v1503 = vpop.permute.xlu0 %1502
      %1504 = vrot.lane.b32.xlu0 %v1495, 1
      %v1505 = vpop.permute.xlu0 %1504
      %1506 = vrot.lane.b32.xlu0 %v1499, 1
      %v1507 = vpop.permute.xlu0 %1506
      %v1508 = vsel %vm1428, %v1501, %v1503
      %v1509 = vsel %vm1428, %v1503, %v1505
      %v1510 = vsel %vm1428, %v1505, %v1507
      %v1516 = vmul.f32 %v1476, %v1501
      %v1517 = vmul.f32 %v1477, %v1508
      %v1518 = vmul.f32 %v1478, %v1509
      %v1519 = vmul.f32 %v1479, %v1510
      %v1520 = vmul.f32 %v1480, %v1507
      %1526 = vrot.lane.b32.xlu0 %v1516, 127
      %v1527 = vpop.permute.xlu0 %1526
      %1528 = vrot.lane.b32.xlu0 %v1517, 127
      %v1529 = vpop.permute.xlu0 %1528
      %1530 = vrot.lane.b32.xlu0 %v1518, 127
      %v1531 = vpop.permute.xlu0 %1530
      %1532 = vrot.lane.b32.xlu0 %v1519, 127
      %v1533 = vpop.permute.xlu0 %1532
      %1534 = vrot.lane.b32.xlu0 %v1520, 127
      %v1535 = vpop.permute.xlu0 %1534
      %v1536 = vsel %vm1399, %v1527, %v1529
      %v1537 = vsel %vm1399, %v1529, %v1531
      %v1538 = vsel %vm1399, %v1531, %v1533
      %v1539 = vsel %vm1399, %v1533, %v1535
      %1544 = vst [vmem:[#allocation4 + $0x1c0] sm:$0xff] %v1536
      %1545 = vst [vmem:[#allocation4 + $0x1c8] sm:$0xff] %v1537
      %1546 = vst [vmem:[#allocation4 + $0x1d0] sm:$0xff] %v1538
      %1547 = vst [vmem:[#allocation4 + $0x1d8] sm:$0xff] %v1539
      %v1548 = vld [vmem:[#allocation2 + $0x8] sm:$0xff]
      %v1549 = vld [vmem:[#allocation2 + $0x10] sm:$0xff]
      %v1550 = vld [vmem:[#allocation2 + $0x18] sm:$0xff]
      %v1551 = vld [vmem:[#allocation2 + $0x20] sm:$0xff]
      %v1552 = vld [vmem:[#allocation2 + $0x28] sm:$0xff]
      %s1553 = scalar_lea.vmem %s0, 39
      %v1554 = vld [vmem:[%s1553] ss:$8 sm:$0xf]
      %v1556 = vlaneseq
      %v1557 = vshrl.u32 %v1556, 7
      %v1558 = vsub.s32 0, %v1557
      %v1559 = vrot.slane %v1554, %v1558
      %v1560 = vlaneseq
      %v1561 = vshrl.u32 %v1560, 7
      %v1562 = vsub.s32 1, %v1561
      %v1563 = vrot.slane %v1554, %v1562
      %v1564 = vlaneseq
      %v1565 = vshrl.u32 %v1564, 7
      %v1566 = vsub.s32 2, %v1565
      %v1567 = vrot.slane %v1554, %v1566
      %v1568 = vlaneseq
      %v1569 = vshrl.u32 %v1568, 7
      %v1570 = vsub.s32 3, %v1569
      %v1571 = vrot.slane %v1554, %v1570
      %1572 = vrot.lane.b32.xlu0 %v1559, 7
      %v1573 = vpop.permute.xlu0 %1572
      %1574 = vrot.lane.b32.xlu0 %v1563, 7
      %v1575 = vpop.permute.xlu0 %1574
      %1576 = vrot.lane.b32.xlu0 %v1567, 7
      %v1577 = vpop.permute.xlu0 %1576
      %1578 = vrot.lane.b32.xlu0 %v1571, 7
      %v1579 = vpop.permute.xlu0 %1578
      %v1580 = vsel %vm1354, %v1573, %v1575
      %v1581 = vsel %vm1354, %v1575, %v1577
      %v1582 = vsel %vm1354, %v1577, %v1579
      %v1588 = vmul.f32 %v1548, %v1573
      %v1589 = vmul.f32 %v1549, %v1580
      %v1590 = vmul.f32 %v1550, %v1581
      %v1591 = vmul.f32 %v1551, %v1582
      %v1592 = vmul.f32 %v1552, %v1579
      %1598 = vrot.lane.b32.xlu0 %v1588, 121
      %v1599 = vpop.permute.xlu0 %1598
      %1600 = vrot.lane.b32.xlu0 %v1589, 121
      %v1601 = vpop.permute.xlu0 %1600
      %1602 = vrot.lane.b32.xlu0 %v1590, 121
      %v1603 = vpop.permute.xlu0 %1602
      %1604 = vrot.lane.b32.xlu0 %v1591, 121
      %v1605 = vpop.permute.xlu0 %1604
      %1606 = vrot.lane.b32.xlu0 %v1592, 121
      %v1607 = vpop.permute.xlu0 %1606
      %v1608 = vsel %vm1325, %v1599, %v1601
      %v1609 = vsel %vm1325, %v1601, %v1603
      %v1610 = vsel %vm1325, %v1603, %v1605
      %v1611 = vsel %vm1325, %v1605, %v1607
      %1616 = vst [vmem:[#allocation4 + $0x1e0] sm:$0xff] %v1608
      %1617 = vst [vmem:[#allocation4 + $0x1e8] sm:$0xff] %v1609
      %1618 = vst [vmem:[#allocation4 + $0x1f0] sm:$0xff] %v1610
      %1619 = vst [vmem:[#allocation4 + $0x1f8] sm:$0xff] %v1611
      %v1620 = vld [vmem:[#allocation2 + $0x8] sm:$0xff]
      %v1621 = vld [vmem:[#allocation2 + $0x10] sm:$0xff]
      %v1622 = vld [vmem:[#allocation2 + $0x18] sm:$0xff]
      %v1623 = vld [vmem:[#allocation2 + $0x20] sm:$0xff]
      %v1624 = vld [vmem:[#allocation2 + $0x28] sm:$0xff]
      %s1625 = scalar_lea.vmem %s0, 64
      %v1626 = vld [vmem:[%s1625] ss:$8 sm:$0xf]
      %v1628 = vlaneseq
      %v1629 = vshrl.u32 %v1628, 7
      %v1630 = vsub.s32 0, %v1629
      %v1631 = vrot.slane %v1626, %v1630
      %v1632 = vlaneseq
      %v1633 = vshrl.u32 %v1632, 7
      %v1634 = vsub.s32 1, %v1633
      %v1635 = vrot.slane %v1626, %v1634
      %v1636 = vlaneseq
      %v1637 = vshrl.u32 %v1636, 7
      %v1638 = vsub.s32 2, %v1637
      %v1639 = vrot.slane %v1626, %v1638
      %v1640 = vlaneseq
      %v1641 = vshrl.u32 %v1640, 7
      %v1642 = vsub.s32 3, %v1641
      %v1643 = vrot.slane %v1626, %v1642
      %1644 = vrot.lane.b32.xlu0 %v1631, 8
      %v1645 = vpop.permute.xlu0 %1644
      %1646 = vrot.lane.b32.xlu0 %v1635, 8
      %v1647 = vpop.permute.xlu0 %1646
      %1648 = vrot.lane.b32.xlu0 %v1639, 8
      %v1649 = vpop.permute.xlu0 %1648
      %1650 = vrot.lane.b32.xlu0 %v1643, 8
      %v1651 = vpop.permute.xlu0 %1650
      %v1652 = vsel %vm1280, %v1645, %v1647
      %v1653 = vsel %vm1280, %v1647, %v1649
      %v1654 = vsel %vm1280, %v1649, %v1651
      %v1660 = vmul.f32 %v1620, %v1645
      %v1661 = vmul.f32 %v1621, %v1652
      %v1662 = vmul.f32 %v1622, %v1653
      %v1663 = vmul.f32 %v1623, %v1654
      %v1664 = vmul.f32 %v1624, %v1651
      %1670 = vrot.lane.b32.xlu0 %v1660, 120
      %v1671 = vpop.permute.xlu0 %1670
      %1672 = vrot.lane.b32.xlu0 %v1661, 120
      %v1673 = vpop.permute.xlu0 %1672
      %1674 = vrot.lane.b32.xlu0 %v1662, 120
      %v1675 = vpop.permute.xlu0 %1674
      %1676 = vrot.lane.b32.xlu0 %v1663, 120
      %v1677 = vpop.permute.xlu0 %1676
      %1678 = vrot.lane.b32.xlu0 %v1664, 120
      %v1679 = vpop.permute.xlu0 %1678
      %v1680 = vsel %vm1251, %v1671, %v1673
      %v1681 = vsel %vm1251, %v1673, %v1675
      %v1682 = vsel %vm1251, %v1675, %v1677
      %v1683 = vsel %vm1251, %v1677, %v1679
      %1688 = vst [vmem:[#allocation4 + $0x200] sm:$0xff] %v1680
      %1689 = vst [vmem:[#allocation4 + $0x208] sm:$0xff] %v1681
      %1690 = vst [vmem:[#allocation4 + $0x210] sm:$0xff] %v1682
      %1691 = vst [vmem:[#allocation4 + $0x218] sm:$0xff] %v1683
      %v1692 = vld [vmem:[#allocation2 + $0x8] sm:$0xff]
      %v1693 = vld [vmem:[#allocation2 + $0x10] sm:$0xff]
      %v1694 = vld [vmem:[#allocation2 + $0x18] sm:$0xff]
      %v1695 = vld [vmem:[#allocation2 + $0x20] sm:$0xff]
      %v1696 = vld [vmem:[#allocation2 + $0x28] sm:$0xff]
      %s1697 = scalar_lea.vmem %s0, 65
      %v1698 = vld [vmem:[%s1697] ss:$8 sm:$0xf]
      %v1700 = vlaneseq
      %v1701 = vshrl.u32 %v1700, 7
      %v1702 = vsub.s32 0, %v1701
      %v1703 = vrot.slane %v1698, %v1702
      %v1704 = vlaneseq
      %v1705 = vshrl.u32 %v1704, 7
      %v1706 = vsub.s32 1, %v1705
      %v1707 = vrot.slane %v1698, %v1706
      %v1708 = vlaneseq
      %v1709 = vshrl.u32 %v1708, 7
      %v1710 = vsub.s32 2, %v1709
      %v1711 = vrot.slane %v1698, %v1710
      %v1712 = vlaneseq
      %v1713 = vshrl.u32 %v1712, 7
      %v1714 = vsub.s32 3, %v1713
      %v1715 = vrot.slane %v1698, %v1714
      %1716 = vrot.lane.b32.xlu0 %v1703, 9
      %v1717 = vpop.permute.xlu0 %1716
      %1718 = vrot.lane.b32.xlu0 %v1707, 9
      %v1719 = vpop.permute.xlu0 %1718
      %1720 = vrot.lane.b32.xlu0 %v1711, 9
      %v1721 = vpop.permute.xlu0 %1720
      %1722 = vrot.lane.b32.xlu0 %v1715, 9
      %v1723 = vpop.permute.xlu0 %1722
      %v1724 = vsel %vm1206, %v1717, %v1719
      %v1725 = vsel %vm1206, %v1719, %v1721
      %v1726 = vsel %vm1206, %v1721, %v1723
      %v1732 = vmul.f32 %v1692, %v1717
      %v1733 = vmul.f32 %v1693, %v1724
      %v1734 = vmul.f32 %v1694, %v1725
      %v1735 = vmul.f32 %v1695, %v1726
      %v1736 = vmul.f32 %v1696, %v1723
      %1742 = vrot.lane.b32.xlu0 %v1732, 119
      %v1743 = vpop.permute.xlu0 %1742
      %1744 = vrot.lane.b32.xlu0 %v1733, 119
      %v1745 = vpop.permute.xlu0 %1744
      %1746 = vrot.lane.b32.xlu0 %v1734, 119
      %v1747 = vpop.permute.xlu0 %1746
      %1748 = vrot.lane.b32.xlu0 %v1735, 119
      %v1749 = vpop.permute.xlu0 %1748
      %1750 = vrot.lane.b32.xlu0 %v1736, 119
      %v1751 = vpop.permute.xlu0 %1750
      %v1752 = vsel %vm1177, %v1743, %v1745
      %v1753 = vsel %vm1177, %v1745, %v1747
      %v1754 = vsel %vm1177, %v1747, %v1749
      %v1755 = vsel %vm1177, %v1749, %v1751
      %1760 = vst [vmem:[#allocation4 + $0x220] sm:$0xff] %v1752
      %1761 = vst [vmem:[#allocation4 + $0x228] sm:$0xff] %v1753
      %1762 = vst [vmem:[#allocation4 + $0x230] sm:$0xff] %v1754
      %1763 = vst [vmem:[#allocation4 + $0x238] sm:$0xff] %v1755
      %v1764 = vld [vmem:[#allocation2 + $0x8] sm:$0xff]
      %v1765 = vld [vmem:[#allocation2 + $0x10] sm:$0xff]
      %v1766 = vld [vmem:[#allocation2 + $0x18] sm:$0xff]
      %v1767 = vld [vmem:[#allocation2 + $0x20] sm:$0xff]
      %v1768 = vld [vmem:[#allocation2 + $0x28] sm:$0xff]
      %s1769 = scalar_lea.vmem %s0, 66
      %v1770 = vld [vmem:[%s1769] ss:$8 sm:$0xf]
      %v1772 = vlaneseq
      %v1773 = vshrl.u32 %v1772, 7
      %v1774 = vsub.s32 0, %v1773
      %v1775 = vrot.slane %v1770, %v1774
      %v1776 = vlaneseq
      %v1777 = vshrl.u32 %v1776, 7
      %v1778 = vsub.s32 1, %v1777
      %v1779 = vrot.slane %v1770, %v1778
      %v1780 = vlaneseq
      %v1781 = vshrl.u32 %v1780, 7
      %v1782 = vsub.s32 2, %v1781
      %v1783 = vrot.slane %v1770, %v1782
      %v1784 = vlaneseq
      %v1785 = vshrl.u32 %v1784, 7
      %v1786 = vsub.s32 3, %v1785
      %v1787 = vrot.slane %v1770, %v1786
      %1788 = vrot.lane.b32.xlu0 %v1775, 55
      %v1789 = vpop.permute.xlu0 %1788
      %1790 = vrot.lane.b32.xlu0 %v1779, 55
      %v1791 = vpop.permute.xlu0 %1790
      %1792 = vrot.lane.b32.xlu0 %v1783, 55
      %v1793 = vpop.permute.xlu0 %1792
      %1794 = vrot.lane.b32.xlu0 %v1787, 55
      %v1795 = vpop.permute.xlu0 %1794
      %v1796 = vsel %vm520, %v1789, %v1791
      %v1797 = vsel %vm520, %v1791, %v1793
      %v1798 = vsel %vm520, %v1793, %v1795
      %v1804 = vmul.f32 %v1764, %v1789
      %v1805 = vmul.f32 %v1765, %v1796
      %v1806 = vmul.f32 %v1766, %v1797
      %v1807 = vmul.f32 %v1767, %v1798
      %v1808 = vmul.f32 %v1768, %v1795
      %1814 = vrot.lane.b32.xlu0 %v1804, 73
      %v1815 = vpop.permute.xlu0 %1814
      %1816 = vrot.lane.b32.xlu0 %v1805, 73
      %v1817 = vpop.permute.xlu0 %1816
      %1818 = vrot.lane.b32.xlu0 %v1806, 73
      %v1819 = vpop.permute.xlu0 %1818
      %1820 = vrot.lane.b32.xlu0 %v1807, 73
      %v1821 = vpop.permute.xlu0 %1820
      %1822 = vrot.lane.b32.xlu0 %v1808, 73
      %v1823 = vpop.permute.xlu0 %1822
      %v1824 = vsel %vm549, %v1815, %v1817
      %v1825 = vsel %vm549, %v1817, %v1819
      %v1826 = vsel %vm549, %v1819, %v1821
      %v1827 = vsel %vm549, %v1821, %v1823
      %1832 = vst [vmem:[#allocation4 + $0x240] sm:$0xff] %v1824
      %1833 = vst [vmem:[#allocation4 + $0x248] sm:$0xff] %v1825
      %1834 = vst [vmem:[#allocation4 + $0x250] sm:$0xff] %v1826
      %1835 = vst [vmem:[#allocation4 + $0x258] sm:$0xff] %v1827
      %v1836 = vld [vmem:[#allocation2 + $0x8] sm:$0xff]
      %v1837 = vld [vmem:[#allocation2 + $0x10] sm:$0xff]
      %v1838 = vld [vmem:[#allocation2 + $0x18] sm:$0xff]
      %v1839 = vld [vmem:[#allocation2 + $0x20] sm:$0xff]
      %v1840 = vld [vmem:[#allocation2 + $0x28] sm:$0xff]
      %s1841 = scalar_lea.vmem %s0, 67
      %v1842 = vld [vmem:[%s1841] ss:$8 sm:$0xf]
      %v1844 = vlaneseq
      %v1845 = vshrl.u32 %v1844, 7
      %v1846 = vsub.s32 0, %v1845
      %v1847 = vrot.slane %v1842, %v1846
      %v1848 = vlaneseq
      %v1849 = vshrl.u32 %v1848, 7
      %v1850 = vsub.s32 1, %v1849
      %v1851 = vrot.slane %v1842, %v1850
      %v1852 = vlaneseq
      %v1853 = vshrl.u32 %v1852, 7
      %v1854 = vsub.s32 2, %v1853
      %v1855 = vrot.slane %v1842, %v1854
      %v1856 = vlaneseq
      %v1857 = vshrl.u32 %v1856, 7
      %v1858 = vsub.s32 3, %v1857
      %v1859 = vrot.slane %v1842, %v1858
      %1860 = vrot.lane.b32.xlu0 %v1847, 56
      %v1861 = vpop.permute.xlu0 %1860
      %1862 = vrot.lane.b32.xlu0 %v1851, 56
      %v1863 = vpop.permute.xlu0 %1862
      %1864 = vrot.lane.b32.xlu0 %v1855, 56
      %v1865 = vpop.permute.xlu0 %1864
      %1866 = vrot.lane.b32.xlu0 %v1859, 56
      %v1867 = vpop.permute.xlu0 %1866
      %v1868 = vsel %vm594, %v1861, %v1863
      %v1869 = vsel %vm594, %v1863, %v1865
      %v1870 = vsel %vm594, %v1865, %v1867
      %v1876 = vmul.f32 %v1836, %v1861
      %v1877 = vmul.f32 %v1837, %v1868
      %v1878 = vmul.f32 %v1838, %v1869
      %v1879 = vmul.f32 %v1839, %v1870
      %v1880 = vmul.f32 %v1840, %v1867
      %1886 = vrot.lane.b32.xlu0 %v1876, 72
      %v1887 = vpop.permute.xlu0 %1886
      %1888 = vrot.lane.b32.xlu0 %v1877, 72
      %v1889 = vpop.permute.xlu0 %1888
      %1890 = vrot.lane.b32.xlu0 %v1878, 72
      %v1891 = vpop.permute.xlu0 %1890
      %1892 = vrot.lane.b32.xlu0 %v1879, 72
      %v1893 = vpop.permute.xlu0 %1892
      %1894 = vrot.lane.b32.xlu0 %v1880, 72
      %v1895 = vpop.permute.xlu0 %1894
      %v1896 = vsel %vm623, %v1887, %v1889
      %v1897 = vsel %vm623, %v1889, %v1891
      %v1898 = vsel %vm623, %v1891, %v1893
      %v1899 = vsel %vm623, %v1893, %v1895
      %1904 = vst [vmem:[#allocation4 + $0x260] sm:$0xff] %v1896
      %1905 = vst [vmem:[#allocation4 + $0x268] sm:$0xff] %v1897
      %1906 = vst [vmem:[#allocation4 + $0x270] sm:$0xff] %v1898
      %1907 = vst [vmem:[#allocation4 + $0x278] sm:$0xff] %v1899
      %v1908 = vld [vmem:[#allocation2 + $0x8] sm:$0xff]
      %v1909 = vld [vmem:[#allocation2 + $0x10] sm:$0xff]
      %v1910 = vld [vmem:[#allocation2 + $0x18] sm:$0xff]
      %v1911 = vld [vmem:[#allocation2 + $0x20] sm:$0xff]
      %v1912 = vld [vmem:[#allocation2 + $0x28] sm:$0xff]
      %s1913 = scalar_lea.vmem %s0, 68
      %v1914 = vld [vmem:[%s1913] ss:$8 sm:$0xf]
      %v1916 = vlaneseq
      %v1917 = vshrl.u32 %v1916, 7
      %v1918 = vsub.s32 0, %v1917
      %v1919 = vrot.slane %v1914, %v1918
      %v1920 = vlaneseq
      %v1921 = vshrl.u32 %v1920, 7
      %v1922 = vsub.s32 1, %v1921
      %v1923 = vrot.slane %v1914, %v1922
      %v1924 = vlaneseq
      %v1925 = vshrl.u32 %v1924, 7
      %v1926 = vsub.s32 2, %v1925
      %v1927 = vrot.slane %v1914, %v1926
      %v1928 = vlaneseq
      %v1929 = vshrl.u32 %v1928, 7
      %v1930 = vsub.s32 3, %v1929
      %v1931 = vrot.slane %v1914, %v1930
      %1932 = vrot.lane.b32.xlu0 %v1919, 57
      %v1933 = vpop.permute.xlu0 %1932
      %1934 = vrot.lane.b32.xlu0 %v1923, 57
      %v1935 = vpop.permute.xlu0 %1934
      %1936 = vrot.lane.b32.xlu0 %v1927, 57
      %v1937 = vpop.permute.xlu0 %1936
      %1938 = vrot.lane.b32.xlu0 %v1931, 57
      %v1939 = vpop.permute.xlu0 %1938
      %v1940 = vsel %vm668, %v1933, %v1935
      %v1941 = vsel %vm668, %v1935, %v1937
      %v1942 = vsel %vm668, %v1937, %v1939
      %v1948 = vmul.f32 %v1908, %v1933
      %v1949 = vmul.f32 %v1909, %v1940
      %v1950 = vmul.f32 %v1910, %v1941
      %v1951 = vmul.f32 %v1911, %v1942
      %v1952 = vmul.f32 %v1912, %v1939
      %1958 = vrot.lane.b32.xlu0 %v1948, 71
      %v1959 = vpop.permute.xlu0 %1958
      %1960 = vrot.lane.b32.xlu0 %v1949, 71
      %v1961 = vpop.permute.xlu0 %1960
      %1962 = vrot.lane.b32.xlu0 %v1950, 71
      %v1963 = vpop.permute.xlu0 %1962
      %1964 = vrot.lane.b32.xlu0 %v1951, 71
      %v1965 = vpop.permute.xlu0 %1964
      %1966 = vrot.lane.b32.xlu0 %v1952, 71
      %v1967 = vpop.permute.xlu0 %1966
      %v1968 = vsel %vm697, %v1959, %v1961
      %v1969 = vsel %vm697, %v1961, %v1963
      %v1970 = vsel %vm697, %v1963, %v1965
      %v1971 = vsel %vm697, %v1965, %v1967
      %1976 = vst [vmem:[#allocation4 + $0x280] sm:$0xff] %v1968
      %1977 = vst [vmem:[#allocation4 + $0x288] sm:$0xff] %v1969
      %1978 = vst [vmem:[#allocation4 + $0x290] sm:$0xff] %v1970
      %1979 = vst [vmem:[#allocation4 + $0x298] sm:$0xff] %v1971
      %v1980 = vld [vmem:[#allocation2 + $0x8] sm:$0xff]
      %v1981 = vld [vmem:[#allocation2 + $0x10] sm:$0xff]
      %v1982 = vld [vmem:[#allocation2 + $0x18] sm:$0xff]
      %v1983 = vld [vmem:[#allocation2 + $0x20] sm:$0xff]
      %v1984 = vld [vmem:[#allocation2 + $0x28] sm:$0xff]
      %s1985 = scalar_lea.vmem %s0, 69
      %v1986 = vld [vmem:[%s1985] ss:$8 sm:$0xf]
      %v1988 = vlaneseq
      %v1989 = vshrl.u32 %v1988, 7
      %v1990 = vsub.s32 0, %v1989
      %v1991 = vrot.slane %v1986, %v1990
      %v1992 = vlaneseq
      %v1993 = vshrl.u32 %v1992, 7
      %v1994 = vsub.s32 1, %v1993
      %v1995 = vrot.slane %v1986, %v1994
      %v1996 = vlaneseq
      %v1997 = vshrl.u32 %v1996, 7
      %v1998 = vsub.s32 2, %v1997
      %v1999 = vrot.slane %v1986, %v1998
      %v2000 = vlaneseq
      %v2001 = vshrl.u32 %v2000, 7
      %v2002 = vsub.s32 3, %v2001
      %v2003 = vrot.slane %v1986, %v2002
      %2004 = vrot.lane.b32.xlu0 %v1991, 63
      %v2005 = vpop.permute.xlu0 %2004
      %2006 = vrot.lane.b32.xlu0 %v1995, 63
      %v2007 = vpop.permute.xlu0 %2006
      %2008 = vrot.lane.b32.xlu0 %v1999, 63
      %v2009 = vpop.permute.xlu0 %2008
      %2010 = vrot.lane.b32.xlu0 %v2003, 63
      %v2011 = vpop.permute.xlu0 %2010
      %v2012 = vsel %vm742, %v2005, %v2007
      %v2013 = vsel %vm742, %v2007, %v2009
      %v2014 = vsel %vm742, %v2009, %v2011
      %v2020 = vmul.f32 %v1980, %v2005
      %v2021 = vmul.f32 %v1981, %v2012
      %v2022 = vmul.f32 %v1982, %v2013
      %v2023 = vmul.f32 %v1983, %v2014
      %v2024 = vmul.f32 %v1984, %v2011
      %2030 = vrot.lane.b32.xlu0 %v2020, 65
      %v2031 = vpop.permute.xlu0 %2030
      %2032 = vrot.lane.b32.xlu0 %v2021, 65
      %v2033 = vpop.permute.xlu0 %2032
      %2034 = vrot.lane.b32.xlu0 %v2022, 65
      %v2035 = vpop.permute.xlu0 %2034
      %2036 = vrot.lane.b32.xlu0 %v2023, 65
      %v2037 = vpop.permute.xlu0 %2036
      %2038 = vrot.lane.b32.xlu0 %v2024, 65
      %v2039 = vpop.permute.xlu0 %2038
      %v2040 = vsel %vm771, %v2031, %v2033
      %v2041 = vsel %vm771, %v2033, %v2035
      %v2042 = vsel %vm771, %v2035, %v2037
      %v2043 = vsel %vm771, %v2037, %v2039
      %2048 = vst [vmem:[#allocation4 + $0x2a0] sm:$0xff] %v2040
      %2049 = vst [vmem:[#allocation4 + $0x2a8] sm:$0xff] %v2041
      %2050 = vst [vmem:[#allocation4 + $0x2b0] sm:$0xff] %v2042
      %2051 = vst [vmem:[#allocation4 + $0x2b8] sm:$0xff] %v2043
      %v2052 = vld [vmem:[#allocation2 + $0x8] sm:$0xff]
      %v2053 = vld [vmem:[#allocation2 + $0x10] sm:$0xff]
      %v2054 = vld [vmem:[#allocation2 + $0x18] sm:$0xff]
      %v2055 = vld [vmem:[#allocation2 + $0x20] sm:$0xff]
      %v2056 = vld [vmem:[#allocation2 + $0x28] sm:$0xff]
      %s2057 = scalar_lea.vmem %s0, 70
      %v2058 = vld [vmem:[%s2057] ss:$8 sm:$0xf]
      %v2060 = vlaneseq
      %v2061 = vshrl.u32 %v2060, 7
      %v2062 = vsub.s32 0, %v2061
      %v2063 = vrot.slane %v2058, %v2062
      %v2064 = vlaneseq
      %v2065 = vshrl.u32 %v2064, 7
      %v2066 = vsub.s32 1, %v2065
      %v2067 = vrot.slane %v2058, %v2066
      %v2068 = vlaneseq
      %v2069 = vshrl.u32 %v2068, 7
      %v2070 = vsub.s32 2, %v2069
      %v2071 = vrot.slane %v2058, %v2070
      %v2072 = vlaneseq
      %v2073 = vshrl.u32 %v2072, 7
      %v2074 = vsub.s32 3, %v2073
      %v2075 = vrot.slane %v2058, %v2074
      %2076 = vrot.lane.b32.xlu0 %v2063, 64
      %v2077 = vpop.permute.xlu0 %2076
      %2078 = vrot.lane.b32.xlu0 %v2067, 64
      %v2079 = vpop.permute.xlu0 %2078
      %2080 = vrot.lane.b32.xlu0 %v2071, 64
      %v2081 = vpop.permute.xlu0 %2080
      %2082 = vrot.lane.b32.xlu0 %v2075, 64
      %v2083 = vpop.permute.xlu0 %2082
      %v2084 = vsel %vm816, %v2077, %v2079
      %v2085 = vsel %vm816, %v2079, %v2081
      %v2086 = vsel %vm816, %v2081, %v2083
      %v2092 = vmul.f32 %v2052, %v2077
      %v2093 = vmul.f32 %v2053, %v2084
      %v2094 = vmul.f32 %v2054, %v2085
      %v2095 = vmul.f32 %v2055, %v2086
      %v2096 = vmul.f32 %v2056, %v2083
      %2102 = vrot.lane.b32.xlu0 %v2092, 64
      %v2103 = vpop.permute.xlu0 %2102
      %2104 = vrot.lane.b32.xlu0 %v2093, 64
      %v2105 = vpop.permute.xlu0 %2104
      %2106 = vrot.lane.b32.xlu0 %v2094, 64
      %v2107 = vpop.permute.xlu0 %2106
      %2108 = vrot.lane.b32.xlu0 %v2095, 64
      %v2109 = vpop.permute.xlu0 %2108
      %2110 = vrot.lane.b32.xlu0 %v2096, 64
      %v2111 = vpop.permute.xlu0 %2110
      %v2112 = vsel %vm816, %v2103, %v2105
      %v2113 = vsel %vm816, %v2105, %v2107
      %v2114 = vsel %vm816, %v2107, %v2109
      %v2115 = vsel %vm816, %v2109, %v2111
      %2120 = vst [vmem:[#allocation4 + $0x2c0] sm:$0xff] %v2112
      %2121 = vst [vmem:[#allocation4 + $0x2c8] sm:$0xff] %v2113
      %2122 = vst [vmem:[#allocation4 + $0x2d0] sm:$0xff] %v2114
      %2123 = vst [vmem:[#allocation4 + $0x2d8] sm:$0xff] %v2115
      %v2124 = vld [vmem:[#allocation2 + $0x8] sm:$0xff]
      %v2125 = vld [vmem:[#allocation2 + $0x10] sm:$0xff]
      %v2126 = vld [vmem:[#allocation2 + $0x18] sm:$0xff]
      %v2127 = vld [vmem:[#allocation2 + $0x20] sm:$0xff]
      %v2128 = vld [vmem:[#allocation2 + $0x28] sm:$0xff]
      %s2129 = scalar_lea.vmem %s0, 71
      %v2130 = vld [vmem:[%s2129] ss:$8 sm:$0xf]
      %v2132 = vlaneseq
      %v2133 = vshrl.u32 %v2132, 7
      %v2134 = vsub.s32 0, %v2133
      %v2135 = vrot.slane %v2130, %v2134
      %v2136 = vlaneseq
      %v2137 = vshrl.u32 %v2136, 7
      %v2138 = vsub.s32 1, %v2137
      %v2139 = vrot.slane %v2130, %v2138
      %v2140 = vlaneseq
      %v2141 = vshrl.u32 %v2140, 7
      %v2142 = vsub.s32 2, %v2141
      %v2143 = vrot.slane %v2130, %v2142
      %v2144 = vlaneseq
      %v2145 = vshrl.u32 %v2144, 7
      %v2146 = vsub.s32 3, %v2145
      %v2147 = vrot.slane %v2130, %v2146
      %2148 = vrot.lane.b32.xlu0 %v2135, 65
      %v2149 = vpop.permute.xlu0 %2148
      %2150 = vrot.lane.b32.xlu0 %v2139, 65
      %v2151 = vpop.permute.xlu0 %2150
      %2152 = vrot.lane.b32.xlu0 %v2143, 65
      %v2153 = vpop.permute.xlu0 %2152
      %2154 = vrot.lane.b32.xlu0 %v2147, 65
      %v2155 = vpop.permute.xlu0 %2154
      %v2156 = vsel %vm771, %v2149, %v2151
      %v2157 = vsel %vm771, %v2151, %v2153
      %v2158 = vsel %vm771, %v2153, %v2155
      %v2164 = vmul.f32 %v2124, %v2149
      %v2165 = vmul.f32 %v2125, %v2156
      %v2166 = vmul.f32 %v2126, %v2157
      %v2167 = vmul.f32 %v2127, %v2158
      %v2168 = vmul.f32 %v2128, %v2155
      %2174 = vrot.lane.b32.xlu0 %v2164, 63
      %v2175 = vpop.permute.xlu0 %2174
      %2176 = vrot.lane.b32.xlu0 %v2165, 63
      %v2177 = vpop.permute.xlu0 %2176
      %2178 = vrot.lane.b32.xlu0 %v2166, 63
      %v2179 = vpop.permute.xlu0 %2178
      %2180 = vrot.lane.b32.xlu0 %v2167, 63
      %v2181 = vpop.permute.xlu0 %2180
      %2182 = vrot.lane.b32.xlu0 %v2168, 63
      %v2183 = vpop.permute.xlu0 %2182
      %v2184 = vsel %vm742, %v2175, %v2177
      %v2185 = vsel %vm742, %v2177, %v2179
      %v2186 = vsel %vm742, %v2179, %v2181
      %v2187 = vsel %vm742, %v2181, %v2183
      %2192 = vst [vmem:[#allocation4 + $0x2e0] sm:$0xff] %v2184
      %2193 = vst [vmem:[#allocation4 + $0x2e8] sm:$0xff] %v2185
      %2194 = vst [vmem:[#allocation4 + $0x2f0] sm:$0xff] %v2186
      %2195 = vst [vmem:[#allocation4 + $0x2f8] sm:$0xff] %v2187
      %v2196 = vld [vmem:[#allocation2 + $0x8] sm:$0xff]
      %v2197 = vld [vmem:[#allocation2 + $0x10] sm:$0xff]
      %v2198 = vld [vmem:[#allocation2 + $0x18] sm:$0xff]
      %v2199 = vld [vmem:[#allocation2 + $0x20] sm:$0xff]
      %v2200 = vld [vmem:[#allocation2 + $0x28] sm:$0xff]
      %s2201 = scalar_lea.vmem %s0, 96
      %v2202 = vld [vmem:[%s2201] ss:$8 sm:$0xf]
      %v2204 = vlaneseq
      %v2205 = vshrl.u32 %v2204, 7
      %v2206 = vsub.s32 0, %v2205
      %v2207 = vrot.slane %v2202, %v2206
      %v2208 = vlaneseq
      %v2209 = vshrl.u32 %v2208, 7
      %v2210 = vsub.s32 1, %v2209
      %v2211 = vrot.slane %v2202, %v2210
      %v2212 = vlaneseq
      %v2213 = vshrl.u32 %v2212, 7
      %v2214 = vsub.s32 2, %v2213
      %v2215 = vrot.slane %v2202, %v2214
      %v2216 = vlaneseq
      %v2217 = vshrl.u32 %v2216, 7
      %v2218 = vsub.s32 3, %v2217
      %v2219 = vrot.slane %v2202, %v2218
      %2220 = vrot.lane.b32.xlu0 %v2207, 71
      %v2221 = vpop.permute.xlu0 %2220
      %2222 = vrot.lane.b32.xlu0 %v2211, 71
      %v2223 = vpop.permute.xlu0 %2222
      %2224 = vrot.lane.b32.xlu0 %v2215, 71
      %v2225 = vpop.permute.xlu0 %2224
      %2226 = vrot.lane.b32.xlu0 %v2219, 71
      %v2227 = vpop.permute.xlu0 %2226
      %v2228 = vsel %vm697, %v2221, %v2223
      %v2229 = vsel %vm697, %v2223, %v2225
      %v2230 = vsel %vm697, %v2225, %v2227
      %v2236 = vmul.f32 %v2196, %v2221
      %v2237 = vmul.f32 %v2197, %v2228
      %v2238 = vmul.f32 %v2198, %v2229
      %v2239 = vmul.f32 %v2199, %v2230
      %v2240 = vmul.f32 %v2200, %v2227
      %2246 = vrot.lane.b32.xlu0 %v2236, 57
      %v2247 = vpop.permute.xlu0 %2246
      %2248 = vrot.lane.b32.xlu0 %v2237, 57
      %v2249 = vpop.permute.xlu0 %2248
      %2250 = vrot.lane.b32.xlu0 %v2238, 57
      %v2251 = vpop.permute.xlu0 %2250
      %2252 = vrot.lane.b32.xlu0 %v2239, 57
      %v2253 = vpop.permute.xlu0 %2252
      %2254 = vrot.lane.b32.xlu0 %v2240, 57
      %v2255 = vpop.permute.xlu0 %2254
      %v2256 = vsel %vm668, %v2247, %v2249
      %v2257 = vsel %vm668, %v2249, %v2251
      %v2258 = vsel %vm668, %v2251, %v2253
      %v2259 = vsel %vm668, %v2253, %v2255
      %2264 = vst [vmem:[#allocation4 + $0x300] sm:$0xff] %v2256
      %2265 = vst [vmem:[#allocation4 + $0x308] sm:$0xff] %v2257
      %2266 = vst [vmem:[#allocation4 + $0x310] sm:$0xff] %v2258
      %2267 = vst [vmem:[#allocation4 + $0x318] sm:$0xff] %v2259
      %v2268 = vld [vmem:[#allocation2 + $0x8] sm:$0xff]
      %v2269 = vld [vmem:[#allocation2 + $0x10] sm:$0xff]
      %v2270 = vld [vmem:[#allocation2 + $0x18] sm:$0xff]
      %v2271 = vld [vmem:[#allocation2 + $0x20] sm:$0xff]
      %v2272 = vld [vmem:[#allocation2 + $0x28] sm:$0xff]
      %s2273 = scalar_lea.vmem %s0, 97
      %v2274 = vld [vmem:[%s2273] ss:$8 sm:$0xf]
      %v2276 = vlaneseq
      %v2277 = vshrl.u32 %v2276, 7
      %v2278 = vsub.s32 0, %v2277
      %v2279 = vrot.slane %v2274, %v2278
      %v2280 = vlaneseq
      %v2281 = vshrl.u32 %v2280, 7
      %v2282 = vsub.s32 1, %v2281
      %v2283 = vrot.slane %v2274, %v2282
      %v2284 = vlaneseq
      %v2285 = vshrl.u32 %v2284, 7
      %v2286 = vsub.s32 2, %v2285
      %v2287 = vrot.slane %v2274, %v2286
      %v2288 = vlaneseq
      %v2289 = vshrl.u32 %v2288, 7
      %v2290 = vsub.s32 3, %v2289
      %v2291 = vrot.slane %v2274, %v2290
      %2292 = vrot.lane.b32.xlu0 %v2279, 72
      %v2293 = vpop.permute.xlu0 %2292
      %2294 = vrot.lane.b32.xlu0 %v2283, 72
      %v2295 = vpop.permute.xlu0 %2294
      %2296 = vrot.lane.b32.xlu0 %v2287, 72
      %v2297 = vpop.permute.xlu0 %2296
      %2298 = vrot.lane.b32.xlu0 %v2291, 72
      %v2299 = vpop.permute.xlu0 %2298
      %v2300 = vsel %vm623, %v2293, %v2295
      %v2301 = vsel %vm623, %v2295, %v2297
      %v2302 = vsel %vm623, %v2297, %v2299
      %v2308 = vmul.f32 %v2268, %v2293
      %v2309 = vmul.f32 %v2269, %v2300
      %v2310 = vmul.f32 %v2270, %v2301
      %v2311 = vmul.f32 %v2271, %v2302
      %v2312 = vmul.f32 %v2272, %v2299
      %2318 = vrot.lane.b32.xlu0 %v2308, 56
      %v2319 = vpop.permute.xlu0 %2318
      %2320 = vrot.lane.b32.xlu0 %v2309, 56
      %v2321 = vpop.permute.xlu0 %2320
      %2322 = vrot.lane.b32.xlu0 %v2310, 56
      %v2323 = vpop.permute.xlu0 %2322
      %2324 = vrot.lane.b32.xlu0 %v2311, 56
      %v2325 = vpop.permute.xlu0 %2324
      %2326 = vrot.lane.b32.xlu0 %v2312, 56
      %v2327 = vpop.permute.xlu0 %2326
      %v2328 = vsel %vm594, %v2319, %v2321
      %v2329 = vsel %vm594, %v2321, %v2323
      %v2330 = vsel %vm594, %v2323, %v2325
      %v2331 = vsel %vm594, %v2325, %v2327
      %2336 = vst [vmem:[#allocation4 + $0x320] sm:$0xff] %v2328
      %2337 = vst [vmem:[#allocation4 + $0x328] sm:$0xff] %v2329
      %2338 = vst [vmem:[#allocation4 + $0x330] sm:$0xff] %v2330
      %2339 = vst [vmem:[#allocation4 + $0x338] sm:$0xff] %v2331
      %v2340 = vld [vmem:[#allocation2 + $0x8] sm:$0xff]
      %v2341 = vld [vmem:[#allocation2 + $0x10] sm:$0xff]
      %v2342 = vld [vmem:[#allocation2 + $0x18] sm:$0xff]
      %v2343 = vld [vmem:[#allocation2 + $0x20] sm:$0xff]
      %v2344 = vld [vmem:[#allocation2 + $0x28] sm:$0xff]
      %s2345 = scalar_lea.vmem %s0, 98
      %v2346 = vld [vmem:[%s2345] ss:$8 sm:$0xf]
      %v2348 = vlaneseq
      %v2349 = vshrl.u32 %v2348, 7
      %v2350 = vsub.s32 0, %v2349
      %v2351 = vrot.slane %v2346, %v2350
      %v2352 = vlaneseq
      %v2353 = vshrl.u32 %v2352, 7
      %v2354 = vsub.s32 1, %v2353
      %v2355 = vrot.slane %v2346, %v2354
      %v2356 = vlaneseq
      %v2357 = vshrl.u32 %v2356, 7
      %v2358 = vsub.s32 2, %v2357
      %v2359 = vrot.slane %v2346, %v2358
      %v2360 = vlaneseq
      %v2361 = vshrl.u32 %v2360, 7
      %v2362 = vsub.s32 3, %v2361
      %v2363 = vrot.slane %v2346, %v2362
      %2364 = vrot.lane.b32.xlu0 %v2351, 73
      %v2365 = vpop.permute.xlu0 %2364
      %2366 = vrot.lane.b32.xlu0 %v2355, 73
      %v2367 = vpop.permute.xlu0 %2366
      %2368 = vrot.lane.b32.xlu0 %v2359, 73
      %v2369 = vpop.permute.xlu0 %2368
      %2370 = vrot.lane.b32.xlu0 %v2363, 73
      %v2371 = vpop.permute.xlu0 %2370
      %v2372 = vsel %vm549, %v2365, %v2367
      %v2373 = vsel %vm549, %v2367, %v2369
      %v2374 = vsel %vm549, %v2369, %v2371
      %v2380 = vmul.f32 %v2340, %v2365
      %v2381 = vmul.f32 %v2341, %v2372
      %v2382 = vmul.f32 %v2342, %v2373
      %v2383 = vmul.f32 %v2343, %v2374
      %v2384 = vmul.f32 %v2344, %v2371
      %2390 = vrot.lane.b32.xlu0 %v2380, 55
      %v2391 = vpop.permute.xlu0 %2390
      %2392 = vrot.lane.b32.xlu0 %v2381, 55
      %v2393 = vpop.permute.xlu0 %2392
      %2394 = vrot.lane.b32.xlu0 %v2382, 55
      %v2395 = vpop.permute.xlu0 %2394
      %2396 = vrot.lane.b32.xlu0 %v2383, 55
      %v2397 = vpop.permute.xlu0 %2396
      %2398 = vrot.lane.b32.xlu0 %v2384, 55
      %v2399 = vpop.permute.xlu0 %2398
      %v2400 = vsel %vm520, %v2391, %v2393
      %v2401 = vsel %vm520, %v2393, %v2395
      %v2402 = vsel %vm520, %v2395, %v2397
      %v2403 = vsel %vm520, %v2397, %v2399
      %2408 = vst [vmem:[#allocation4 + $0x340] sm:$0xff] %v2400
      %2409 = vst [vmem:[#allocation4 + $0x348] sm:$0xff] %v2401
      %2410 = vst [vmem:[#allocation4 + $0x350] sm:$0xff] %v2402
      %2411 = vst [vmem:[#allocation4 + $0x358] sm:$0xff] %v2403
      %v2412 = vld [vmem:[#allocation4] sm:$0xff]
      %v2413 = vld [vmem:[#allocation4 + $0x8] sm:$0xff]
      %v2414 = vld [vmem:[#allocation4 + $0x10] sm:$0xff]
      %v2415 = vld [vmem:[#allocation4 + $0x18] sm:$0xff]
      %v2416 = vld [vmem:[#allocation4 + $0x20] sm:$0xff]
      %v2417 = vld [vmem:[#allocation4 + $0x28] sm:$0xff]
      %v2418 = vld [vmem:[#allocation4 + $0x30] sm:$0xff]
      %v2419 = vld [vmem:[#allocation4 + $0x38] sm:$0xff]
      %v2420 = vld [vmem:[#allocation4 + $0x40] sm:$0xff]
      %v2421 = vld [vmem:[#allocation4 + $0x48] sm:$0xff]
      %v2422 = vld [vmem:[#allocation4 + $0x50] sm:$0xff]
      %v2423 = vld [vmem:[#allocation4 + $0x58] sm:$0xff]
      %v2424 = vld [vmem:[#allocation4 + $0x60] sm:$0xff]
      %v2425 = vld [vmem:[#allocation4 + $0x68] sm:$0xff]
      %v2426 = vld [vmem:[#allocation4 + $0x70] sm:$0xff]
      %v2427 = vld [vmem:[#allocation4 + $0x78] sm:$0xff]
      %v2428 = vld [vmem:[#allocation4 + $0x80] sm:$0xff]
      %v2429 = vld [vmem:[#allocation4 + $0x88] sm:$0xff]
      %v2430 = vld [vmem:[#allocation4 + $0x90] sm:$0xff]
      %v2431 = vld [vmem:[#allocation4 + $0x98] sm:$0xff]
      %v2432 = vld [vmem:[#allocation4 + $0xa0] sm:$0xff]
      %v2433 = vld [vmem:[#allocation4 + $0xa8] sm:$0xff]
      %v2434 = vld [vmem:[#allocation4 + $0xb0] sm:$0xff]
      %v2435 = vld [vmem:[#allocation4 + $0xb8] sm:$0xff]
      %v2436 = vld [vmem:[#allocation4 + $0xc0] sm:$0xff]
      %v2437 = vld [vmem:[#allocation4 + $0xc8] sm:$0xff]
      %v2438 = vld [vmem:[#allocation4 + $0xd0] sm:$0xff]
      %v2439 = vld [vmem:[#allocation4 + $0xd8] sm:$0xff]
      %v2440 = vld [vmem:[#allocation4 + $0xe0] sm:$0xff]
      %v2441 = vld [vmem:[#allocation4 + $0xe8] sm:$0xff]
      %v2442 = vld [vmem:[#allocation4 + $0xf0] sm:$0xff]
      %v2443 = vld [vmem:[#allocation4 + $0xf8] sm:$0xff]
      %v2444 = vld [vmem:[#allocation4 + $0x100] sm:$0xff]
      %v2445 = vld [vmem:[#allocation4 + $0x108] sm:$0xff]
      %v2446 = vld [vmem:[#allocation4 + $0x110] sm:$0xff]
      %v2447 = vld [vmem:[#allocation4 + $0x118] sm:$0xff]
      %v2448 = vld [vmem:[#allocation4 + $0x120] sm:$0xff]
      %v2449 = vld [vmem:[#allocation4 + $0x128] sm:$0xff]
      %v2450 = vld [vmem:[#allocation4 + $0x130] sm:$0xff]
      %v2451 = vld [vmem:[#allocation4 + $0x138] sm:$0xff]
      %v2452 = vld [vmem:[#allocation4 + $0x140] sm:$0xff]
      %v2453 = vld [vmem:[#allocation4 + $0x148] sm:$0xff]
      %v2454 = vld [vmem:[#allocation4 + $0x150] sm:$0xff]
      %v2455 = vld [vmem:[#allocation4 + $0x158] sm:$0xff]
      %v2456 = vld [vmem:[#allocation4 + $0x160] sm:$0xff]
      %v2457 = vld [vmem:[#allocation4 + $0x168] sm:$0xff]
      %v2458 = vld [vmem:[#allocation4 + $0x170] sm:$0xff]
      %v2459 = vld [vmem:[#allocation4 + $0x178] sm:$0xff]
      %v2460 = vld [vmem:[#allocation4 + $0x180] sm:$0xff]
      %v2461 = vld [vmem:[#allocation4 + $0x188] sm:$0xff]
      %v2462 = vld [vmem:[#allocation4 + $0x190] sm:$0xff]
      %v2463 = vld [vmem:[#allocation4 + $0x198] sm:$0xff]
      %v2464 = vld [vmem:[#allocation4 + $0x1a0] sm:$0xff]
      %v2465 = vld [vmem:[#allocation4 + $0x1a8] sm:$0xff]
      %v2466 = vld [vmem:[#allocation4 + $0x1b0] sm:$0xff]
      %v2467 = vld [vmem:[#allocation4 + $0x1b8] sm:$0xff]
      %v2468 = vld [vmem:[#allocation4 + $0x1c0] sm:$0xff]
      %v2469 = vld [vmem:[#allocation4 + $0x1c8] sm:$0xff]
      %v2470 = vld [vmem:[#allocation4 + $0x1d0] sm:$0xff]
      %v2471 = vld [vmem:[#allocation4 + $0x1d8] sm:$0xff]
      %v2472 = vld [vmem:[#allocation4 + $0x1e0] sm:$0xff]
      %v2473 = vld [vmem:[#allocation4 + $0x1e8] sm:$0xff]
      %v2474 = vld [vmem:[#allocation4 + $0x1f0] sm:$0xff]
      %v2475 = vld [vmem:[#allocation4 + $0x1f8] sm:$0xff]
      %v2476 = vld [vmem:[#allocation4 + $0x200] sm:$0xff]
      %v2477 = vld [vmem:[#allocation4 + $0x208] sm:$0xff]
      %v2478 = vld [vmem:[#allocation4 + $0x210] sm:$0xff]
      %v2479 = vld [vmem:[#allocation4 + $0x218] sm:$0xff]
      %v2480 = vld [vmem:[#allocation4 + $0x220] sm:$0xff]
      %v2481 = vld [vmem:[#allocation4 + $0x228] sm:$0xff]
      %v2482 = vld [vmem:[#allocation4 + $0x230] sm:$0xff]
      %v2483 = vld [vmem:[#allocation4 + $0x238] sm:$0xff]
      %v2484 = vld [vmem:[#allocation4 + $0x240] sm:$0xff]
      %v2485 = vld [vmem:[#allocation4 + $0x248] sm:$0xff]
      %v2486 = vld [vmem:[#allocation4 + $0x250] sm:$0xff]
      %v2487 = vld [vmem:[#allocation4 + $0x258] sm:$0xff]
      %v2488 = vld [vmem:[#allocation4 + $0x260] sm:$0xff]
      %v2489 = vld [vmem:[#allocation4 + $0x268] sm:$0xff]
      %v2490 = vld [vmem:[#allocation4 + $0x270] sm:$0xff]
      %v2491 = vld [vmem:[#allocation4 + $0x278] sm:$0xff]
      %v2492 = vld [vmem:[#allocation4 + $0x280] sm:$0xff]
      %v2493 = vld [vmem:[#allocation4 + $0x288] sm:$0xff]
      %v2494 = vld [vmem:[#allocation4 + $0x290] sm:$0xff]
      %v2495 = vld [vmem:[#allocation4 + $0x298] sm:$0xff]
      %v2496 = vld [vmem:[#allocation4 + $0x2a0] sm:$0xff]
      %v2497 = vld [vmem:[#allocation4 + $0x2a8] sm:$0xff]
      %v2498 = vld [vmem:[#allocation4 + $0x2b0] sm:$0xff]
      %v2499 = vld [vmem:[#allocation4 + $0x2b8] sm:$0xff]
      %v2500 = vld [vmem:[#allocation4 + $0x2c0] sm:$0xff]
      %v2501 = vld [vmem:[#allocation4 + $0x2c8] sm:$0xff]
      %v2502 = vld [vmem:[#allocation4 + $0x2d0] sm:$0xff]
      %v2503 = vld [vmem:[#allocation4 + $0x2d8] sm:$0xff]
      %v2504 = vld [vmem:[#allocation4 + $0x2e0] sm:$0xff]
      %v2505 = vld [vmem:[#allocation4 + $0x2e8] sm:$0xff]
      %v2506 = vld [vmem:[#allocation4 + $0x2f0] sm:$0xff]
      %v2507 = vld [vmem:[#allocation4 + $0x2f8] sm:$0xff]
      %v2508 = vld [vmem:[#allocation4 + $0x300] sm:$0xff]
      %v2509 = vld [vmem:[#allocation4 + $0x308] sm:$0xff]
      %v2510 = vld [vmem:[#allocation4 + $0x310] sm:$0xff]
      %v2511 = vld [vmem:[#allocation4 + $0x318] sm:$0xff]
      %v2512 = vld [vmem:[#allocation4 + $0x320] sm:$0xff]
      %v2513 = vld [vmem:[#allocation4 + $0x328] sm:$0xff]
      %v2514 = vld [vmem:[#allocation4 + $0x330] sm:$0xff]
      %v2515 = vld [vmem:[#allocation4 + $0x338] sm:$0xff]
      %v2516 = vld [vmem:[#allocation4 + $0x340] sm:$0xff]
      %v2517 = vld [vmem:[#allocation4 + $0x348] sm:$0xff]
      %v2518 = vld [vmem:[#allocation4 + $0x350] sm:$0xff]
      %v2519 = vld [vmem:[#allocation4 + $0x358] sm:$0xff]
      %2521 = vset.pattern.permute.xlu0 0
      %2522 = vperm.xlu0 %2521, %v488
      %v2523 = vpop.permute.xlu0 %2522
      %vm2525 = vcmask 719872
      %v2527 = vsel %vm2525, %v487, 0
      %2529 = vmatprep.subr.mxu0 %v2413
      %2530 = vmatpush1.msra.mxu0 %v2412
      %2531 = vmatprep.subr.mxu0 %v2417
      %2532 = vmatpush1.msra.mxu0 %v2416
      %2533 = vmatprep.subr.mxu0 %v2421
      %2534 = vmatpush1.msra.mxu0 %v2420
      %2535 = vmatprep.subr.mxu0 %v2425
      %2536 = vmatpush1.msra.mxu0 %v2424
      %2537 = vmatprep.subr.mxu0 %v2429
      %2538 = vmatpush1.msra.mxu0 %v2428
      %2539 = vmatprep.subr.mxu0 %v2433
      %2540 = vmatpush1.msra.mxu0 %v2432
      %2541 = vmatprep.subr.mxu0 %v2437
      %2542 = vmatpush1.msra.mxu0 %v2436
      %2543 = vmatprep.subr.mxu0 %v2441
      %2544 = vmatpush1.msra.mxu0 %v2440
      %2545 = vmatprep.subr.mxu0 %v2445
      %2546 = vmatpush1.msra.mxu0 %v2444
      %2547 = vmatprep.subr.mxu0 %v2449
      %2548 = vmatpush1.msra.mxu0 %v2448
      %2549 = vmatprep.subr.mxu0 %v2453
      %2550 = vmatpush1.msra.mxu0 %v2452
      %2551 = vmatprep.subr.mxu0 %v2457
      %2552 = vmatpush1.msra.mxu0 %v2456
      %2553 = vmatprep.subr.mxu0 %v2461
      %2554 = vmatpush1.msra.mxu0 %v2460
      %2555 = vmatprep.subr.mxu0 %v2465
      %2556 = vmatpush1.msra.mxu0 %v2464
      %2557 = vmatprep.subr.mxu0 %v2469
      %2558 = vmatpush1.msra.mxu0 %v2468
      %2559 = vmatprep.subr.mxu0 %v2473
      %2560 = vmatpush1.msra.mxu0 %v2472
      %2561 = vmatprep.subr.mxu0 %v2477
      %2562 = vmatpush1.msra.mxu0 %v2476
      %2563 = vmatprep.subr.mxu0 %v2481
      %2564 = vmatpush1.msra.mxu0 %v2480
      %2565 = vmatprep.subr.mxu0 %v2485
      %2566 = vmatpush1.msra.mxu0 %v2484
      %2567 = vmatprep.subr.mxu0 %v2489
      %2568 = vmatpush1.msra.mxu0 %v2488
      %2569 = vmatprep.subr.mxu0 %v2493
      %2570 = vmatpush1.msra.mxu0 %v2492
      %2571 = vmatprep.subr.mxu0 %v2497
      %2572 = vmatpush1.msra.mxu0 %v2496
      %2573 = vmatprep.subr.mxu0 %v2501
      %2574 = vmatpush1.msra.mxu0 %v2500
      %2575 = vmatprep.subr.mxu0 %v2505
      %2576 = vmatpush1.msra.mxu0 %v2504
      %2577 = vmatprep.subr.mxu0 %v2509
      %2578 = vmatpush1.msra.mxu0 %v2508
      %2579 = vmatprep.subr.mxu0 %v2513
      %2580 = vmatpush1.msra.mxu0 %v2512
      %2581 = vmatprep.subr.mxu0 %v2517
      %2582 = vmatpush1.msra.mxu0 %v2516
      %2583 = vmatprep.subr.mxu0 0.0
      %2584 = vmatpush1.msra.mxu0 0.0
      %2585 = vmatprep.subr.mxu0 0.0
      %2586 = vmatpush1.msra.mxu0 0.0
      %2587 = vmatprep.subr.mxu0 0.0
      %2588 = vmatpush1.msra.mxu0 0.0
      %2589 = vmatprep.subr.mxu0 0.0
      %2590 = vmatpush1.msra.mxu0 0.0
      %2591 = vmatprep.subr.mxu0 0.0
      %2592 = vmatpush1.msra.mxu0 0.0
      %2593 = vmatprep.mubr.f32.mxu0 %v2527
      %2594 = vmatmul.mubr.f32.gmra.mrb[0].mxu0 %v486
      %v2595 = vpop.f32.mrb[0].mxu0
      %v2596 = vadd.f32 %v2523, %v2595
      %v2597 = vpop.f32.mrb[0].mxu0
      %v2598 = vadd.f32 %v2523, %v2597
      %2599 = vdwg.mxu0
      %2600 = vmatprep.subr.mxu0 %v2415
      %2601 = vmatpush1.msra.mxu0 %v2414
      %2602 = vmatprep.subr.mxu0 %v2419
      %2603 = vmatpush1.msra.mxu0 %v2418
      %2604 = vmatprep.subr.mxu0 %v2423
      %2605 = vmatpush1.msra.mxu0 %v2422
      %2606 = vmatprep.subr.mxu0 %v2427
      %2607 = vmatpush1.msra.mxu0 %v2426
      %2608 = vmatprep.subr.mxu0 %v2431
      %2609 = vmatpush1.msra.mxu0 %v2430
      %2610 = vmatprep.subr.mxu0 %v2435
      %2611 = vmatpush1.msra.mxu0 %v2434
      %2612 = vmatprep.subr.mxu0 %v2439
      %2613 = vmatpush1.msra.mxu0 %v2438
      %2614 = vmatprep.subr.mxu0 %v2443
      %2615 = vmatpush1.msra.mxu0 %v2442
      %2616 = vmatprep.subr.mxu0 %v2447
      %2617 = vmatpush1.msra.mxu0 %v2446
      %2618 = vmatprep.subr.mxu0 %v2451
      %2619 = vmatpush1.msra.mxu0 %v2450
      %2620 = vmatprep.subr.mxu0 %v2455
      %2621 = vmatpush1.msra.mxu0 %v2454
      %2622 = vmatprep.subr.mxu0 %v2459
      %2623 = vmatpush1.msra.mxu0 %v2458
      %2624 = vmatprep.subr.mxu0 %v2463
      %2625 = vmatpush1.msra.mxu0 %v2462
      %2626 = vmatprep.subr.mxu0 %v2467
      %2627 = vmatpush1.msra.mxu0 %v2466
      %2628 = vmatprep.subr.mxu0 %v2471
      %2629 = vmatpush1.msra.mxu0 %v2470
      %2630 = vmatprep.subr.mxu0 %v2475
      %2631 = vmatpush1.msra.mxu0 %v2474
      %2632 = vmatprep.subr.mxu0 %v2479
      %2633 = vmatpush1.msra.mxu0 %v2478
      %2634 = vmatprep.subr.mxu0 %v2483
      %2635 = vmatpush1.msra.mxu0 %v2482
      %2636 = vmatprep.subr.mxu0 %v2487
      %2637 = vmatpush1.msra.mxu0 %v2486
      %2638 = vmatprep.subr.mxu0 %v2491
      %2639 = vmatpush1.msra.mxu0 %v2490
      %2640 = vmatprep.subr.mxu0 %v2495
      %2641 = vmatpush1.msra.mxu0 %v2494
      %2642 = vmatprep.subr.mxu0 %v2499
      %2643 = vmatpush1.msra.mxu0 %v2498
      %2644 = vmatprep.subr.mxu0 %v2503
      %2645 = vmatpush1.msra.mxu0 %v2502
      %2646 = vmatprep.subr.mxu0 %v2507
      %2647 = vmatpush1.msra.mxu0 %v2506
      %2648 = vmatprep.subr.mxu0 %v2511
      %2649 = vmatpush1.msra.mxu0 %v2510
      %2650 = vmatprep.subr.mxu0 %v2515
      %2651 = vmatpush1.msra.mxu0 %v2514
      %2652 = vmatprep.subr.mxu0 %v2519
      %2653 = vmatpush1.msra.mxu0 %v2518
      %2654 = vmatprep.subr.mxu0 0.0
      %2655 = vmatpush1.msra.mxu0 0.0
      %2656 = vmatprep.subr.mxu0 0.0
      %2657 = vmatpush1.msra.mxu0 0.0
      %2658 = vmatprep.subr.mxu0 0.0
      %2659 = vmatpush1.msra.mxu0 0.0
      %2660 = vmatprep.subr.mxu0 0.0
      %2661 = vmatpush1.msra.mxu0 0.0
      %2662 = vmatprep.subr.mxu0 0.0
      %2663 = vmatpush1.msra.mxu0 0.0
      %2664 = vmatprep.mubr.f32.mxu0 %v2527
      %2665 = vmatmul.mubr.f32.gmra.mrb[0].mxu0 %v486
      %v2666 = vpop.f32.mrb[0].mxu0
      %v2667 = vadd.f32 %v2523, %v2666
      %v2668 = vpop.f32.mrb[0].mxu0
      %v2669 = vadd.f32 %v2523, %v2668
      %2670 = vdwg.mxu0
      %v2671 = vmax.f32 %v2596, 0.0
      %v2672 = vmax.f32 %v2598, 0.0
      %v2673 = vmax.f32 %v2667, 0.0
      %v2674 = vmax.f32 %v2669, 0.0
      %2675 = vst [vmem:[#allocation3 + $0x8] sm:$0xff] %v2671
      %2676 = vst [vmem:[#allocation3 + $0x10] sm:$0xff] %v2672
      %2677 = vst [vmem:[#allocation3 + $0x18] sm:$0xff] %v2673
      %2678 = vst [vmem:[#allocation3 + $0x20] sm:$0xff] %v2674
      %v2679 = vld [vmem:[%s6] sm:$0xff]
      %v2680 = vld [vmem:[%s6 + $0x8] sm:$0xff]
      %v2681 = vld [vmem:[%s7] sm:$0xff]
      %v2682 = vld [vmem:[#allocation3] sm:$0xff]
      %v2683 = vld [vmem:[#allocation3 + $0x8] sm:$0xff]
      %v2684 = vld [vmem:[#allocation3 + $0x10] sm:$0xff]
      %v2685 = vld [vmem:[#allocation3 + $0x18] sm:$0xff]
      %v2686 = vld [vmem:[#allocation3 + $0x20] sm:$0xff]
      %v2687 = vld [vmem:[%s0] ss:$8 sm:$0xf]
      %v2689 = vlaneseq
      %v2690 = vshrl.u32 %v2689, 7
      %v2691 = vsub.s32 0, %v2690
      %v2692 = vrot.slane %v2687, %v2691
      %v2693 = vlaneseq
      %v2694 = vshrl.u32 %v2693, 7
      %v2695 = vsub.s32 1, %v2694
      %v2696 = vrot.slane %v2687, %v2695
      %v2697 = vlaneseq
      %v2698 = vshrl.u32 %v2697, 7
      %v2699 = vsub.s32 2, %v2698
      %v2700 = vrot.slane %v2687, %v2699
      %v2701 = vlaneseq
      %v2702 = vshrl.u32 %v2701, 7
      %v2703 = vsub.s32 3, %v2702
      %v2704 = vrot.slane %v2687, %v2703
      %2705 = vrot.lane.b32.xlu0 %v2692, 55
      %v2706 = vpop.permute.xlu0 %2705
      %2707 = vrot.lane.b32.xlu0 %v2696, 55
      %v2708 = vpop.permute.xlu0 %2707
      %2709 = vrot.lane.b32.xlu0 %v2700, 55
      %v2710 = vpop.permute.xlu0 %2709
      %2711 = vrot.lane.b32.xlu0 %v2704, 55
      %v2712 = vpop.permute.xlu0 %2711
      %v2713 = vsel %vm520, %v2706, %v2708
      %v2714 = vsel %vm520, %v2708, %v2710
      %v2715 = vsel %vm520, %v2710, %v2712
      %v2721 = vmul.f32 %v2682, %v2706
      %v2722 = vmul.f32 %v2683, %v2713
      %v2723 = vmul.f32 %v2684, %v2714
      %v2724 = vmul.f32 %v2685, %v2715
      %v2725 = vmul.f32 %v2686, %v2712
      %2731 = vrot.lane.b32.xlu0 %v2721, 73
      %v2732 = vpop.permute.xlu0 %2731
      %2733 = vrot.lane.b32.xlu0 %v2722, 73
      %v2734 = vpop.permute.xlu0 %2733
      %2735 = vrot.lane.b32.xlu0 %v2723, 73
      %v2736 = vpop.permute.xlu0 %2735
      %2737 = vrot.lane.b32.xlu0 %v2724, 73
      %v2738 = vpop.permute.xlu0 %2737
      %2739 = vrot.lane.b32.xlu0 %v2725, 73
      %v2740 = vpop.permute.xlu0 %2739
      %v2741 = vsel %vm549, %v2732, %v2734
      %v2742 = vsel %vm549, %v2734, %v2736
      %v2743 = vsel %vm549, %v2736, %v2738
      %v2744 = vsel %vm549, %v2738, %v2740
      %2749 = vst [vmem:[#allocation4] sm:$0xff] %v2741
      %2750 = vst [vmem:[#allocation4 + $0x8] sm:$0xff] %v2742
      %2751 = vst [vmem:[#allocation4 + $0x10] sm:$0xff] %v2743
      %2752 = vst [vmem:[#allocation4 + $0x18] sm:$0xff] %v2744
      %v2753 = vld [vmem:[#allocation3] sm:$0xff]
      %v2754 = vld [vmem:[#allocation3 + $0x8] sm:$0xff]
      %v2755 = vld [vmem:[#allocation3 + $0x10] sm:$0xff]
      %v2756 = vld [vmem:[#allocation3 + $0x18] sm:$0xff]
      %v2757 = vld [vmem:[#allocation3 + $0x20] sm:$0xff]
      %v2758 = vld [vmem:[%s567] ss:$8 sm:$0xf]
      %v2760 = vlaneseq
      %v2761 = vshrl.u32 %v2760, 7
      %v2762 = vsub.s32 0, %v2761
      %v2763 = vrot.slane %v2758, %v2762
      %v2764 = vlaneseq
      %v2765 = vshrl.u32 %v2764, 7
      %v2766 = vsub.s32 1, %v2765
      %v2767 = vrot.slane %v2758, %v2766
      %v2768 = vlaneseq
      %v2769 = vshrl.u32 %v2768, 7
      %v2770 = vsub.s32 2, %v2769
      %v2771 = vrot.slane %v2758, %v2770
      %v2772 = vlaneseq
      %v2773 = vshrl.u32 %v2772, 7
      %v2774 = vsub.s32 3, %v2773
      %v2775 = vrot.slane %v2758, %v2774
      %2776 = vrot.lane.b32.xlu0 %v2763, 56
      %v2777 = vpop.permute.xlu0 %2776
      %2778 = vrot.lane.b32.xlu0 %v2767, 56
      %v2779 = vpop.permute.xlu0 %2778
      %2780 = vrot.lane.b32.xlu0 %v2771, 56
      %v2781 = vpop.permute.xlu0 %2780
      %2782 = vrot.lane.b32.xlu0 %v2775, 56
      %v2783 = vpop.permute.xlu0 %2782
      %v2784 = vsel %vm594, %v2777, %v2779
      %v2785 = vsel %vm594, %v2779, %v2781
      %v2786 = vsel %vm594, %v2781, %v2783
      %v2792 = vmul.f32 %v2753, %v2777
      %v2793 = vmul.f32 %v2754, %v2784
      %v2794 = vmul.f32 %v2755, %v2785
      %v2795 = vmul.f32 %v2756, %v2786
      %v2796 = vmul.f32 %v2757, %v2783
      %2802 = vrot.lane.b32.xlu0 %v2792, 72
      %v2803 = vpop.permute.xlu0 %2802
      %2804 = vrot.lane.b32.xlu0 %v2793, 72
      %v2805 = vpop.permute.xlu0 %2804
      %2806 = vrot.lane.b32.xlu0 %v2794, 72
      %v2807 = vpop.permute.xlu0 %2806
      %2808 = vrot.lane.b32.xlu0 %v2795, 72
      %v2809 = vpop.permute.xlu0 %2808
      %2810 = vrot.lane.b32.xlu0 %v2796, 72
      %v2811 = vpop.permute.xlu0 %2810
      %v2812 = vsel %vm623, %v2803, %v2805
      %v2813 = vsel %vm623, %v2805, %v2807
      %v2814 = vsel %vm623, %v2807, %v2809
      %v2815 = vsel %vm623, %v2809, %v2811
      %2820 = vst [vmem:[#allocation4 + $0x20] sm:$0xff] %v2812
      %2821 = vst [vmem:[#allocation4 + $0x28] sm:$0xff] %v2813
      %2822 = vst [vmem:[#allocation4 + $0x30] sm:$0xff] %v2814
      %2823 = vst [vmem:[#allocation4 + $0x38] sm:$0xff] %v2815
      %v2824 = vld [vmem:[#allocation3] sm:$0xff]
      %v2825 = vld [vmem:[#allocation3 + $0x8] sm:$0xff]
      %v2826 = vld [vmem:[#allocation3 + $0x10] sm:$0xff]
      %v2827 = vld [vmem:[#allocation3 + $0x18] sm:$0xff]
      %v2828 = vld [vmem:[#allocation3 + $0x20] sm:$0xff]
      %v2829 = vld [vmem:[%s641] ss:$8 sm:$0xf]
      %v2831 = vlaneseq
      %v2832 = vshrl.u32 %v2831, 7
      %v2833 = vsub.s32 0, %v2832
      %v2834 = vrot.slane %v2829, %v2833
      %v2835 = vlaneseq
      %v2836 = vshrl.u32 %v2835, 7
      %v2837 = vsub.s32 1, %v2836
      %v2838 = vrot.slane %v2829, %v2837
      %v2839 = vlaneseq
      %v2840 = vshrl.u32 %v2839, 7
      %v2841 = vsub.s32 2, %v2840
      %v2842 = vrot.slane %v2829, %v2841
      %v2843 = vlaneseq
      %v2844 = vshrl.u32 %v2843, 7
      %v2845 = vsub.s32 3, %v2844
      %v2846 = vrot.slane %v2829, %v2845
      %2847 = vrot.lane.b32.xlu0 %v2834, 57
      %v2848 = vpop.permute.xlu0 %2847
      %2849 = vrot.lane.b32.xlu0 %v2838, 57
      %v2850 = vpop.permute.xlu0 %2849
      %2851 = vrot.lane.b32.xlu0 %v2842, 57
      %v2852 = vpop.permute.xlu0 %2851
      %2853 = vrot.lane.b32.xlu0 %v2846, 57
      %v2854 = vpop.permute.xlu0 %2853
      %v2855 = vsel %vm668, %v2848, %v2850
      %v2856 = vsel %vm668, %v2850, %v2852
      %v2857 = vsel %vm668, %v2852, %v2854
      %v2863 = vmul.f32 %v2824, %v2848
      %v2864 = vmul.f32 %v2825, %v2855
      %v2865 = vmul.f32 %v2826, %v2856
      %v2866 = vmul.f32 %v2827, %v2857
      %v2867 = vmul.f32 %v2828, %v2854
      %2873 = vrot.lane.b32.xlu0 %v2863, 71
      %v2874 = vpop.permute.xlu0 %2873
      %2875 = vrot.lane.b32.xlu0 %v2864, 71
      %v2876 = vpop.permute.xlu0 %2875
      %2877 = vrot.lane.b32.xlu0 %v2865, 71
      %v2878 = vpop.permute.xlu0 %2877
      %2879 = vrot.lane.b32.xlu0 %v2866, 71
      %v2880 = vpop.permute.xlu0 %2879
      %2881 = vrot.lane.b32.xlu0 %v2867, 71
      %v2882 = vpop.permute.xlu0 %2881
      %v2883 = vsel %vm697, %v2874, %v2876
      %v2884 = vsel %vm697, %v2876, %v2878
      %v2885 = vsel %vm697, %v2878, %v2880
      %v2886 = vsel %vm697, %v2880, %v2882
      %2891 = vst [vmem:[#allocation4 + $0x40] sm:$0xff] %v2883
      %2892 = vst [vmem:[#allocation4 + $0x48] sm:$0xff] %v2884
      %2893 = vst [vmem:[#allocation4 + $0x50] sm:$0xff] %v2885
      %2894 = vst [vmem:[#allocation4 + $0x58] sm:$0xff] %v2886
      %v2895 = vld [vmem:[#allocation3] sm:$0xff]
      %v2896 = vld [vmem:[#allocation3 + $0x8] sm:$0xff]
      %v2897 = vld [vmem:[#allocation3 + $0x10] sm:$0xff]
      %v2898 = vld [vmem:[#allocation3 + $0x18] sm:$0xff]
      %v2899 = vld [vmem:[#allocation3 + $0x20] sm:$0xff]
      %v2900 = vld [vmem:[%s715] ss:$8 sm:$0xf]
      %v2902 = vlaneseq
      %v2903 = vshrl.u32 %v2902, 7
      %v2904 = vsub.s32 0, %v2903
      %v2905 = vrot.slane %v2900, %v2904
      %v2906 = vlaneseq
      %v2907 = vshrl.u32 %v2906, 7
      %v2908 = vsub.s32 1, %v2907
      %v2909 = vrot.slane %v2900, %v2908
      %v2910 = vlaneseq
      %v2911 = vshrl.u32 %v2910, 7
      %v2912 = vsub.s32 2, %v2911
      %v2913 = vrot.slane %v2900, %v2912
      %v2914 = vlaneseq
      %v2915 = vshrl.u32 %v2914, 7
      %v2916 = vsub.s32 3, %v2915
      %v2917 = vrot.slane %v2900, %v2916
      %2918 = vrot.lane.b32.xlu0 %v2905, 63
      %v2919 = vpop.permute.xlu0 %2918
      %2920 = vrot.lane.b32.xlu0 %v2909, 63
      %v2921 = vpop.permute.xlu0 %2920
      %2922 = vrot.lane.b32.xlu0 %v2913, 63
      %v2923 = vpop.permute.xlu0 %2922
      %2924 = vrot.lane.b32.xlu0 %v2917, 63
      %v2925 = vpop.permute.xlu0 %2924
      %v2926 = vsel %vm742, %v2919, %v2921
      %v2927 = vsel %vm742, %v2921, %v2923
      %v2928 = vsel %vm742, %v2923, %v2925
      %v2934 = vmul.f32 %v2895, %v2919
      %v2935 = vmul.f32 %v2896, %v2926
      %v2936 = vmul.f32 %v2897, %v2927
      %v2937 = vmul.f32 %v2898, %v2928
      %v2938 = vmul.f32 %v2899, %v2925
      %2944 = vrot.lane.b32.xlu0 %v2934, 65
      %v2945 = vpop.permute.xlu0 %2944
      %2946 = vrot.lane.b32.xlu0 %v2935, 65
      %v2947 = vpop.permute.xlu0 %2946
      %2948 = vrot.lane.b32.xlu0 %v2936, 65
      %v2949 = vpop.permute.xlu0 %2948
      %2950 = vrot.lane.b32.xlu0 %v2937, 65
      %v2951 = vpop.permute.xlu0 %2950
      %2952 = vrot.lane.b32.xlu0 %v2938, 65
      %v2953 = vpop.permute.xlu0 %2952
      %v2954 = vsel %vm771, %v2945, %v2947
      %v2955 = vsel %vm771, %v2947, %v2949
      %v2956 = vsel %vm771, %v2949, %v2951
      %v2957 = vsel %vm771, %v2951, %v2953
      %2962 = vst [vmem:[#allocation4 + $0x60] sm:$0xff] %v2954
      %2963 = vst [vmem:[#allocation4 + $0x68] sm:$0xff] %v2955
      %2964 = vst [vmem:[#allocation4 + $0x70] sm:$0xff] %v2956
      %2965 = vst [vmem:[#allocation4 + $0x78] sm:$0xff] %v2957
      %v2966 = vld [vmem:[#allocation3] sm:$0xff]
      %v2967 = vld [vmem:[#allocation3 + $0x8] sm:$0xff]
      %v2968 = vld [vmem:[#allocation3 + $0x10] sm:$0xff]
      %v2969 = vld [vmem:[#allocation3 + $0x18] sm:$0xff]
      %v2970 = vld [vmem:[#allocation3 + $0x20] sm:$0xff]
      %v2971 = vld [vmem:[%s789] ss:$8 sm:$0xf]
      %v2973 = vlaneseq
      %v2974 = vshrl.u32 %v2973, 7
      %v2975 = vsub.s32 0, %v2974
      %v2976 = vrot.slane %v2971, %v2975
      %v2977 = vlaneseq
      %v2978 = vshrl.u32 %v2977, 7
      %v2979 = vsub.s32 1, %v2978
      %v2980 = vrot.slane %v2971, %v2979
      %v2981 = vlaneseq
      %v2982 = vshrl.u32 %v2981, 7
      %v2983 = vsub.s32 2, %v2982
      %v2984 = vrot.slane %v2971, %v2983
      %v2985 = vlaneseq
      %v2986 = vshrl.u32 %v2985, 7
      %v2987 = vsub.s32 3, %v2986
      %v2988 = vrot.slane %v2971, %v2987
      %2989 = vrot.lane.b32.xlu0 %v2976, 64
      %v2990 = vpop.permute.xlu0 %2989
      %2991 = vrot.lane.b32.xlu0 %v2980, 64
      %v2992 = vpop.permute.xlu0 %2991
      %2993 = vrot.lane.b32.xlu0 %v2984, 64
      %v2994 = vpop.permute.xlu0 %2993
      %2995 = vrot.lane.b32.xlu0 %v2988, 64
      %v2996 = vpop.permute.xlu0 %2995
      %v2997 = vsel %vm816, %v2990, %v2992
      %v2998 = vsel %vm816, %v2992, %v2994
      %v2999 = vsel %vm816, %v2994, %v2996
      %v3005 = vmul.f32 %v2966, %v2990
      %v3006 = vmul.f32 %v2967, %v2997
      %v3007 = vmul.f32 %v2968, %v2998
      %v3008 = vmul.f32 %v2969, %v2999
      %v3009 = vmul.f32 %v2970, %v2996
      %3015 = vrot.lane.b32.xlu0 %v3005, 64
      %v3016 = vpop.permute.xlu0 %3015
      %3017 = vrot.lane.b32.xlu0 %v3006, 64
      %v3018 = vpop.permute.xlu0 %3017
      %3019 = vrot.lane.b32.xlu0 %v3007, 64
      %v3020 = vpop.permute.xlu0 %3019
      %3021 = vrot.lane.b32.xlu0 %v3008, 64
      %v3022 = vpop.permute.xlu0 %3021
      %3023 = vrot.lane.b32.xlu0 %v3009, 64
      %v3024 = vpop.permute.xlu0 %3023
      %v3025 = vsel %vm816, %v3016, %v3018
      %v3026 = vsel %vm816, %v3018, %v3020
      %v3027 = vsel %vm816, %v3020, %v3022
      %v3028 = vsel %vm816, %v3022, %v3024
      %3033 = vst [vmem:[#allocation4 + $0x80] sm:$0xff] %v3025
      %3034 = vst [vmem:[#allocation4 + $0x88] sm:$0xff] %v3026
      %3035 = vst [vmem:[#allocation4 + $0x90] sm:$0xff] %v3027
      %3036 = vst [vmem:[#allocation4 + $0x98] sm:$0xff] %v3028
      %v3037 = vld [vmem:[#allocation3] sm:$0xff]
      %v3038 = vld [vmem:[#allocation3 + $0x8] sm:$0xff]
      %v3039 = vld [vmem:[#allocation3 + $0x10] sm:$0xff]
      %v3040 = vld [vmem:[#allocation3 + $0x18] sm:$0xff]
      %v3041 = vld [vmem:[#allocation3 + $0x20] sm:$0xff]
      %v3042 = vld [vmem:[%s862] ss:$8 sm:$0xf]
      %v3044 = vlaneseq
      %v3045 = vshrl.u32 %v3044, 7
      %v3046 = vsub.s32 0, %v3045
      %v3047 = vrot.slane %v3042, %v3046
      %v3048 = vlaneseq
      %v3049 = vshrl.u32 %v3048, 7
      %v3050 = vsub.s32 1, %v3049
      %v3051 = vrot.slane %v3042, %v3050
      %v3052 = vlaneseq
      %v3053 = vshrl.u32 %v3052, 7
      %v3054 = vsub.s32 2, %v3053
      %v3055 = vrot.slane %v3042, %v3054
      %v3056 = vlaneseq
      %v3057 = vshrl.u32 %v3056, 7
      %v3058 = vsub.s32 3, %v3057
      %v3059 = vrot.slane %v3042, %v3058
      %3060 = vrot.lane.b32.xlu0 %v3047, 65
      %v3061 = vpop.permute.xlu0 %3060
      %3062 = vrot.lane.b32.xlu0 %v3051, 65
      %v3063 = vpop.permute.xlu0 %3062
      %3064 = vrot.lane.b32.xlu0 %v3055, 65
      %v3065 = vpop.permute.xlu0 %3064
      %3066 = vrot.lane.b32.xlu0 %v3059, 65
      %v3067 = vpop.permute.xlu0 %3066
      %v3068 = vsel %vm771, %v3061, %v3063
      %v3069 = vsel %vm771, %v3063, %v3065
      %v3070 = vsel %vm771, %v3065, %v3067
      %v3076 = vmul.f32 %v3037, %v3061
      %v3077 = vmul.f32 %v3038, %v3068
      %v3078 = vmul.f32 %v3039, %v3069
      %v3079 = vmul.f32 %v3040, %v3070
      %v3080 = vmul.f32 %v3041, %v3067
      %3086 = vrot.lane.b32.xlu0 %v3076, 63
      %v3087 = vpop.permute.xlu0 %3086
      %3088 = vrot.lane.b32.xlu0 %v3077, 63
      %v3089 = vpop.permute.xlu0 %3088
      %3090 = vrot.lane.b32.xlu0 %v3078, 63
      %v3091 = vpop.permute.xlu0 %3090
      %3092 = vrot.lane.b32.xlu0 %v3079, 63
      %v3093 = vpop.permute.xlu0 %3092
      %3094 = vrot.lane.b32.xlu0 %v3080, 63
      %v3095 = vpop.permute.xlu0 %3094
      %v3096 = vsel %vm742, %v3087, %v3089
      %v3097 = vsel %vm742, %v3089, %v3091
      %v3098 = vsel %vm742, %v3091, %v3093
      %v3099 = vsel %vm742, %v3093, %v3095
      %3104 = vst [vmem:[#allocation4 + $0xa0] sm:$0xff] %v3096
      %3105 = vst [vmem:[#allocation4 + $0xa8] sm:$0xff] %v3097
      %3106 = vst [vmem:[#allocation4 + $0xb0] sm:$0xff] %v3098
      %3107 = vst [vmem:[#allocation4 + $0xb8] sm:$0xff] %v3099
      %v3108 = vld [vmem:[#allocation3] sm:$0xff]
      %v3109 = vld [vmem:[#allocation3 + $0x8] sm:$0xff]
      %v3110 = vld [vmem:[#allocation3 + $0x10] sm:$0xff]
      %v3111 = vld [vmem:[#allocation3 + $0x18] sm:$0xff]
      %v3112 = vld [vmem:[#allocation3 + $0x20] sm:$0xff]
      %v3113 = vld [vmem:[%s934] ss:$8 sm:$0xf]
      %v3115 = vlaneseq
      %v3116 = vshrl.u32 %v3115, 7
      %v3117 = vsub.s32 0, %v3116
      %v3118 = vrot.slane %v3113, %v3117
      %v3119 = vlaneseq
      %v3120 = vshrl.u32 %v3119, 7
      %v3121 = vsub.s32 1, %v3120
      %v3122 = vrot.slane %v3113, %v3121
      %v3123 = vlaneseq
      %v3124 = vshrl.u32 %v3123, 7
      %v3125 = vsub.s32 2, %v3124
      %v3126 = vrot.slane %v3113, %v3125
      %v3127 = vlaneseq
      %v3128 = vshrl.u32 %v3127, 7
      %v3129 = vsub.s32 3, %v3128
      %v3130 = vrot.slane %v3113, %v3129
      %3131 = vrot.lane.b32.xlu0 %v3118, 71
      %v3132 = vpop.permute.xlu0 %3131
      %3133 = vrot.lane.b32.xlu0 %v3122, 71
      %v3134 = vpop.permute.xlu0 %3133
      %3135 = vrot.lane.b32.xlu0 %v3126, 71
      %v3136 = vpop.permute.xlu0 %3135
      %3137 = vrot.lane.b32.xlu0 %v3130, 71
      %v3138 = vpop.permute.xlu0 %3137
      %v3139 = vsel %vm697, %v3132, %v3134
      %v3140 = vsel %vm697, %v3134, %v3136
      %v3141 = vsel %vm697, %v3136, %v3138
      %v3147 = vmul.f32 %v3108, %v3132
      %v3148 = vmul.f32 %v3109, %v3139
      %v3149 = vmul.f32 %v3110, %v3140
      %v3150 = vmul.f32 %v3111, %v3141
      %v3151 = vmul.f32 %v3112, %v3138
      %3157 = vrot.lane.b32.xlu0 %v3147, 57
      %v3158 = vpop.permute.xlu0 %3157
      %3159 = vrot.lane.b32.xlu0 %v3148, 57
      %v3160 = vpop.permute.xlu0 %3159
      %3161 = vrot.lane.b32.xlu0 %v3149, 57
      %v3162 = vpop.permute.xlu0 %3161
      %3163 = vrot.lane.b32.xlu0 %v3150, 57
      %v3164 = vpop.permute.xlu0 %3163
      %3165 = vrot.lane.b32.xlu0 %v3151, 57
      %v3166 = vpop.permute.xlu0 %3165
      %v3167 = vsel %vm668, %v3158, %v3160
      %v3168 = vsel %vm668, %v3160, %v3162
      %v3169 = vsel %vm668, %v3162, %v3164
      %v3170 = vsel %vm668, %v3164, %v3166
      %3175 = vst [vmem:[#allocation4 + $0xc0] sm:$0xff] %v3167
      %3176 = vst [vmem:[#allocation4 + $0xc8] sm:$0xff] %v3168
      %3177 = vst [vmem:[#allocation4 + $0xd0] sm:$0xff] %v3169
      %3178 = vst [vmem:[#allocation4 + $0xd8] sm:$0xff] %v3170
      %v3179 = vld [vmem:[#allocation3] sm:$0xff]
      %v3180 = vld [vmem:[#allocation3 + $0x8] sm:$0xff]
      %v3181 = vld [vmem:[#allocation3 + $0x10] sm:$0xff]
      %v3182 = vld [vmem:[#allocation3 + $0x18] sm:$0xff]
      %v3183 = vld [vmem:[#allocation3 + $0x20] sm:$0xff]
      %v3184 = vld [vmem:[%s1006] ss:$8 sm:$0xf]
      %v3186 = vlaneseq
      %v3187 = vshrl.u32 %v3186, 7
      %v3188 = vsub.s32 0, %v3187
      %v3189 = vrot.slane %v3184, %v3188
      %v3190 = vlaneseq
      %v3191 = vshrl.u32 %v3190, 7
      %v3192 = vsub.s32 1, %v3191
      %v3193 = vrot.slane %v3184, %v3192
      %v3194 = vlaneseq
      %v3195 = vshrl.u32 %v3194, 7
      %v3196 = vsub.s32 2, %v3195
      %v3197 = vrot.slane %v3184, %v3196
      %v3198 = vlaneseq
      %v3199 = vshrl.u32 %v3198, 7
      %v3200 = vsub.s32 3, %v3199
      %v3201 = vrot.slane %v3184, %v3200
      %3202 = vrot.lane.b32.xlu0 %v3189, 72
      %v3203 = vpop.permute.xlu0 %3202
      %3204 = vrot.lane.b32.xlu0 %v3193, 72
      %v3205 = vpop.permute.xlu0 %3204
      %3206 = vrot.lane.b32.xlu0 %v3197, 72
      %v3207 = vpop.permute.xlu0 %3206
      %3208 = vrot.lane.b32.xlu0 %v3201, 72
      %v3209 = vpop.permute.xlu0 %3208
      %v3210 = vsel %vm623, %v3203, %v3205
      %v3211 = vsel %vm623, %v3205, %v3207
      %v3212 = vsel %vm623, %v3207, %v3209
      %v3218 = vmul.f32 %v3179, %v3203
      %v3219 = vmul.f32 %v3180, %v3210
      %v3220 = vmul.f32 %v3181, %v3211
      %v3221 = vmul.f32 %v3182, %v3212
      %v3222 = vmul.f32 %v3183, %v3209
      %3228 = vrot.lane.b32.xlu0 %v3218, 56
      %v3229 = vpop.permute.xlu0 %3228
      %3230 = vrot.lane.b32.xlu0 %v3219, 56
      %v3231 = vpop.permute.xlu0 %3230
      %3232 = vrot.lane.b32.xlu0 %v3220, 56
      %v3233 = vpop.permute.xlu0 %3232
      %3234 = vrot.lane.b32.xlu0 %v3221, 56
      %v3235 = vpop.permute.xlu0 %3234
      %3236 = vrot.lane.b32.xlu0 %v3222, 56
      %v3237 = vpop.permute.xlu0 %3236
      %v3238 = vsel %vm594, %v3229, %v3231
      %v3239 = vsel %vm594, %v3231, %v3233
      %v3240 = vsel %vm594, %v3233, %v3235
      %v3241 = vsel %vm594, %v3235, %v3237
      %3246 = vst [vmem:[#allocation4 + $0xe0] sm:$0xff] %v3238
      %3247 = vst [vmem:[#allocation4 + $0xe8] sm:$0xff] %v3239
      %3248 = vst [vmem:[#allocation4 + $0xf0] sm:$0xff] %v3240
      %3249 = vst [vmem:[#allocation4 + $0xf8] sm:$0xff] %v3241
      %v3250 = vld [vmem:[#allocation3] sm:$0xff]
      %v3251 = vld [vmem:[#allocation3 + $0x8] sm:$0xff]
      %v3252 = vld [vmem:[#allocation3 + $0x10] sm:$0xff]
      %v3253 = vld [vmem:[#allocation3 + $0x18] sm:$0xff]
      %v3254 = vld [vmem:[#allocation3 + $0x20] sm:$0xff]
      %v3255 = vld [vmem:[%s1078] ss:$8 sm:$0xf]
      %v3257 = vlaneseq
      %v3258 = vshrl.u32 %v3257, 7
      %v3259 = vsub.s32 0, %v3258
      %v3260 = vrot.slane %v3255, %v3259
      %v3261 = vlaneseq
      %v3262 = vshrl.u32 %v3261, 7
      %v3263 = vsub.s32 1, %v3262
      %v3264 = vrot.slane %v3255, %v3263
      %v3265 = vlaneseq
      %v3266 = vshrl.u32 %v3265, 7
      %v3267 = vsub.s32 2, %v3266
      %v3268 = vrot.slane %v3255, %v3267
      %v3269 = vlaneseq
      %v3270 = vshrl.u32 %v3269, 7
      %v3271 = vsub.s32 3, %v3270
      %v3272 = vrot.slane %v3255, %v3271
      %3273 = vrot.lane.b32.xlu0 %v3260, 73
      %v3274 = vpop.permute.xlu0 %3273
      %3275 = vrot.lane.b32.xlu0 %v3264, 73
      %v3276 = vpop.permute.xlu0 %3275
      %3277 = vrot.lane.b32.xlu0 %v3268, 73
      %v3278 = vpop.permute.xlu0 %3277
      %3279 = vrot.lane.b32.xlu0 %v3272, 73
      %v3280 = vpop.permute.xlu0 %3279
      %v3281 = vsel %vm549, %v3274, %v3276
      %v3282 = vsel %vm549, %v3276, %v3278
      %v3283 = vsel %vm549, %v3278, %v3280
      %v3289 = vmul.f32 %v3250, %v3274
      %v3290 = vmul.f32 %v3251, %v3281
      %v3291 = vmul.f32 %v3252, %v3282
      %v3292 = vmul.f32 %v3253, %v3283
      %v3293 = vmul.f32 %v3254, %v3280
      %3299 = vrot.lane.b32.xlu0 %v3289, 55
      %v3300 = vpop.permute.xlu0 %3299
      %3301 = vrot.lane.b32.xlu0 %v3290, 55
      %v3302 = vpop.permute.xlu0 %3301
      %3303 = vrot.lane.b32.xlu0 %v3291, 55
      %v3304 = vpop.permute.xlu0 %3303
      %3305 = vrot.lane.b32.xlu0 %v3292, 55
      %v3306 = vpop.permute.xlu0 %3305
      %3307 = vrot.lane.b32.xlu0 %v3293, 55
      %v3308 = vpop.permute.xlu0 %3307
      %v3309 = vsel %vm520, %v3300, %v3302
      %v3310 = vsel %vm520, %v3302, %v3304
      %v3311 = vsel %vm520, %v3304, %v3306
      %v3312 = vsel %vm520, %v3306, %v3308
      %3317 = vst [vmem:[#allocation4 + $0x100] sm:$0xff] %v3309
      %3318 = vst [vmem:[#allocation4 + $0x108] sm:$0xff] %v3310
      %3319 = vst [vmem:[#allocation4 + $0x110] sm:$0xff] %v3311
      %3320 = vst [vmem:[#allocation4 + $0x118] sm:$0xff] %v3312
      %v3321 = vld [vmem:[#allocation3] sm:$0xff]
      %v3322 = vld [vmem:[#allocation3 + $0x8] sm:$0xff]
      %v3323 = vld [vmem:[#allocation3 + $0x10] sm:$0xff]
      %v3324 = vld [vmem:[#allocation3 + $0x18] sm:$0xff]
      %v3325 = vld [vmem:[#allocation3 + $0x20] sm:$0xff]
      %v3326 = vld [vmem:[%s1150] ss:$8 sm:$0xf]
      %v3328 = vlaneseq
      %v3329 = vshrl.u32 %v3328, 7
      %v3330 = vsub.s32 0, %v3329
      %v3331 = vrot.slane %v3326, %v3330
      %v3332 = vlaneseq
      %v3333 = vshrl.u32 %v3332, 7
      %v3334 = vsub.s32 1, %v3333
      %v3335 = vrot.slane %v3326, %v3334
      %v3336 = vlaneseq
      %v3337 = vshrl.u32 %v3336, 7
      %v3338 = vsub.s32 2, %v3337
      %v3339 = vrot.slane %v3326, %v3338
      %v3340 = vlaneseq
      %v3341 = vshrl.u32 %v3340, 7
      %v3342 = vsub.s32 3, %v3341
      %v3343 = vrot.slane %v3326, %v3342
      %3344 = vrot.lane.b32.xlu0 %v3331, 119
      %v3345 = vpop.permute.xlu0 %3344
      %3346 = vrot.lane.b32.xlu0 %v3335, 119
      %v3347 = vpop.permute.xlu0 %3346
      %3348 = vrot.lane.b32.xlu0 %v3339, 119
      %v3349 = vpop.permute.xlu0 %3348
      %3350 = vrot.lane.b32.xlu0 %v3343, 119
      %v3351 = vpop.permute.xlu0 %3350
      %v3352 = vsel %vm1177, %v3345, %v3347
      %v3353 = vsel %vm1177, %v3347, %v3349
      %v3354 = vsel %vm1177, %v3349, %v3351
      %v3360 = vmul.f32 %v3321, %v3345
      %v3361 = vmul.f32 %v3322, %v3352
      %v3362 = vmul.f32 %v3323, %v3353
      %v3363 = vmul.f32 %v3324, %v3354
      %v3364 = vmul.f32 %v3325, %v3351
      %3370 = vrot.lane.b32.xlu0 %v3360, 9
      %v3371 = vpop.permute.xlu0 %3370
      %3372 = vrot.lane.b32.xlu0 %v3361, 9
      %v3373 = vpop.permute.xlu0 %3372
      %3374 = vrot.lane.b32.xlu0 %v3362, 9
      %v3375 = vpop.permute.xlu0 %3374
      %3376 = vrot.lane.b32.xlu0 %v3363, 9
      %v3377 = vpop.permute.xlu0 %3376
      %3378 = vrot.lane.b32.xlu0 %v3364, 9
      %v3379 = vpop.permute.xlu0 %3378
      %v3380 = vsel %vm1206, %v3371, %v3373
      %v3381 = vsel %vm1206, %v3373, %v3375
      %v3382 = vsel %vm1206, %v3375, %v3377
      %v3383 = vsel %vm1206, %v3377, %v3379
      %3388 = vst [vmem:[#allocation4 + $0x120] sm:$0xff] %v3380
      %3389 = vst [vmem:[#allocation4 + $0x128] sm:$0xff] %v3381
      %3390 = vst [vmem:[#allocation4 + $0x130] sm:$0xff] %v3382
      %3391 = vst [vmem:[#allocation4 + $0x138] sm:$0xff] %v3383
      %v3392 = vld [vmem:[#allocation3] sm:$0xff]
      %v3393 = vld [vmem:[#allocation3 + $0x8] sm:$0xff]
      %v3394 = vld [vmem:[#allocation3 + $0x10] sm:$0xff]
      %v3395 = vld [vmem:[#allocation3 + $0x18] sm:$0xff]
      %v3396 = vld [vmem:[#allocation3 + $0x20] sm:$0xff]
      %v3397 = vld [vmem:[%s1224] ss:$8 sm:$0xf]
      %v3399 = vlaneseq
      %v3400 = vshrl.u32 %v3399, 7
      %v3401 = vsub.s32 0, %v3400
      %v3402 = vrot.slane %v3397, %v3401
      %v3403 = vlaneseq
      %v3404 = vshrl.u32 %v3403, 7
      %v3405 = vsub.s32 1, %v3404
      %v3406 = vrot.slane %v3397, %v3405
      %v3407 = vlaneseq
      %v3408 = vshrl.u32 %v3407, 7
      %v3409 = vsub.s32 2, %v3408
      %v3410 = vrot.slane %v3397, %v3409
      %v3411 = vlaneseq
      %v3412 = vshrl.u32 %v3411, 7
      %v3413 = vsub.s32 3, %v3412
      %v3414 = vrot.slane %v3397, %v3413
      %3415 = vrot.lane.b32.xlu0 %v3402, 120
      %v3416 = vpop.permute.xlu0 %3415
      %3417 = vrot.lane.b32.xlu0 %v3406, 120
      %v3418 = vpop.permute.xlu0 %3417
      %3419 = vrot.lane.b32.xlu0 %v3410, 120
      %v3420 = vpop.permute.xlu0 %3419
      %3421 = vrot.lane.b32.xlu0 %v3414, 120
      %v3422 = vpop.permute.xlu0 %3421
      %v3423 = vsel %vm1251, %v3416, %v3418
      %v3424 = vsel %vm1251, %v3418, %v3420
      %v3425 = vsel %vm1251, %v3420, %v3422
      %v3431 = vmul.f32 %v3392, %v3416
      %v3432 = vmul.f32 %v3393, %v3423
      %v3433 = vmul.f32 %v3394, %v3424
      %v3434 = vmul.f32 %v3395, %v3425
      %v3435 = vmul.f32 %v3396, %v3422
      %3441 = vrot.lane.b32.xlu0 %v3431, 8
      %v3442 = vpop.permute.xlu0 %3441
      %3443 = vrot.lane.b32.xlu0 %v3432, 8
      %v3444 = vpop.permute.xlu0 %3443
      %3445 = vrot.lane.b32.xlu0 %v3433, 8
      %v3446 = vpop.permute.xlu0 %3445
      %3447 = vrot.lane.b32.xlu0 %v3434, 8
      %v3448 = vpop.permute.xlu0 %3447
      %3449 = vrot.lane.b32.xlu0 %v3435, 8
      %v3450 = vpop.permute.xlu0 %3449
      %v3451 = vsel %vm1280, %v3442, %v3444
      %v3452 = vsel %vm1280, %v3444, %v3446
      %v3453 = vsel %vm1280, %v3446, %v3448
      %v3454 = vsel %vm1280, %v3448, %v3450
      %3459 = vst [vmem:[#allocation4 + $0x140] sm:$0xff] %v3451
      %3460 = vst [vmem:[#allocation4 + $0x148] sm:$0xff] %v3452
      %3461 = vst [vmem:[#allocation4 + $0x150] sm:$0xff] %v3453
      %3462 = vst [vmem:[#allocation4 + $0x158] sm:$0xff] %v3454
      %v3463 = vld [vmem:[#allocation3] sm:$0xff]
      %v3464 = vld [vmem:[#allocation3 + $0x8] sm:$0xff]
      %v3465 = vld [vmem:[#allocation3 + $0x10] sm:$0xff]
      %v3466 = vld [vmem:[#allocation3 + $0x18] sm:$0xff]
      %v3467 = vld [vmem:[#allocation3 + $0x20] sm:$0xff]
      %v3468 = vld [vmem:[%s1298] ss:$8 sm:$0xf]
      %v3470 = vlaneseq
      %v3471 = vshrl.u32 %v3470, 7
      %v3472 = vsub.s32 0, %v3471
      %v3473 = vrot.slane %v3468, %v3472
      %v3474 = vlaneseq
      %v3475 = vshrl.u32 %v3474, 7
      %v3476 = vsub.s32 1, %v3475
      %v3477 = vrot.slane %v3468, %v3476
      %v3478 = vlaneseq
      %v3479 = vshrl.u32 %v3478, 7
      %v3480 = vsub.s32 2, %v3479
      %v3481 = vrot.slane %v3468, %v3480
      %v3482 = vlaneseq
      %v3483 = vshrl.u32 %v3482, 7
      %v3484 = vsub.s32 3, %v3483
      %v3485 = vrot.slane %v3468, %v3484
      %3486 = vrot.lane.b32.xlu0 %v3473, 121
      %v3487 = vpop.permute.xlu0 %3486
      %3488 = vrot.lane.b32.xlu0 %v3477, 121
      %v3489 = vpop.permute.xlu0 %3488
      %3490 = vrot.lane.b32.xlu0 %v3481, 121
      %v3491 = vpop.permute.xlu0 %3490
      %3492 = vrot.lane.b32.xlu0 %v3485, 121
      %v3493 = vpop.permute.xlu0 %3492
      %v3494 = vsel %vm1325, %v3487, %v3489
      %v3495 = vsel %vm1325, %v3489, %v3491
      %v3496 = vsel %vm1325, %v3491, %v3493
      %v3502 = vmul.f32 %v3463, %v3487
      %v3503 = vmul.f32 %v3464, %v3494
      %v3504 = vmul.f32 %v3465, %v3495
      %v3505 = vmul.f32 %v3466, %v3496
      %v3506 = vmul.f32 %v3467, %v3493
      %3512 = vrot.lane.b32.xlu0 %v3502, 7
      %v3513 = vpop.permute.xlu0 %3512
      %3514 = vrot.lane.b32.xlu0 %v3503, 7
      %v3515 = vpop.permute.xlu0 %3514
      %3516 = vrot.lane.b32.xlu0 %v3504, 7
      %v3517 = vpop.permute.xlu0 %3516
      %3518 = vrot.lane.b32.xlu0 %v3505, 7
      %v3519 = vpop.permute.xlu0 %3518
      %3520 = vrot.lane.b32.xlu0 %v3506, 7
      %v3521 = vpop.permute.xlu0 %3520
      %v3522 = vsel %vm1354, %v3513, %v3515
      %v3523 = vsel %vm1354, %v3515, %v3517
      %v3524 = vsel %vm1354, %v3517, %v3519
      %v3525 = vsel %vm1354, %v3519, %v3521
      %3530 = vst [vmem:[#allocation4 + $0x160] sm:$0xff] %v3522
      %3531 = vst [vmem:[#allocation4 + $0x168] sm:$0xff] %v3523
      %3532 = vst [vmem:[#allocation4 + $0x170] sm:$0xff] %v3524
      %3533 = vst [vmem:[#allocation4 + $0x178] sm:$0xff] %v3525
      %v3534 = vld [vmem:[#allocation3] sm:$0xff]
      %v3535 = vld [vmem:[#allocation3 + $0x8] sm:$0xff]
      %v3536 = vld [vmem:[#allocation3 + $0x10] sm:$0xff]
      %v3537 = vld [vmem:[#allocation3 + $0x18] sm:$0xff]
      %v3538 = vld [vmem:[#allocation3 + $0x20] sm:$0xff]
      %v3539 = vld [vmem:[%s1372] ss:$8 sm:$0xf]
      %v3541 = vlaneseq
      %v3542 = vshrl.u32 %v3541, 7
      %v3543 = vsub.s32 0, %v3542
      %v3544 = vrot.slane %v3539, %v3543
      %v3545 = vlaneseq
      %v3546 = vshrl.u32 %v3545, 7
      %v3547 = vsub.s32 1, %v3546
      %v3548 = vrot.slane %v3539, %v3547
      %v3549 = vlaneseq
      %v3550 = vshrl.u32 %v3549, 7
      %v3551 = vsub.s32 2, %v3550
      %v3552 = vrot.slane %v3539, %v3551
      %v3553 = vlaneseq
      %v3554 = vshrl.u32 %v3553, 7
      %v3555 = vsub.s32 3, %v3554
      %v3556 = vrot.slane %v3539, %v3555
      %3557 = vrot.lane.b32.xlu0 %v3544, 127
      %v3558 = vpop.permute.xlu0 %3557
      %3559 = vrot.lane.b32.xlu0 %v3548, 127
      %v3560 = vpop.permute.xlu0 %3559
      %3561 = vrot.lane.b32.xlu0 %v3552, 127
      %v3562 = vpop.permute.xlu0 %3561
      %3563 = vrot.lane.b32.xlu0 %v3556, 127
      %v3564 = vpop.permute.xlu0 %3563
      %v3565 = vsel %vm1399, %v3558, %v3560
      %v3566 = vsel %vm1399, %v3560, %v3562
      %v3567 = vsel %vm1399, %v3562, %v3564
      %v3573 = vmul.f32 %v3534, %v3558
      %v3574 = vmul.f32 %v3535, %v3565
      %v3575 = vmul.f32 %v3536, %v3566
      %v3576 = vmul.f32 %v3537, %v3567
      %v3577 = vmul.f32 %v3538, %v3564
      %3583 = vrot.lane.b32.xlu0 %v3573, 1
      %v3584 = vpop.permute.xlu0 %3583
      %3585 = vrot.lane.b32.xlu0 %v3574, 1
      %v3586 = vpop.permute.xlu0 %3585
      %3587 = vrot.lane.b32.xlu0 %v3575, 1
      %v3588 = vpop.permute.xlu0 %3587
      %3589 = vrot.lane.b32.xlu0 %v3576, 1
      %v3590 = vpop.permute.xlu0 %3589
      %3591 = vrot.lane.b32.xlu0 %v3577, 1
      %v3592 = vpop.permute.xlu0 %3591
      %v3593 = vsel %vm1428, %v3584, %v3586
      %v3594 = vsel %vm1428, %v3586, %v3588
      %v3595 = vsel %vm1428, %v3588, %v3590
      %v3596 = vsel %vm1428, %v3590, %v3592
      %3601 = vst [vmem:[#allocation4 + $0x180] sm:$0xff] %v3593
      %3602 = vst [vmem:[#allocation4 + $0x188] sm:$0xff] %v3594
      %3603 = vst [vmem:[#allocation4 + $0x190] sm:$0xff] %v3595
      %3604 = vst [vmem:[#allocation4 + $0x198] sm:$0xff] %v3596
      %v3605 = vld [vmem:[#allocation3 + $0x8] sm:$0xff]
      %v3606 = vld [vmem:[#allocation3 + $0x10] sm:$0xff]
      %v3607 = vld [vmem:[#allocation3 + $0x18] sm:$0xff]
      %v3608 = vld [vmem:[#allocation3 + $0x20] sm:$0xff]
      %v3609 = vld [vmem:[%s1445] ss:$8 sm:$0xf]
      %v3611 = vlaneseq
      %v3612 = vshrl.u32 %v3611, 7
      %v3613 = vsub.s32 0, %v3612
      %v3614 = vrot.slane %v3609, %v3613
      %v3615 = vlaneseq
      %v3616 = vshrl.u32 %v3615, 7
      %v3617 = vsub.s32 1, %v3616
      %v3618 = vrot.slane %v3609, %v3617
      %v3619 = vlaneseq
      %v3620 = vshrl.u32 %v3619, 7
      %v3621 = vsub.s32 2, %v3620
      %v3622 = vrot.slane %v3609, %v3621
      %v3623 = vlaneseq
      %v3624 = vshrl.u32 %v3623, 7
      %v3625 = vsub.s32 3, %v3624
      %v3626 = vrot.slane %v3609, %v3625
      %v3631 = vmul.f32 %v3605, %v3614
      %v3632 = vmul.f32 %v3606, %v3618
      %v3633 = vmul.f32 %v3607, %v3622
      %v3634 = vmul.f32 %v3608, %v3626
      %3635 = vst [vmem:[#allocation4 + $0x1a0] sm:$0xff] %v3631
      %3636 = vst [vmem:[#allocation4 + $0x1a8] sm:$0xff] %v3632
      %3637 = vst [vmem:[#allocation4 + $0x1b0] sm:$0xff] %v3633
      %3638 = vst [vmem:[#allocation4 + $0x1b8] sm:$0xff] %v3634
      %v3639 = vld [vmem:[#allocation3 + $0x8] sm:$0xff]
      %v3640 = vld [vmem:[#allocation3 + $0x10] sm:$0xff]
      %v3641 = vld [vmem:[#allocation3 + $0x18] sm:$0xff]
      %v3642 = vld [vmem:[#allocation3 + $0x20] sm:$0xff]
      %v3643 = vld [vmem:[#allocation3 + $0x28] sm:$0xff]
      %v3644 = vld [vmem:[%s1481] ss:$8 sm:$0xf]
      %v3646 = vlaneseq
      %v3647 = vshrl.u32 %v3646, 7
      %v3648 = vsub.s32 0, %v3647
      %v3649 = vrot.slane %v3644, %v3648
      %v3650 = vlaneseq
      %v3651 = vshrl.u32 %v3650, 7
      %v3652 = vsub.s32 1, %v3651
      %v3653 = vrot.slane %v3644, %v3652
      %v3654 = vlaneseq
      %v3655 = vshrl.u32 %v3654, 7
      %v3656 = vsub.s32 2, %v3655
      %v3657 = vrot.slane %v3644, %v3656
      %v3658 = vlaneseq
      %v3659 = vshrl.u32 %v3658, 7
      %v3660 = vsub.s32 3, %v3659
      %v3661 = vrot.slane %v3644, %v3660
      %3662 = vrot.lane.b32.xlu0 %v3649, 1
      %v3663 = vpop.permute.xlu0 %3662
      %3664 = vrot.lane.b32.xlu0 %v3653, 1
      %v3665 = vpop.permute.xlu0 %3664
      %3666 = vrot.lane.b32.xlu0 %v3657, 1
      %v3667 = vpop.permute.xlu0 %3666
      %3668 = vrot.lane.b32.xlu0 %v3661, 1
      %v3669 = vpop.permute.xlu0 %3668
      %v3670 = vsel %vm1428, %v3663, %v3665
      %v3671 = vsel %vm1428, %v3665, %v3667
      %v3672 = vsel %vm1428, %v3667, %v3669
      %v3678 = vmul.f32 %v3639, %v3663
      %v3679 = vmul.f32 %v3640, %v3670
      %v3680 = vmul.f32 %v3641, %v3671
      %v3681 = vmul.f32 %v3642, %v3672
      %v3682 = vmul.f32 %v3643, %v3669
      %3688 = vrot.lane.b32.xlu0 %v3678, 127
      %v3689 = vpop.permute.xlu0 %3688
      %3690 = vrot.lane.b32.xlu0 %v3679, 127
      %v3691 = vpop.permute.xlu0 %3690
      %3692 = vrot.lane.b32.xlu0 %v3680, 127
      %v3693 = vpop.permute.xlu0 %3692
      %3694 = vrot.lane.b32.xlu0 %v3681, 127
      %v3695 = vpop.permute.xlu0 %3694
      %3696 = vrot.lane.b32.xlu0 %v3682, 127
      %v3697 = vpop.permute.xlu0 %3696
      %v3698 = vsel %vm1399, %v3689, %v3691
      %v3699 = vsel %vm1399, %v3691, %v3693
      %v3700 = vsel %vm1399, %v3693, %v3695
      %v3701 = vsel %vm1399, %v3695, %v3697
      %3706 = vst [vmem:[#allocation4 + $0x1c0] sm:$0xff] %v3698
      %3707 = vst [vmem:[#allocation4 + $0x1c8] sm:$0xff] %v3699
      %3708 = vst [vmem:[#allocation4 + $0x1d0] sm:$0xff] %v3700
      %3709 = vst [vmem:[#allocation4 + $0x1d8] sm:$0xff] %v3701
      %v3710 = vld [vmem:[#allocation3 + $0x8] sm:$0xff]
      %v3711 = vld [vmem:[#allocation3 + $0x10] sm:$0xff]
      %v3712 = vld [vmem:[#allocation3 + $0x18] sm:$0xff]
      %v3713 = vld [vmem:[#allocation3 + $0x20] sm:$0xff]
      %v3714 = vld [vmem:[#allocation3 + $0x28] sm:$0xff]
      %v3715 = vld [vmem:[%s1553] ss:$8 sm:$0xf]
      %v3717 = vlaneseq
      %v3718 = vshrl.u32 %v3717, 7
      %v3719 = vsub.s32 0, %v3718
      %v3720 = vrot.slane %v3715, %v3719
      %v3721 = vlaneseq
      %v3722 = vshrl.u32 %v3721, 7
      %v3723 = vsub.s32 1, %v3722
      %v3724 = vrot.slane %v3715, %v3723
      %v3725 = vlaneseq
      %v3726 = vshrl.u32 %v3725, 7
      %v3727 = vsub.s32 2, %v3726
      %v3728 = vrot.slane %v3715, %v3727
      %v3729 = vlaneseq
      %v3730 = vshrl.u32 %v3729, 7
      %v3731 = vsub.s32 3, %v3730
      %v3732 = vrot.slane %v3715, %v3731
      %3733 = vrot.lane.b32.xlu0 %v3720, 7
      %v3734 = vpop.permute.xlu0 %3733
      %3735 = vrot.lane.b32.xlu0 %v3724, 7
      %v3736 = vpop.permute.xlu0 %3735
      %3737 = vrot.lane.b32.xlu0 %v3728, 7
      %v3738 = vpop.permute.xlu0 %3737
      %3739 = vrot.lane.b32.xlu0 %v3732, 7
      %v3740 = vpop.permute.xlu0 %3739
      %v3741 = vsel %vm1354, %v3734, %v3736
      %v3742 = vsel %vm1354, %v3736, %v3738
      %v3743 = vsel %vm1354, %v3738, %v3740
      %v3749 = vmul.f32 %v3710, %v3734
      %v3750 = vmul.f32 %v3711, %v3741
      %v3751 = vmul.f32 %v3712, %v3742
      %v3752 = vmul.f32 %v3713, %v3743
      %v3753 = vmul.f32 %v3714, %v3740
      %3759 = vrot.lane.b32.xlu0 %v3749, 121
      %v3760 = vpop.permute.xlu0 %3759
      %3761 = vrot.lane.b32.xlu0 %v3750, 121
      %v3762 = vpop.permute.xlu0 %3761
      %3763 = vrot.lane.b32.xlu0 %v3751, 121
      %v3764 = vpop.permute.xlu0 %3763
      %3765 = vrot.lane.b32.xlu0 %v3752, 121
      %v3766 = vpop.permute.xlu0 %3765
      %3767 = vrot.lane.b32.xlu0 %v3753, 121
      %v3768 = vpop.permute.xlu0 %3767
      %v3769 = vsel %vm1325, %v3760, %v3762
      %v3770 = vsel %vm1325, %v3762, %v3764
      %v3771 = vsel %vm1325, %v3764, %v3766
      %v3772 = vsel %vm1325, %v3766, %v3768
      %3777 = vst [vmem:[#allocation4 + $0x1e0] sm:$0xff] %v3769
      %3778 = vst [vmem:[#allocation4 + $0x1e8] sm:$0xff] %v3770
      %3779 = vst [vmem:[#allocation4 + $0x1f0] sm:$0xff] %v3771
      %3780 = vst [vmem:[#allocation4 + $0x1f8] sm:$0xff] %v3772
      %v3781 = vld [vmem:[#allocation3 + $0x8] sm:$0xff]
      %v3782 = vld [vmem:[#allocation3 + $0x10] sm:$0xff]
      %v3783 = vld [vmem:[#allocation3 + $0x18] sm:$0xff]
      %v3784 = vld [vmem:[#allocation3 + $0x20] sm:$0xff]
      %v3785 = vld [vmem:[#allocation3 + $0x28] sm:$0xff]
      %v3786 = vld [vmem:[%s1625] ss:$8 sm:$0xf]
      %v3788 = vlaneseq
      %v3789 = vshrl.u32 %v3788, 7
      %v3790 = vsub.s32 0, %v3789
      %v3791 = vrot.slane %v3786, %v3790
      %v3792 = vlaneseq
      %v3793 = vshrl.u32 %v3792, 7
      %v3794 = vsub.s32 1, %v3793
      %v3795 = vrot.slane %v3786, %v3794
      %v3796 = vlaneseq
      %v3797 = vshrl.u32 %v3796, 7
      %v3798 = vsub.s32 2, %v3797
      %v3799 = vrot.slane %v3786, %v3798
      %v3800 = vlaneseq
      %v3801 = vshrl.u32 %v3800, 7
      %v3802 = vsub.s32 3, %v3801
      %v3803 = vrot.slane %v3786, %v3802
      %3804 = vrot.lane.b32.xlu0 %v3791, 8
      %v3805 = vpop.permute.xlu0 %3804
      %3806 = vrot.lane.b32.xlu0 %v3795, 8
      %v3807 = vpop.permute.xlu0 %3806
      %3808 = vrot.lane.b32.xlu0 %v3799, 8
      %v3809 = vpop.permute.xlu0 %3808
      %3810 = vrot.lane.b32.xlu0 %v3803, 8
      %v3811 = vpop.permute.xlu0 %3810
      %v3812 = vsel %vm1280, %v3805, %v3807
      %v3813 = vsel %vm1280, %v3807, %v3809
      %v3814 = vsel %vm1280, %v3809, %v3811
      %v3820 = vmul.f32 %v3781, %v3805
      %v3821 = vmul.f32 %v3782, %v3812
      %v3822 = vmul.f32 %v3783, %v3813
      %v3823 = vmul.f32 %v3784, %v3814
      %v3824 = vmul.f32 %v3785, %v3811
      %3830 = vrot.lane.b32.xlu0 %v3820, 120
      %v3831 = vpop.permute.xlu0 %3830
      %3832 = vrot.lane.b32.xlu0 %v3821, 120
      %v3833 = vpop.permute.xlu0 %3832
      %3834 = vrot.lane.b32.xlu0 %v3822, 120
      %v3835 = vpop.permute.xlu0 %3834
      %3836 = vrot.lane.b32.xlu0 %v3823, 120
      %v3837 = vpop.permute.xlu0 %3836
      %3838 = vrot.lane.b32.xlu0 %v3824, 120
      %v3839 = vpop.permute.xlu0 %3838
      %v3840 = vsel %vm1251, %v3831, %v3833
      %v3841 = vsel %vm1251, %v3833, %v3835
      %v3842 = vsel %vm1251, %v3835, %v3837
      %v3843 = vsel %vm1251, %v3837, %v3839
      %3848 = vst [vmem:[#allocation4 + $0x200] sm:$0xff] %v3840
      %3849 = vst [vmem:[#allocation4 + $0x208] sm:$0xff] %v3841
      %3850 = vst [vmem:[#allocation4 + $0x210] sm:$0xff] %v3842
      %3851 = vst [vmem:[#allocation4 + $0x218] sm:$0xff] %v3843
      %v3852 = vld [vmem:[#allocation3 + $0x8] sm:$0xff]
      %v3853 = vld [vmem:[#allocation3 + $0x10] sm:$0xff]
      %v3854 = vld [vmem:[#allocation3 + $0x18] sm:$0xff]
      %v3855 = vld [vmem:[#allocation3 + $0x20] sm:$0xff]
      %v3856 = vld [vmem:[#allocation3 + $0x28] sm:$0xff]
      %v3857 = vld [vmem:[%s1697] ss:$8 sm:$0xf]
      %v3859 = vlaneseq
      %v3860 = vshrl.u32 %v3859, 7
      %v3861 = vsub.s32 0, %v3860
      %v3862 = vrot.slane %v3857, %v3861
      %v3863 = vlaneseq
      %v3864 = vshrl.u32 %v3863, 7
      %v3865 = vsub.s32 1, %v3864
      %v3866 = vrot.slane %v3857, %v3865
      %v3867 = vlaneseq
      %v3868 = vshrl.u32 %v3867, 7
      %v3869 = vsub.s32 2, %v3868
      %v3870 = vrot.slane %v3857, %v3869
      %v3871 = vlaneseq
      %v3872 = vshrl.u32 %v3871, 7
      %v3873 = vsub.s32 3, %v3872
      %v3874 = vrot.slane %v3857, %v3873
      %3875 = vrot.lane.b32.xlu0 %v3862, 9
      %v3876 = vpop.permute.xlu0 %3875
      %3877 = vrot.lane.b32.xlu0 %v3866, 9
      %v3878 = vpop.permute.xlu0 %3877
      %3879 = vrot.lane.b32.xlu0 %v3870, 9
      %v3880 = vpop.permute.xlu0 %3879
      %3881 = vrot.lane.b32.xlu0 %v3874, 9
      %v3882 = vpop.permute.xlu0 %3881
      %v3883 = vsel %vm1206, %v3876, %v3878
      %v3884 = vsel %vm1206, %v3878, %v3880
      %v3885 = vsel %vm1206, %v3880, %v3882
      %v3891 = vmul.f32 %v3852, %v3876
      %v3892 = vmul.f32 %v3853, %v3883
      %v3893 = vmul.f32 %v3854, %v3884
      %v3894 = vmul.f32 %v3855, %v3885
      %v3895 = vmul.f32 %v3856, %v3882
      %3901 = vrot.lane.b32.xlu0 %v3891, 119
      %v3902 = vpop.permute.xlu0 %3901
      %3903 = vrot.lane.b32.xlu0 %v3892, 119
      %v3904 = vpop.permute.xlu0 %3903
      %3905 = vrot.lane.b32.xlu0 %v3893, 119
      %v3906 = vpop.permute.xlu0 %3905
      %3907 = vrot.lane.b32.xlu0 %v3894, 119
      %v3908 = vpop.permute.xlu0 %3907
      %3909 = vrot.lane.b32.xlu0 %v3895, 119
      %v3910 = vpop.permute.xlu0 %3909
      %v3911 = vsel %vm1177, %v3902, %v3904
      %v3912 = vsel %vm1177, %v3904, %v3906
      %v3913 = vsel %vm1177, %v3906, %v3908
      %v3914 = vsel %vm1177, %v3908, %v3910
      %3919 = vst [vmem:[#allocation4 + $0x220] sm:$0xff] %v3911
      %3920 = vst [vmem:[#allocation4 + $0x228] sm:$0xff] %v3912
      %3921 = vst [vmem:[#allocation4 + $0x230] sm:$0xff] %v3913
      %3922 = vst [vmem:[#allocation4 + $0x238] sm:$0xff] %v3914
      %v3923 = vld [vmem:[#allocation3 + $0x8] sm:$0xff]
      %v3924 = vld [vmem:[#allocation3 + $0x10] sm:$0xff]
      %v3925 = vld [vmem:[#allocation3 + $0x18] sm:$0xff]
      %v3926 = vld [vmem:[#allocation3 + $0x20] sm:$0xff]
      %v3927 = vld [vmem:[#allocation3 + $0x28] sm:$0xff]
      %v3928 = vld [vmem:[%s1769] ss:$8 sm:$0xf]
      %v3930 = vlaneseq
      %v3931 = vshrl.u32 %v3930, 7
      %v3932 = vsub.s32 0, %v3931
      %v3933 = vrot.slane %v3928, %v3932
      %v3934 = vlaneseq
      %v3935 = vshrl.u32 %v3934, 7
      %v3936 = vsub.s32 1, %v3935
      %v3937 = vrot.slane %v3928, %v3936
      %v3938 = vlaneseq
      %v3939 = vshrl.u32 %v3938, 7
      %v3940 = vsub.s32 2, %v3939
      %v3941 = vrot.slane %v3928, %v3940
      %v3942 = vlaneseq
      %v3943 = vshrl.u32 %v3942, 7
      %v3944 = vsub.s32 3, %v3943
      %v3945 = vrot.slane %v3928, %v3944
      %3946 = vrot.lane.b32.xlu0 %v3933, 55
      %v3947 = vpop.permute.xlu0 %3946
      %3948 = vrot.lane.b32.xlu0 %v3937, 55
      %v3949 = vpop.permute.xlu0 %3948
      %3950 = vrot.lane.b32.xlu0 %v3941, 55
      %v3951 = vpop.permute.xlu0 %3950
      %3952 = vrot.lane.b32.xlu0 %v3945, 55
      %v3953 = vpop.permute.xlu0 %3952
      %v3954 = vsel %vm520, %v3947, %v3949
      %v3955 = vsel %vm520, %v3949, %v3951
      %v3956 = vsel %vm520, %v3951, %v3953
      %v3962 = vmul.f32 %v3923, %v3947
      %v3963 = vmul.f32 %v3924, %v3954
      %v3964 = vmul.f32 %v3925, %v3955
      %v3965 = vmul.f32 %v3926, %v3956
      %v3966 = vmul.f32 %v3927, %v3953
      %3972 = vrot.lane.b32.xlu0 %v3962, 73
      %v3973 = vpop.permute.xlu0 %3972
      %3974 = vrot.lane.b32.xlu0 %v3963, 73
      %v3975 = vpop.permute.xlu0 %3974
      %3976 = vrot.lane.b32.xlu0 %v3964, 73
      %v3977 = vpop.permute.xlu0 %3976
      %3978 = vrot.lane.b32.xlu0 %v3965, 73
      %v3979 = vpop.permute.xlu0 %3978
      %3980 = vrot.lane.b32.xlu0 %v3966, 73
      %v3981 = vpop.permute.xlu0 %3980
      %v3982 = vsel %vm549, %v3973, %v3975
      %v3983 = vsel %vm549, %v3975, %v3977
      %v3984 = vsel %vm549, %v3977, %v3979
      %v3985 = vsel %vm549, %v3979, %v3981
      %3990 = vst [vmem:[#allocation4 + $0x240] sm:$0xff] %v3982
      %3991 = vst [vmem:[#allocation4 + $0x248] sm:$0xff] %v3983
      %3992 = vst [vmem:[#allocation4 + $0x250] sm:$0xff] %v3984
      %3993 = vst [vmem:[#allocation4 + $0x258] sm:$0xff] %v3985
      %v3994 = vld [vmem:[#allocation3 + $0x8] sm:$0xff]
      %v3995 = vld [vmem:[#allocation3 + $0x10] sm:$0xff]
      %v3996 = vld [vmem:[#allocation3 + $0x18] sm:$0xff]
      %v3997 = vld [vmem:[#allocation3 + $0x20] sm:$0xff]
      %v3998 = vld [vmem:[#allocation3 + $0x28] sm:$0xff]
      %v3999 = vld [vmem:[%s1841] ss:$8 sm:$0xf]
      %v4001 = vlaneseq
      %v4002 = vshrl.u32 %v4001, 7
      %v4003 = vsub.s32 0, %v4002
      %v4004 = vrot.slane %v3999, %v4003
      %v4005 = vlaneseq
      %v4006 = vshrl.u32 %v4005, 7
      %v4007 = vsub.s32 1, %v4006
      %v4008 = vrot.slane %v3999, %v4007
      %v4009 = vlaneseq
      %v4010 = vshrl.u32 %v4009, 7
      %v4011 = vsub.s32 2, %v4010
      %v4012 = vrot.slane %v3999, %v4011
      %v4013 = vlaneseq
      %v4014 = vshrl.u32 %v4013, 7
      %v4015 = vsub.s32 3, %v4014
      %v4016 = vrot.slane %v3999, %v4015
      %4017 = vrot.lane.b32.xlu0 %v4004, 56
      %v4018 = vpop.permute.xlu0 %4017
      %4019 = vrot.lane.b32.xlu0 %v4008, 56
      %v4020 = vpop.permute.xlu0 %4019
      %4021 = vrot.lane.b32.xlu0 %v4012, 56
      %v4022 = vpop.permute.xlu0 %4021
      %4023 = vrot.lane.b32.xlu0 %v4016, 56
      %v4024 = vpop.permute.xlu0 %4023
      %v4025 = vsel %vm594, %v4018, %v4020
      %v4026 = vsel %vm594, %v4020, %v4022
      %v4027 = vsel %vm594, %v4022, %v4024
      %v4033 = vmul.f32 %v3994, %v4018
      %v4034 = vmul.f32 %v3995, %v4025
      %v4035 = vmul.f32 %v3996, %v4026
      %v4036 = vmul.f32 %v3997, %v4027
      %v4037 = vmul.f32 %v3998, %v4024
      %4043 = vrot.lane.b32.xlu0 %v4033, 72
      %v4044 = vpop.permute.xlu0 %4043
      %4045 = vrot.lane.b32.xlu0 %v4034, 72
      %v4046 = vpop.permute.xlu0 %4045
      %4047 = vrot.lane.b32.xlu0 %v4035, 72
      %v4048 = vpop.permute.xlu0 %4047
      %4049 = vrot.lane.b32.xlu0 %v4036, 72
      %v4050 = vpop.permute.xlu0 %4049
      %4051 = vrot.lane.b32.xlu0 %v4037, 72
      %v4052 = vpop.permute.xlu0 %4051
      %v4053 = vsel %vm623, %v4044, %v4046
      %v4054 = vsel %vm623, %v4046, %v4048
      %v4055 = vsel %vm623, %v4048, %v4050
      %v4056 = vsel %vm623, %v4050, %v4052
      %4061 = vst [vmem:[#allocation4 + $0x260] sm:$0xff] %v4053
      %4062 = vst [vmem:[#allocation4 + $0x268] sm:$0xff] %v4054
      %4063 = vst [vmem:[#allocation4 + $0x270] sm:$0xff] %v4055
      %4064 = vst [vmem:[#allocation4 + $0x278] sm:$0xff] %v4056
      %v4065 = vld [vmem:[#allocation3 + $0x8] sm:$0xff]
      %v4066 = vld [vmem:[#allocation3 + $0x10] sm:$0xff]
      %v4067 = vld [vmem:[#allocation3 + $0x18] sm:$0xff]
      %v4068 = vld [vmem:[#allocation3 + $0x20] sm:$0xff]
      %v4069 = vld [vmem:[#allocation3 + $0x28] sm:$0xff]
      %v4070 = vld [vmem:[%s1913] ss:$8 sm:$0xf]
      %v4072 = vlaneseq
      %v4073 = vshrl.u32 %v4072, 7
      %v4074 = vsub.s32 0, %v4073
      %v4075 = vrot.slane %v4070, %v4074
      %v4076 = vlaneseq
      %v4077 = vshrl.u32 %v4076, 7
      %v4078 = vsub.s32 1, %v4077
      %v4079 = vrot.slane %v4070, %v4078
      %v4080 = vlaneseq
      %v4081 = vshrl.u32 %v4080, 7
      %v4082 = vsub.s32 2, %v4081
      %v4083 = vrot.slane %v4070, %v4082
      %v4084 = vlaneseq
      %v4085 = vshrl.u32 %v4084, 7
      %v4086 = vsub.s32 3, %v4085
      %v4087 = vrot.slane %v4070, %v4086
      %4088 = vrot.lane.b32.xlu0 %v4075, 57
      %v4089 = vpop.permute.xlu0 %4088
      %4090 = vrot.lane.b32.xlu0 %v4079, 57
      %v4091 = vpop.permute.xlu0 %4090
      %4092 = vrot.lane.b32.xlu0 %v4083, 57
      %v4093 = vpop.permute.xlu0 %4092
      %4094 = vrot.lane.b32.xlu0 %v4087, 57
      %v4095 = vpop.permute.xlu0 %4094
      %v4096 = vsel %vm668, %v4089, %v4091
      %v4097 = vsel %vm668, %v4091, %v4093
      %v4098 = vsel %vm668, %v4093, %v4095
      %v4104 = vmul.f32 %v4065, %v4089
      %v4105 = vmul.f32 %v4066, %v4096
      %v4106 = vmul.f32 %v4067, %v4097
      %v4107 = vmul.f32 %v4068, %v4098
      %v4108 = vmul.f32 %v4069, %v4095
      %4114 = vrot.lane.b32.xlu0 %v4104, 71
      %v4115 = vpop.permute.xlu0 %4114
      %4116 = vrot.lane.b32.xlu0 %v4105, 71
      %v4117 = vpop.permute.xlu0 %4116
      %4118 = vrot.lane.b32.xlu0 %v4106, 71
      %v4119 = vpop.permute.xlu0 %4118
      %4120 = vrot.lane.b32.xlu0 %v4107, 71
      %v4121 = vpop.permute.xlu0 %4120
      %4122 = vrot.lane.b32.xlu0 %v4108, 71
      %v4123 = vpop.permute.xlu0 %4122
      %v4124 = vsel %vm697, %v4115, %v4117
      %v4125 = vsel %vm697, %v4117, %v4119
      %v4126 = vsel %vm697, %v4119, %v4121
      %v4127 = vsel %vm697, %v4121, %v4123
      %4132 = vst [vmem:[#allocation4 + $0x280] sm:$0xff] %v4124
      %4133 = vst [vmem:[#allocation4 + $0x288] sm:$0xff] %v4125
      %4134 = vst [vmem:[#allocation4 + $0x290] sm:$0xff] %v4126
      %4135 = vst [vmem:[#allocation4 + $0x298] sm:$0xff] %v4127
      %v4136 = vld [vmem:[#allocation3 + $0x8] sm:$0xff]
      %v4137 = vld [vmem:[#allocation3 + $0x10] sm:$0xff]
      %v4138 = vld [vmem:[#allocation3 + $0x18] sm:$0xff]
      %v4139 = vld [vmem:[#allocation3 + $0x20] sm:$0xff]
      %v4140 = vld [vmem:[#allocation3 + $0x28] sm:$0xff]
      %v4141 = vld [vmem:[%s1985] ss:$8 sm:$0xf]
      %v4143 = vlaneseq
      %v4144 = vshrl.u32 %v4143, 7
      %v4145 = vsub.s32 0, %v4144
      %v4146 = vrot.slane %v4141, %v4145
      %v4147 = vlaneseq
      %v4148 = vshrl.u32 %v4147, 7
      %v4149 = vsub.s32 1, %v4148
      %v4150 = vrot.slane %v4141, %v4149
      %v4151 = vlaneseq
      %v4152 = vshrl.u32 %v4151, 7
      %v4153 = vsub.s32 2, %v4152
      %v4154 = vrot.slane %v4141, %v4153
      %v4155 = vlaneseq
      %v4156 = vshrl.u32 %v4155, 7
      %v4157 = vsub.s32 3, %v4156
      %v4158 = vrot.slane %v4141, %v4157
      %4159 = vrot.lane.b32.xlu0 %v4146, 63
      %v4160 = vpop.permute.xlu0 %4159
      %4161 = vrot.lane.b32.xlu0 %v4150, 63
      %v4162 = vpop.permute.xlu0 %4161
      %4163 = vrot.lane.b32.xlu0 %v4154, 63
      %v4164 = vpop.permute.xlu0 %4163
      %4165 = vrot.lane.b32.xlu0 %v4158, 63
      %v4166 = vpop.permute.xlu0 %4165
      %v4167 = vsel %vm742, %v4160, %v4162
      %v4168 = vsel %vm742, %v4162, %v4164
      %v4169 = vsel %vm742, %v4164, %v4166
      %v4175 = vmul.f32 %v4136, %v4160
      %v4176 = vmul.f32 %v4137, %v4167
      %v4177 = vmul.f32 %v4138, %v4168
      %v4178 = vmul.f32 %v4139, %v4169
      %v4179 = vmul.f32 %v4140, %v4166
      %4185 = vrot.lane.b32.xlu0 %v4175, 65
      %v4186 = vpop.permute.xlu0 %4185
      %4187 = vrot.lane.b32.xlu0 %v4176, 65
      %v4188 = vpop.permute.xlu0 %4187
      %4189 = vrot.lane.b32.xlu0 %v4177, 65
      %v4190 = vpop.permute.xlu0 %4189
      %4191 = vrot.lane.b32.xlu0 %v4178, 65
      %v4192 = vpop.permute.xlu0 %4191
      %4193 = vrot.lane.b32.xlu0 %v4179, 65
      %v4194 = vpop.permute.xlu0 %4193
      %v4195 = vsel %vm771, %v4186, %v4188
      %v4196 = vsel %vm771, %v4188, %v4190
      %v4197 = vsel %vm771, %v4190, %v4192
      %v4198 = vsel %vm771, %v4192, %v4194
      %4203 = vst [vmem:[#allocation4 + $0x2a0] sm:$0xff] %v4195
      %4204 = vst [vmem:[#allocation4 + $0x2a8] sm:$0xff] %v4196
      %4205 = vst [vmem:[#allocation4 + $0x2b0] sm:$0xff] %v4197
      %4206 = vst [vmem:[#allocation4 + $0x2b8] sm:$0xff] %v4198
      %v4207 = vld [vmem:[#allocation3 + $0x8] sm:$0xff]
      %v4208 = vld [vmem:[#allocation3 + $0x10] sm:$0xff]
      %v4209 = vld [vmem:[#allocation3 + $0x18] sm:$0xff]
      %v4210 = vld [vmem:[#allocation3 + $0x20] sm:$0xff]
      %v4211 = vld [vmem:[#allocation3 + $0x28] sm:$0xff]
      %v4212 = vld [vmem:[%s2057] ss:$8 sm:$0xf]
      %v4214 = vlaneseq
      %v4215 = vshrl.u32 %v4214, 7
      %v4216 = vsub.s32 0, %v4215
      %v4217 = vrot.slane %v4212, %v4216
      %v4218 = vlaneseq
      %v4219 = vshrl.u32 %v4218, 7
      %v4220 = vsub.s32 1, %v4219
      %v4221 = vrot.slane %v4212, %v4220
      %v4222 = vlaneseq
      %v4223 = vshrl.u32 %v4222, 7
      %v4224 = vsub.s32 2, %v4223
      %v4225 = vrot.slane %v4212, %v4224
      %v4226 = vlaneseq
      %v4227 = vshrl.u32 %v4226, 7
      %v4228 = vsub.s32 3, %v4227
      %v4229 = vrot.slane %v4212, %v4228
      %4230 = vrot.lane.b32.xlu0 %v4217, 64
      %v4231 = vpop.permute.xlu0 %4230
      %4232 = vrot.lane.b32.xlu0 %v4221, 64
      %v4233 = vpop.permute.xlu0 %4232
      %4234 = vrot.lane.b32.xlu0 %v4225, 64
      %v4235 = vpop.permute.xlu0 %4234
      %4236 = vrot.lane.b32.xlu0 %v4229, 64
      %v4237 = vpop.permute.xlu0 %4236
      %v4238 = vsel %vm816, %v4231, %v4233
      %v4239 = vsel %vm816, %v4233, %v4235
      %v4240 = vsel %vm816, %v4235, %v4237
      %v4246 = vmul.f32 %v4207, %v4231
      %v4247 = vmul.f32 %v4208, %v4238
      %v4248 = vmul.f32 %v4209, %v4239
      %v4249 = vmul.f32 %v4210, %v4240
      %v4250 = vmul.f32 %v4211, %v4237
      %4256 = vrot.lane.b32.xlu0 %v4246, 64
      %v4257 = vpop.permute.xlu0 %4256
      %4258 = vrot.lane.b32.xlu0 %v4247, 64
      %v4259 = vpop.permute.xlu0 %4258
      %4260 = vrot.lane.b32.xlu0 %v4248, 64
      %v4261 = vpop.permute.xlu0 %4260
      %4262 = vrot.lane.b32.xlu0 %v4249, 64
      %v4263 = vpop.permute.xlu0 %4262
      %4264 = vrot.lane.b32.xlu0 %v4250, 64
      %v4265 = vpop.permute.xlu0 %4264
      %v4266 = vsel %vm816, %v4257, %v4259
      %v4267 = vsel %vm816, %v4259, %v4261
      %v4268 = vsel %vm816, %v4261, %v4263
      %v4269 = vsel %vm816, %v4263, %v4265
      %4274 = vst [vmem:[#allocation4 + $0x2c0] sm:$0xff] %v4266
      %4275 = vst [vmem:[#allocation4 + $0x2c8] sm:$0xff] %v4267
      %4276 = vst [vmem:[#allocation4 + $0x2d0] sm:$0xff] %v4268
      %4277 = vst [vmem:[#allocation4 + $0x2d8] sm:$0xff] %v4269
      %v4278 = vld [vmem:[#allocation3 + $0x8] sm:$0xff]
      %v4279 = vld [vmem:[#allocation3 + $0x10] sm:$0xff]
      %v4280 = vld [vmem:[#allocation3 + $0x18] sm:$0xff]
      %v4281 = vld [vmem:[#allocation3 + $0x20] sm:$0xff]
      %v4282 = vld [vmem:[#allocation3 + $0x28] sm:$0xff]
      %v4283 = vld [vmem:[%s2129] ss:$8 sm:$0xf]
      %v4285 = vlaneseq
      %v4286 = vshrl.u32 %v4285, 7
      %v4287 = vsub.s32 0, %v4286
      %v4288 = vrot.slane %v4283, %v4287
      %v4289 = vlaneseq
      %v4290 = vshrl.u32 %v4289, 7
      %v4291 = vsub.s32 1, %v4290
      %v4292 = vrot.slane %v4283, %v4291
      %v4293 = vlaneseq
      %v4294 = vshrl.u32 %v4293, 7
      %v4295 = vsub.s32 2, %v4294
      %v4296 = vrot.slane %v4283, %v4295
      %v4297 = vlaneseq
      %v4298 = vshrl.u32 %v4297, 7
      %v4299 = vsub.s32 3, %v4298
      %v4300 = vrot.slane %v4283, %v4299
      %4301 = vrot.lane.b32.xlu0 %v4288, 65
      %v4302 = vpop.permute.xlu0 %4301
      %4303 = vrot.lane.b32.xlu0 %v4292, 65
      %v4304 = vpop.permute.xlu0 %4303
      %4305 = vrot.lane.b32.xlu0 %v4296, 65
      %v4306 = vpop.permute.xlu0 %4305
      %4307 = vrot.lane.b32.xlu0 %v4300, 65
      %v4308 = vpop.permute.xlu0 %4307
      %v4309 = vsel %vm771, %v4302, %v4304
      %v4310 = vsel %vm771, %v4304, %v4306
      %v4311 = vsel %vm771, %v4306, %v4308
      %v4317 = vmul.f32 %v4278, %v4302
      %v4318 = vmul.f32 %v4279, %v4309
      %v4319 = vmul.f32 %v4280, %v4310
      %v4320 = vmul.f32 %v4281, %v4311
      %v4321 = vmul.f32 %v4282, %v4308
      %4327 = vrot.lane.b32.xlu0 %v4317, 63
      %v4328 = vpop.permute.xlu0 %4327
      %4329 = vrot.lane.b32.xlu0 %v4318, 63
      %v4330 = vpop.permute.xlu0 %4329
      %4331 = vrot.lane.b32.xlu0 %v4319, 63
      %v4332 = vpop.permute.xlu0 %4331
      %4333 = vrot.lane.b32.xlu0 %v4320, 63
      %v4334 = vpop.permute.xlu0 %4333
      %4335 = vrot.lane.b32.xlu0 %v4321, 63
      %v4336 = vpop.permute.xlu0 %4335
      %v4337 = vsel %vm742, %v4328, %v4330
      %v4338 = vsel %vm742, %v4330, %v4332
      %v4339 = vsel %vm742, %v4332, %v4334
      %v4340 = vsel %vm742, %v4334, %v4336
      %4345 = vst [vmem:[#allocation4 + $0x2e0] sm:$0xff] %v4337
      %4346 = vst [vmem:[#allocation4 + $0x2e8] sm:$0xff] %v4338
      %4347 = vst [vmem:[#allocation4 + $0x2f0] sm:$0xff] %v4339
      %4348 = vst [vmem:[#allocation4 + $0x2f8] sm:$0xff] %v4340
      %v4349 = vld [vmem:[#allocation3 + $0x8] sm:$0xff]
      %v4350 = vld [vmem:[#allocation3 + $0x10] sm:$0xff]
      %v4351 = vld [vmem:[#allocation3 + $0x18] sm:$0xff]
      %v4352 = vld [vmem:[#allocation3 + $0x20] sm:$0xff]
      %v4353 = vld [vmem:[#allocation3 + $0x28] sm:$0xff]
      %v4354 = vld [vmem:[%s2201] ss:$8 sm:$0xf]
      %v4356 = vlaneseq
      %v4357 = vshrl.u32 %v4356, 7
      %v4358 = vsub.s32 0, %v4357
      %v4359 = vrot.slane %v4354, %v4358
      %v4360 = vlaneseq
      %v4361 = vshrl.u32 %v4360, 7
      %v4362 = vsub.s32 1, %v4361
      %v4363 = vrot.slane %v4354, %v4362
      %v4364 = vlaneseq
      %v4365 = vshrl.u32 %v4364, 7
      %v4366 = vsub.s32 2, %v4365
      %v4367 = vrot.slane %v4354, %v4366
      %v4368 = vlaneseq
      %v4369 = vshrl.u32 %v4368, 7
      %v4370 = vsub.s32 3, %v4369
      %v4371 = vrot.slane %v4354, %v4370
      %4372 = vrot.lane.b32.xlu0 %v4359, 71
      %v4373 = vpop.permute.xlu0 %4372
      %4374 = vrot.lane.b32.xlu0 %v4363, 71
      %v4375 = vpop.permute.xlu0 %4374
      %4376 = vrot.lane.b32.xlu0 %v4367, 71
      %v4377 = vpop.permute.xlu0 %4376
      %4378 = vrot.lane.b32.xlu0 %v4371, 71
      %v4379 = vpop.permute.xlu0 %4378
      %v4380 = vsel %vm697, %v4373, %v4375
      %v4381 = vsel %vm697, %v4375, %v4377
      %v4382 = vsel %vm697, %v4377, %v4379
      %v4388 = vmul.f32 %v4349, %v4373
      %v4389 = vmul.f32 %v4350, %v4380
      %v4390 = vmul.f32 %v4351, %v4381
      %v4391 = vmul.f32 %v4352, %v4382
      %v4392 = vmul.f32 %v4353, %v4379
      %4398 = vrot.lane.b32.xlu0 %v4388, 57
      %v4399 = vpop.permute.xlu0 %4398
      %4400 = vrot.lane.b32.xlu0 %v4389, 57
      %v4401 = vpop.permute.xlu0 %4400
      %4402 = vrot.lane.b32.xlu0 %v4390, 57
      %v4403 = vpop.permute.xlu0 %4402
      %4404 = vrot.lane.b32.xlu0 %v4391, 57
      %v4405 = vpop.permute.xlu0 %4404
      %4406 = vrot.lane.b32.xlu0 %v4392, 57
      %v4407 = vpop.permute.xlu0 %4406
      %v4408 = vsel %vm668, %v4399, %v4401
      %v4409 = vsel %vm668, %v4401, %v4403
      %v4410 = vsel %vm668, %v4403, %v4405
      %v4411 = vsel %vm668, %v4405, %v4407
      %4416 = vst [vmem:[#allocation4 + $0x300] sm:$0xff] %v4408
      %4417 = vst [vmem:[#allocation4 + $0x308] sm:$0xff] %v4409
      %4418 = vst [vmem:[#allocation4 + $0x310] sm:$0xff] %v4410
      %4419 = vst [vmem:[#allocation4 + $0x318] sm:$0xff] %v4411
      %v4420 = vld [vmem:[#allocation3 + $0x8] sm:$0xff]
      %v4421 = vld [vmem:[#allocation3 + $0x10] sm:$0xff]
      %v4422 = vld [vmem:[#allocation3 + $0x18] sm:$0xff]
      %v4423 = vld [vmem:[#allocation3 + $0x20] sm:$0xff]
      %v4424 = vld [vmem:[#allocation3 + $0x28] sm:$0xff]
      %v4425 = vld [vmem:[%s2273] ss:$8 sm:$0xf]
      %v4427 = vlaneseq
      %v4428 = vshrl.u32 %v4427, 7
      %v4429 = vsub.s32 0, %v4428
      %v4430 = vrot.slane %v4425, %v4429
      %v4431 = vlaneseq
      %v4432 = vshrl.u32 %v4431, 7
      %v4433 = vsub.s32 1, %v4432
      %v4434 = vrot.slane %v4425, %v4433
      %v4435 = vlaneseq
      %v4436 = vshrl.u32 %v4435, 7
      %v4437 = vsub.s32 2, %v4436
      %v4438 = vrot.slane %v4425, %v4437
      %v4439 = vlaneseq
      %v4440 = vshrl.u32 %v4439, 7
      %v4441 = vsub.s32 3, %v4440
      %v4442 = vrot.slane %v4425, %v4441
      %4443 = vrot.lane.b32.xlu0 %v4430, 72
      %v4444 = vpop.permute.xlu0 %4443
      %4445 = vrot.lane.b32.xlu0 %v4434, 72
      %v4446 = vpop.permute.xlu0 %4445
      %4447 = vrot.lane.b32.xlu0 %v4438, 72
      %v4448 = vpop.permute.xlu0 %4447
      %4449 = vrot.lane.b32.xlu0 %v4442, 72
      %v4450 = vpop.permute.xlu0 %4449
      %v4451 = vsel %vm623, %v4444, %v4446
      %v4452 = vsel %vm623, %v4446, %v4448
      %v4453 = vsel %vm623, %v4448, %v4450
      %v4459 = vmul.f32 %v4420, %v4444
      %v4460 = vmul.f32 %v4421, %v4451
      %v4461 = vmul.f32 %v4422, %v4452
      %v4462 = vmul.f32 %v4423, %v4453
      %v4463 = vmul.f32 %v4424, %v4450
      %4469 = vrot.lane.b32.xlu0 %v4459, 56
      %v4470 = vpop.permute.xlu0 %4469
      %4471 = vrot.lane.b32.xlu0 %v4460, 56
      %v4472 = vpop.permute.xlu0 %4471
      %4473 = vrot.lane.b32.xlu0 %v4461, 56
      %v4474 = vpop.permute.xlu0 %4473
      %4475 = vrot.lane.b32.xlu0 %v4462, 56
      %v4476 = vpop.permute.xlu0 %4475
      %4477 = vrot.lane.b32.xlu0 %v4463, 56
      %v4478 = vpop.permute.xlu0 %4477
      %v4479 = vsel %vm594, %v4470, %v4472
      %v4480 = vsel %vm594, %v4472, %v4474
      %v4481 = vsel %vm594, %v4474, %v4476
      %v4482 = vsel %vm594, %v4476, %v4478
      %4487 = vst [vmem:[#allocation4 + $0x320] sm:$0xff] %v4479
      %4488 = vst [vmem:[#allocation4 + $0x328] sm:$0xff] %v4480
      %4489 = vst [vmem:[#allocation4 + $0x330] sm:$0xff] %v4481
      %4490 = vst [vmem:[#allocation4 + $0x338] sm:$0xff] %v4482
      %v4491 = vld [vmem:[#allocation3 + $0x8] sm:$0xff]
      %v4492 = vld [vmem:[#allocation3 + $0x10] sm:$0xff]
      %v4493 = vld [vmem:[#allocation3 + $0x18] sm:$0xff]
      %v4494 = vld [vmem:[#allocation3 + $0x20] sm:$0xff]
      %v4495 = vld [vmem:[#allocation3 + $0x28] sm:$0xff]
      %v4496 = vld [vmem:[%s2345] ss:$8 sm:$0xf]
      %v4498 = vlaneseq
      %v4499 = vshrl.u32 %v4498, 7
      %v4500 = vsub.s32 0, %v4499
      %v4501 = vrot.slane %v4496, %v4500
      %v4502 = vlaneseq
      %v4503 = vshrl.u32 %v4502, 7
      %v4504 = vsub.s32 1, %v4503
      %v4505 = vrot.slane %v4496, %v4504
      %v4506 = vlaneseq
      %v4507 = vshrl.u32 %v4506, 7
      %v4508 = vsub.s32 2, %v4507
      %v4509 = vrot.slane %v4496, %v4508
      %v4510 = vlaneseq
      %v4511 = vshrl.u32 %v4510, 7
      %v4512 = vsub.s32 3, %v4511
      %v4513 = vrot.slane %v4496, %v4512
      %4514 = vrot.lane.b32.xlu0 %v4501, 73
      %v4515 = vpop.permute.xlu0 %4514
      %4516 = vrot.lane.b32.xlu0 %v4505, 73
      %v4517 = vpop.permute.xlu0 %4516
      %4518 = vrot.lane.b32.xlu0 %v4509, 73
      %v4519 = vpop.permute.xlu0 %4518
      %4520 = vrot.lane.b32.xlu0 %v4513, 73
      %v4521 = vpop.permute.xlu0 %4520
      %v4522 = vsel %vm549, %v4515, %v4517
      %v4523 = vsel %vm549, %v4517, %v4519
      %v4524 = vsel %vm549, %v4519, %v4521
      %v4530 = vmul.f32 %v4491, %v4515
      %v4531 = vmul.f32 %v4492, %v4522
      %v4532 = vmul.f32 %v4493, %v4523
      %v4533 = vmul.f32 %v4494, %v4524
      %v4534 = vmul.f32 %v4495, %v4521
      %4540 = vrot.lane.b32.xlu0 %v4530, 55
      %v4541 = vpop.permute.xlu0 %4540
      %4542 = vrot.lane.b32.xlu0 %v4531, 55
      %v4543 = vpop.permute.xlu0 %4542
      %4544 = vrot.lane.b32.xlu0 %v4532, 55
      %v4545 = vpop.permute.xlu0 %4544
      %4546 = vrot.lane.b32.xlu0 %v4533, 55
      %v4547 = vpop.permute.xlu0 %4546
      %4548 = vrot.lane.b32.xlu0 %v4534, 55
      %v4549 = vpop.permute.xlu0 %4548
      %v4550 = vsel %vm520, %v4541, %v4543
      %v4551 = vsel %vm520, %v4543, %v4545
      %v4552 = vsel %vm520, %v4545, %v4547
      %v4553 = vsel %vm520, %v4547, %v4549
      %4558 = vst [vmem:[#allocation4 + $0x340] sm:$0xff] %v4550
      %4559 = vst [vmem:[#allocation4 + $0x348] sm:$0xff] %v4551
      %4560 = vst [vmem:[#allocation4 + $0x350] sm:$0xff] %v4552
      %4561 = vst [vmem:[#allocation4 + $0x358] sm:$0xff] %v4553
      %v4562 = vld [vmem:[#allocation4] sm:$0xff]
      %v4563 = vld [vmem:[#allocation4 + $0x8] sm:$0xff]
      %v4564 = vld [vmem:[#allocation4 + $0x10] sm:$0xff]
      %v4565 = vld [vmem:[#allocation4 + $0x18] sm:$0xff]
      %v4566 = vld [vmem:[#allocation4 + $0x20] sm:$0xff]
      %v4567 = vld [vmem:[#allocation4 + $0x28] sm:$0xff]
      %v4568 = vld [vmem:[#allocation4 + $0x30] sm:$0xff]
      %v4569 = vld [vmem:[#allocation4 + $0x38] sm:$0xff]
      %v4570 = vld [vmem:[#allocation4 + $0x40] sm:$0xff]
      %v4571 = vld [vmem:[#allocation4 + $0x48] sm:$0xff]
      %v4572 = vld [vmem:[#allocation4 + $0x50] sm:$0xff]
      %v4573 = vld [vmem:[#allocation4 + $0x58] sm:$0xff]
      %v4574 = vld [vmem:[#allocation4 + $0x60] sm:$0xff]
      %v4575 = vld [vmem:[#allocation4 + $0x68] sm:$0xff]
      %v4576 = vld [vmem:[#allocation4 + $0x70] sm:$0xff]
      %v4577 = vld [vmem:[#allocation4 + $0x78] sm:$0xff]
      %v4578 = vld [vmem:[#allocation4 + $0x80] sm:$0xff]
      %v4579 = vld [vmem:[#allocation4 + $0x88] sm:$0xff]
      %v4580 = vld [vmem:[#allocation4 + $0x90] sm:$0xff]
      %v4581 = vld [vmem:[#allocation4 + $0x98] sm:$0xff]
      %v4582 = vld [vmem:[#allocation4 + $0xa0] sm:$0xff]
      %v4583 = vld [vmem:[#allocation4 + $0xa8] sm:$0xff]
      %v4584 = vld [vmem:[#allocation4 + $0xb0] sm:$0xff]
      %v4585 = vld [vmem:[#allocation4 + $0xb8] sm:$0xff]
      %v4586 = vld [vmem:[#allocation4 + $0xc0] sm:$0xff]
      %v4587 = vld [vmem:[#allocation4 + $0xc8] sm:$0xff]
      %v4588 = vld [vmem:[#allocation4 + $0xd0] sm:$0xff]
      %v4589 = vld [vmem:[#allocation4 + $0xd8] sm:$0xff]
      %v4590 = vld [vmem:[#allocation4 + $0xe0] sm:$0xff]
      %v4591 = vld [vmem:[#allocation4 + $0xe8] sm:$0xff]
      %v4592 = vld [vmem:[#allocation4 + $0xf0] sm:$0xff]
      %v4593 = vld [vmem:[#allocation4 + $0xf8] sm:$0xff]
      %v4594 = vld [vmem:[#allocation4 + $0x100] sm:$0xff]
      %v4595 = vld [vmem:[#allocation4 + $0x108] sm:$0xff]
      %v4596 = vld [vmem:[#allocation4 + $0x110] sm:$0xff]
      %v4597 = vld [vmem:[#allocation4 + $0x118] sm:$0xff]
      %v4598 = vld [vmem:[#allocation4 + $0x120] sm:$0xff]
      %v4599 = vld [vmem:[#allocation4 + $0x128] sm:$0xff]
      %v4600 = vld [vmem:[#allocation4 + $0x130] sm:$0xff]
      %v4601 = vld [vmem:[#allocation4 + $0x138] sm:$0xff]
      %v4602 = vld [vmem:[#allocation4 + $0x140] sm:$0xff]
      %v4603 = vld [vmem:[#allocation4 + $0x148] sm:$0xff]
      %v4604 = vld [vmem:[#allocation4 + $0x150] sm:$0xff]
      %v4605 = vld [vmem:[#allocation4 + $0x158] sm:$0xff]
      %v4606 = vld [vmem:[#allocation4 + $0x160] sm:$0xff]
      %v4607 = vld [vmem:[#allocation4 + $0x168] sm:$0xff]
      %v4608 = vld [vmem:[#allocation4 + $0x170] sm:$0xff]
      %v4609 = vld [vmem:[#allocation4 + $0x178] sm:$0xff]
      %v4610 = vld [vmem:[#allocation4 + $0x180] sm:$0xff]
      %v4611 = vld [vmem:[#allocation4 + $0x188] sm:$0xff]
      %v4612 = vld [vmem:[#allocation4 + $0x190] sm:$0xff]
      %v4613 = vld [vmem:[#allocation4 + $0x198] sm:$0xff]
      %v4614 = vld [vmem:[#allocation4 + $0x1a0] sm:$0xff]
      %v4615 = vld [vmem:[#allocation4 + $0x1a8] sm:$0xff]
      %v4616 = vld [vmem:[#allocation4 + $0x1b0] sm:$0xff]
      %v4617 = vld [vmem:[#allocation4 + $0x1b8] sm:$0xff]
      %v4618 = vld [vmem:[#allocation4 + $0x1c0] sm:$0xff]
      %v4619 = vld [vmem:[#allocation4 + $0x1c8] sm:$0xff]
      %v4620 = vld [vmem:[#allocation4 + $0x1d0] sm:$0xff]
      %v4621 = vld [vmem:[#allocation4 + $0x1d8] sm:$0xff]
      %v4622 = vld [vmem:[#allocation4 + $0x1e0] sm:$0xff]
      %v4623 = vld [vmem:[#allocation4 + $0x1e8] sm:$0xff]
      %v4624 = vld [vmem:[#allocation4 + $0x1f0] sm:$0xff]
      %v4625 = vld [vmem:[#allocation4 + $0x1f8] sm:$0xff]
      %v4626 = vld [vmem:[#allocation4 + $0x200] sm:$0xff]
      %v4627 = vld [vmem:[#allocation4 + $0x208] sm:$0xff]
      %v4628 = vld [vmem:[#allocation4 + $0x210] sm:$0xff]
      %v4629 = vld [vmem:[#allocation4 + $0x218] sm:$0xff]
      %v4630 = vld [vmem:[#allocation4 + $0x220] sm:$0xff]
      %v4631 = vld [vmem:[#allocation4 + $0x228] sm:$0xff]
      %v4632 = vld [vmem:[#allocation4 + $0x230] sm:$0xff]
      %v4633 = vld [vmem:[#allocation4 + $0x238] sm:$0xff]
      %v4634 = vld [vmem:[#allocation4 + $0x240] sm:$0xff]
      %v4635 = vld [vmem:[#allocation4 + $0x248] sm:$0xff]
      %v4636 = vld [vmem:[#allocation4 + $0x250] sm:$0xff]
      %v4637 = vld [vmem:[#allocation4 + $0x258] sm:$0xff]
      %v4638 = vld [vmem:[#allocation4 + $0x260] sm:$0xff]
      %v4639 = vld [vmem:[#allocation4 + $0x268] sm:$0xff]
      %v4640 = vld [vmem:[#allocation4 + $0x270] sm:$0xff]
      %v4641 = vld [vmem:[#allocation4 + $0x278] sm:$0xff]
      %v4642 = vld [vmem:[#allocation4 + $0x280] sm:$0xff]
      %v4643 = vld [vmem:[#allocation4 + $0x288] sm:$0xff]
      %v4644 = vld [vmem:[#allocation4 + $0x290] sm:$0xff]
      %v4645 = vld [vmem:[#allocation4 + $0x298] sm:$0xff]
      %v4646 = vld [vmem:[#allocation4 + $0x2a0] sm:$0xff]
      %v4647 = vld [vmem:[#allocation4 + $0x2a8] sm:$0xff]
      %v4648 = vld [vmem:[#allocation4 + $0x2b0] sm:$0xff]
      %v4649 = vld [vmem:[#allocation4 + $0x2b8] sm:$0xff]
      %v4650 = vld [vmem:[#allocation4 + $0x2c0] sm:$0xff]
      %v4651 = vld [vmem:[#allocation4 + $0x2c8] sm:$0xff]
      %v4652 = vld [vmem:[#allocation4 + $0x2d0] sm:$0xff]
      %v4653 = vld [vmem:[#allocation4 + $0x2d8] sm:$0xff]
      %v4654 = vld [vmem:[#allocation4 + $0x2e0] sm:$0xff]
      %v4655 = vld [vmem:[#allocation4 + $0x2e8] sm:$0xff]
      %v4656 = vld [vmem:[#allocation4 + $0x2f0] sm:$0xff]
      %v4657 = vld [vmem:[#allocation4 + $0x2f8] sm:$0xff]
      %v4658 = vld [vmem:[#allocation4 + $0x300] sm:$0xff]
      %v4659 = vld [vmem:[#allocation4 + $0x308] sm:$0xff]
      %v4660 = vld [vmem:[#allocation4 + $0x310] sm:$0xff]
      %v4661 = vld [vmem:[#allocation4 + $0x318] sm:$0xff]
      %v4662 = vld [vmem:[#allocation4 + $0x320] sm:$0xff]
      %v4663 = vld [vmem:[#allocation4 + $0x328] sm:$0xff]
      %v4664 = vld [vmem:[#allocation4 + $0x330] sm:$0xff]
      %v4665 = vld [vmem:[#allocation4 + $0x338] sm:$0xff]
      %v4666 = vld [vmem:[#allocation4 + $0x340] sm:$0xff]
      %v4667 = vld [vmem:[#allocation4 + $0x348] sm:$0xff]
      %v4668 = vld [vmem:[#allocation4 + $0x350] sm:$0xff]
      %v4669 = vld [vmem:[#allocation4 + $0x358] sm:$0xff]
      %4671 = vset.pattern.permute.xlu0 0
      %4672 = vperm.xlu0 %4671, %v2681
      %v4673 = vpop.permute.xlu0 %4672
      %v4676 = vsel %vm2525, %v2680, 0
      %4678 = vmatprep.subr.mxu0 %v4563
      %4679 = vmatpush1.msra.mxu0 %v4562
      %4680 = vmatprep.subr.mxu0 %v4567
      %4681 = vmatpush1.msra.mxu0 %v4566
      %4682 = vmatprep.subr.mxu0 %v4571
      %4683 = vmatpush1.msra.mxu0 %v4570
      %4684 = vmatprep.subr.mxu0 %v4575
      %4685 = vmatpush1.msra.mxu0 %v4574
      %4686 = vmatprep.subr.mxu0 %v4579
      %4687 = vmatpush1.msra.mxu0 %v4578
      %4688 = vmatprep.subr.mxu0 %v4583
      %4689 = vmatpush1.msra.mxu0 %v4582
      %4690 = vmatprep.subr.mxu0 %v4587
      %4691 = vmatpush1.msra.mxu0 %v4586
      %4692 = vmatprep.subr.mxu0 %v4591
      %4693 = vmatpush1.msra.mxu0 %v4590
      %4694 = vmatprep.subr.mxu0 %v4595
      %4695 = vmatpush1.msra.mxu0 %v4594
      %4696 = vmatprep.subr.mxu0 %v4599
      %4697 = vmatpush1.msra.mxu0 %v4598
      %4698 = vmatprep.subr.mxu0 %v4603
      %4699 = vmatpush1.msra.mxu0 %v4602
      %4700 = vmatprep.subr.mxu0 %v4607
      %4701 = vmatpush1.msra.mxu0 %v4606
      %4702 = vmatprep.subr.mxu0 %v4611
      %4703 = vmatpush1.msra.mxu0 %v4610
      %4704 = vmatprep.subr.mxu0 %v4615
      %4705 = vmatpush1.msra.mxu0 %v4614
      %4706 = vmatprep.subr.mxu0 %v4619
      %4707 = vmatpush1.msra.mxu0 %v4618
      %4708 = vmatprep.subr.mxu0 %v4623
      %4709 = vmatpush1.msra.mxu0 %v4622
      %4710 = vmatprep.subr.mxu0 %v4627
      %4711 = vmatpush1.msra.mxu0 %v4626
      %4712 = vmatprep.subr.mxu0 %v4631
      %4713 = vmatpush1.msra.mxu0 %v4630
      %4714 = vmatprep.subr.mxu0 %v4635
      %4715 = vmatpush1.msra.mxu0 %v4634
      %4716 = vmatprep.subr.mxu0 %v4639
      %4717 = vmatpush1.msra.mxu0 %v4638
      %4718 = vmatprep.subr.mxu0 %v4643
      %4719 = vmatpush1.msra.mxu0 %v4642
      %4720 = vmatprep.subr.mxu0 %v4647
      %4721 = vmatpush1.msra.mxu0 %v4646
      %4722 = vmatprep.subr.mxu0 %v4651
      %4723 = vmatpush1.msra.mxu0 %v4650
      %4724 = vmatprep.subr.mxu0 %v4655
      %4725 = vmatpush1.msra.mxu0 %v4654
      %4726 = vmatprep.subr.mxu0 %v4659
      %4727 = vmatpush1.msra.mxu0 %v4658
      %4728 = vmatprep.subr.mxu0 %v4663
      %4729 = vmatpush1.msra.mxu0 %v4662
      %4730 = vmatprep.subr.mxu0 %v4667
      %4731 = vmatpush1.msra.mxu0 %v4666
      %4732 = vmatprep.subr.mxu0 0.0
      %4733 = vmatpush1.msra.mxu0 0.0
      %4734 = vmatprep.subr.mxu0 0.0
      %4735 = vmatpush1.msra.mxu0 0.0
      %4736 = vmatprep.subr.mxu0 0.0
      %4737 = vmatpush1.msra.mxu0 0.0
      %4738 = vmatprep.subr.mxu0 0.0
      %4739 = vmatpush1.msra.mxu0 0.0
      %4740 = vmatprep.subr.mxu0 0.0
      %4741 = vmatpush1.msra.mxu0 0.0
      %4742 = vmatprep.mubr.f32.mxu0 %v4676
      %4743 = vmatmul.mubr.f32.gmra.mrb[0].mxu0 %v2679
      %v4744 = vpop.f32.mrb[0].mxu0
      %v4745 = vadd.f32 %v4673, %v4744
      %v4746 = vpop.f32.mrb[0].mxu0
      %v4747 = vadd.f32 %v4673, %v4746
      %4748 = vdwg.mxu0
      %4749 = vmatprep.subr.mxu0 %v4565
      %4750 = vmatpush1.msra.mxu0 %v4564
      %4751 = vmatprep.subr.mxu0 %v4569
      %4752 = vmatpush1.msra.mxu0 %v4568
      %4753 = vmatprep.subr.mxu0 %v4573
      %4754 = vmatpush1.msra.mxu0 %v4572
      %4755 = vmatprep.subr.mxu0 %v4577
      %4756 = vmatpush1.msra.mxu0 %v4576
      %4757 = vmatprep.subr.mxu0 %v4581
      %4758 = vmatpush1.msra.mxu0 %v4580
      %4759 = vmatprep.subr.mxu0 %v4585
      %4760 = vmatpush1.msra.mxu0 %v4584
      %4761 = vmatprep.subr.mxu0 %v4589
      %4762 = vmatpush1.msra.mxu0 %v4588
      %4763 = vmatprep.subr.mxu0 %v4593
      %4764 = vmatpush1.msra.mxu0 %v4592
      %4765 = vmatprep.subr.mxu0 %v4597
      %4766 = vmatpush1.msra.mxu0 %v4596
      %4767 = vmatprep.subr.mxu0 %v4601
      %4768 = vmatpush1.msra.mxu0 %v4600
      %4769 = vmatprep.subr.mxu0 %v4605
      %4770 = vmatpush1.msra.mxu0 %v4604
      %4771 = vmatprep.subr.mxu0 %v4609
      %4772 = vmatpush1.msra.mxu0 %v4608
      %4773 = vmatprep.subr.mxu0 %v4613
      %4774 = vmatpush1.msra.mxu0 %v4612
      %4775 = vmatprep.subr.mxu0 %v4617
      %4776 = vmatpush1.msra.mxu0 %v4616
      %4777 = vmatprep.subr.mxu0 %v4621
      %4778 = vmatpush1.msra.mxu0 %v4620
      %4779 = vmatprep.subr.mxu0 %v4625
      %4780 = vmatpush1.msra.mxu0 %v4624
      %4781 = vmatprep.subr.mxu0 %v4629
      %4782 = vmatpush1.msra.mxu0 %v4628
      %4783 = vmatprep.subr.mxu0 %v4633
      %4784 = vmatpush1.msra.mxu0 %v4632
      %4785 = vmatprep.subr.mxu0 %v4637
      %4786 = vmatpush1.msra.mxu0 %v4636
      %4787 = vmatprep.subr.mxu0 %v4641
      %4788 = vmatpush1.msra.mxu0 %v4640
      %4789 = vmatprep.subr.mxu0 %v4645
      %4790 = vmatpush1.msra.mxu0 %v4644
      %4791 = vmatprep.subr.mxu0 %v4649
      %4792 = vmatpush1.msra.mxu0 %v4648
      %4793 = vmatprep.subr.mxu0 %v4653
      %4794 = vmatpush1.msra.mxu0 %v4652
      %4795 = vmatprep.subr.mxu0 %v4657
      %4796 = vmatpush1.msra.mxu0 %v4656
      %4797 = vmatprep.subr.mxu0 %v4661
      %4798 = vmatpush1.msra.mxu0 %v4660
      %4799 = vmatprep.subr.mxu0 %v4665
      %4800 = vmatpush1.msra.mxu0 %v4664
      %4801 = vmatprep.subr.mxu0 %v4669
      %4802 = vmatpush1.msra.mxu0 %v4668
      %4803 = vmatprep.subr.mxu0 0.0
      %4804 = vmatpush1.msra.mxu0 0.0
      %4805 = vmatprep.subr.mxu0 0.0
      %4806 = vmatpush1.msra.mxu0 0.0
      %4807 = vmatprep.subr.mxu0 0.0
      %4808 = vmatpush1.msra.mxu0 0.0
      %4809 = vmatprep.subr.mxu0 0.0
      %4810 = vmatpush1.msra.mxu0 0.0
      %4811 = vmatprep.subr.mxu0 0.0
      %4812 = vmatpush1.msra.mxu0 0.0
      %4813 = vmatprep.mubr.f32.mxu0 %v4676
      %4814 = vmatmul.mubr.f32.gmra.mrb[0].mxu0 %v2679
      %v4815 = vpop.f32.mrb[0].mxu0
      %v4816 = vadd.f32 %v4673, %v4815
      %v4817 = vpop.f32.mrb[0].mxu0
      %v4818 = vadd.f32 %v4673, %v4817
      %4819 = vdwg.mxu0
      %v4820 = vmax.f32 %v4745, 0.0
      %v4821 = vmax.f32 %v4747, 0.0
      %v4822 = vmax.f32 %v4816, 0.0
      %v4823 = vmax.f32 %v4818, 0.0
      %4824 = vst [vmem:[%s305] sm:$0xff] %v4820
      %4825 = vst [vmem:[%s305 + $0x8] sm:$0xff] %v4821
      %4826 = vst [vmem:[%s305 + $0x10] sm:$0xff] %v4822
      %4827 = vst [vmem:[%s305 + $0x18] sm:$0xff] %v4823
      %p4828 = scmp.lt.s32.totalorder %s19, 1
      %s4829 = scalar_select %p4828, %s19, 1
      %s4830 = smul.addr %s4829, 4
      %s4831 = smul.addr %s4830, 8
      %s4832 = scalar_lea.vmem %s8, %s4831
      // Predicated region
      $region53: #{reduction3d_forward.1} parent=51 // pred_check
        %p4833 = pneg %p210
      $region54: #{reduction3d_forward.1} parent=51 // pred_check_branch
        %4835 = sbr.rel (%p4833) target = $region56
      $region55: #{reduction3d_forward.1} parent=51 // pred_region
        _
      $region56: #{reduction3d_forward.1} parent=51 // pred_fallthru
        _
    $region52: #{reduction3d_forward.1} parent=5 // pred_fallthru
      _
    %p4836 = scmp.le.s32.totalorder 2, %s14
    // Predicated region
    $region57: #{reduction3d_forward.1} parent=5 // pred_check
      %p4837 = pneg %p4836
    $region58: #{reduction3d_forward.1} parent=5 // pred_check_branch
      %4839 = sbr.rel (%p4837) target = $region60
    $region59: #{reduction3d_forward.1} parent=5 // pred_region
      %s4840 = ssub.s32 %s14, 2
      // Predicated region
      $region61: #{reduction3d_forward.1} parent=59 // pred_check
        %p4841 = pneg %p216
      $region62: #{reduction3d_forward.1} parent=59 // pred_check_branch
        %4843 = sbr.rel (%p4841) target = $region64
      $region63: #{reduction3d_forward.1} parent=59 // pred_region
        %p4844 = scmp.lt.s32.totalorder %s20, 1
        %s4845 = scalar_select %p4844, %s20, 1
        %s4846 = smul.addr %s4845, 4
        %s4847 = smul.addr %s4846, 8
        %s4848 = scalar_lea.vmem %s8, %s4847
      $region64: #{reduction3d_forward.1} parent=59 // pred_fallthru
        _
    $region60: #{reduction3d_forward.1} parent=5 // pred_fallthru
      _
  $region6: #{reduction3d_forward.1} parent=0 // loop_footer
    %s18 = sadd.s32 1, %s14
  $region7: #{reduction3d_forward.1} parent=0 // loop_footer_branch
    %13 = sbr.rel target = $region3
  $region8: #{reduction3d_forward.1} parent=0 // loop_exit
    _

</llo_original>
